<compile_context>
chip_gen: v6e
topology: v6e:2x2x1
jax: 0.10.0
libtpu: 0.0.40
codegen_flags: <defaults>
</compile_context>

<pallas_src>
import math

import jax
import jax.numpy as jnp
from jax.experimental import pallas as pl
from jax.experimental.pallas import tpu as pltpu

NEG_SLOPE = 0.01                 # nn.LeakyReLU default negative_slope


def _vmem_capacity_bytes():
    try:
        return int(pltpu.get_tpu_info().vmem_capacity_bytes)
    except Exception:
        return 64 * 1024 * 1024   # conservative (v7x) fallback


_VMEM_CAP = _vmem_capacity_bytes()
# <= ~44 MiB on v7x (64 MiB physical); ~85 MiB on v5e/v6e (128 MiB physical).
VMEM_LIMIT = min(int(_VMEM_CAP * 2 // 3), 96 * 1024 * 1024)
# Bigger row tiles on 128 MiB parts (measured mem-bound efficiency 63% -> 85%).
ROW_TILE = 512 if _VMEM_CAP >= 100 * 1024 * 1024 else 256


def _row_tile(n):
    # Full array if small (always legal), otherwise a ROW_TILE-row tile (mult. of 8).
    return n if n <= ROW_TILE else ROW_TILE


def _full_spec(arr):
    # Whole-array block, constant index_map, single-buffered: fetched once and
    # kept resident across the grid (no pointless double-buffering of weights).
    return pl.BlockSpec(arr.shape, lambda *_: (0,) * arr.ndim,
                        pipeline_mode=pl.Buffered(1))


def _pick_unroll(T):
    for u in (8, 4, 2, 1):
        if T % u == 0:
            return u
    return 1


# --------------------------------------------------------------------------
# Kernel A: linear_in MLP fused with the layer-1 LSTM input projection
# (both directions).  x:[tm,D] -> gates_fwd:[tm,4Hh], gates_bwd:[tm,4Hh]
# --------------------------------------------------------------------------
def mlp_gates_kernel(x_ref, w1_ref, b1_ref, w2_ref, b2_ref, wg_ref, bg_ref,
                     gf_ref, gb_ref):
    h = jnp.dot(x_ref[...].astype(jnp.bfloat16), w1_ref[...],
                preferred_element_type=jnp.float32) + b1_ref[...]
    h = jnp.where(h > 0, h, NEG_SLOPE * h)
    # TODO(synk): Dropout(0.2) layers are identity here (eval-mode semantics).
    h = jnp.dot(h.astype(jnp.bfloat16), w2_ref[...],
                preferred_element_type=jnp.float32) + b2_ref[...]
    h = jnp.where(h > 0, h, NEG_SLOPE * h)
    # Fused layer-1 LSTM input projection, both directions, biases folded in.
    g = jnp.dot(h.astype(jnp.bfloat16), wg_ref[...],
                preferred_element_type=jnp.float32) + bg_ref[...]
    gdim = gf_ref.shape[-1]
    gf_ref[...] = g[:, :gdim]
    gb_ref[...] = g[:, gdim:]


def mlp_gates(x2d, w1, b1, w2, b2, wg, bg):
    n, d = x2d.shape
    gdim = wg.shape[1] // 2
    tm = _row_tile(n)
    return pl.pallas_call(
        mlp_gates_kernel,
        out_shape=(jax.ShapeDtypeStruct((n, gdim), jnp.float32),
                   jax.ShapeDtypeStruct((n, gdim), jnp.float32)),
        grid_spec=pltpu.PrefetchScalarGridSpec(
            num_scalar_prefetch=0,
            grid=(pl.cdiv(n, tm),),
            in_specs=[
                pl.BlockSpec((tm, d), lambda i: (i, 0)),
                _full_spec(w1), _full_spec(b1), _full_spec(w2), _full_spec(b2),
                _full_spec(wg), _full_spec(bg),
            ],
            out_specs=(pl.BlockSpec((tm, gdim), lambda i: (i, 0)),
                       pl.BlockSpec((tm, gdim), lambda i: (i, 0))),
        ),
        compiler_params=pltpu.CompilerParams(
            dimension_semantics=("parallel",),
            vmem_limit_bytes=VMEM_LIMIT),
    )(x2d, w1, b1, w2, b2, wg, bg)


# --------------------------------------------------------------------------
# Kernel B: dual projection  out = a @ Wa + b @ Wb + bias, split into two
# outputs.  Used for (layer-2 LSTM input gates) and for (fused keys||values).
# Taking fwd/bwd halves as two inputs avoids materializing any concat.
# --------------------------------------------------------------------------
def dual_proj_kernel(a_ref, b_ref, wa_ref, wb_ref, bias_ref, o1_ref, o2_ref):
    acc = (jnp.dot(a_ref[...].astype(jnp.bfloat16), wa_ref[...],
                   preferred_element_type=jnp.float32)
           + jnp.dot(b_ref[...].astype(jnp.bfloat16), wb_ref[...],
                     preferred_element_type=jnp.float32)
           + bias_ref[...])
    n1 = o1_ref.shape[-1]
    o1_ref[...] = acc[:, :n1]
    o2_ref[...] = acc[:, n1:]


def dual_proj(a2d, b2d, wa, wb, bias, n_out1, n_out2):
    n, da = a2d.shape
    db = b2d.shape[1]
    tm = _row_tile(n)
    return pl.pallas_call(
        dual_proj_kernel,
        out_shape=(jax.ShapeDtypeStruct((n, n_out1), jnp.float32),
                   jax.ShapeDtypeStruct((n, n_out2), jnp.float32)),
        grid_spec=pltpu.PrefetchScalarGridSpec(
            num_scalar_prefetch=0,
            grid=(pl.cdiv(n, tm),),
            in_specs=[
                pl.BlockSpec((tm, da), lambda i: (i, 0)),
                pl.BlockSpec((tm, db), lambda i: (i, 0)),
                _full_spec(wa), _full_spec(wb), _full_spec(bias),
            ],
            out_specs=(pl.BlockSpec((tm, n_out1), lambda i: (i, 0)),
                       pl.BlockSpec((tm, n_out2), lambda i: (i, 0))),
        ),
        compiler_params=pltpu.CompilerParams(
            dimension_semantics=("parallel",),
            vmem_limit_bytes=VMEM_LIMIT),
    )(a2d, b2d, wa, wb, bias)


# --------------------------------------------------------------------------
# Kernel C: bidirectional LSTM recurrence for one layer, U timesteps per grid
# step.  Inputs are precomputed gate activations gx = x @ W_ih + b (per
# direction), time-major [T, B, 4Hh].  Grid steps over ceil(T/U) blocks
# ("arbitrary"); h/c carried in f32 VMEM scratch; inner fori_loop(unroll=True)
# walks the U steps (reverse in-block order for the backward direction, whose
# blocks are streamed with a reversed index_map -- no jnp.flip, no extra HBM
# passes).  Gate order: i, f, g, o (PyTorch).  Outputs stored bf16.
# NOTE: at production sizes Hh is a multiple of 128 so gate slices are
# lane-aligned; the toy Hh=32 only costs an in-register relayout.
# --------------------------------------------------------------------------
def bilstm_kernel(gf_ref, gb_ref, whhf_ref, whhb_ref, yf_ref, yb_ref,
                  hf, cf, hb, cb):
    j = pl.program_id(0)

    @pl.when(j == 0)
    def _():
        hf[...] = jnp.zeros_like(hf)
        cf[...] = jnp.zeros_like(cf)
        hb[...] = jnp.zeros_like(hb)
        cb[...] = jnp.zeros_like(cb)

    Hh = whhf_ref.shape[0]
    U = gf_ref.shape[0]

    def cell(gx, h_ref, c_ref, whh_ref):
        # TODO(synk): if bundle shows MXU-push-bound at small B, pin W_hh via
        # pltpu.matmul_push_rhs/matmul_acc_lhs across the unrolled steps.
        gates = gx + jnp.dot(h_ref[...].astype(jnp.bfloat16), whh_ref[...],
                             preferred_element_type=jnp.float32)
        i = jax.nn.sigmoid(gates[:, 0 * Hh:1 * Hh])
        f = jax.nn.sigmoid(gates[:, 1 * Hh:2 * Hh])
        g = jnp.tanh(gates[:, 2 * Hh:3 * Hh])
        o = jax.nn.sigmoid(gates[:, 3 * Hh:4 * Hh])
        c_new = f * c_ref[...] + i * g
        h_new = o * jnp.tanh(c_new)
        h_ref[...] = h_new
        c_ref[...] = c_new
        return h_new

    def step(u, carry):
        # forward direction: in-block time u (global time j*U + u)
        hf_new = cell(gf_ref[u], hf, cf, whhf_ref)
        yf_ref[u] = hf_new.astype(yf_ref.dtype)
        # backward direction: in-block time U-1-u of the reversed block stream
        ub = U - 1 - u
        hb_new = cell(gb_ref[ub], hb, cb, whhb_ref)
        yb_ref[ub] = hb_new.astype(yb_ref.dtype)
        return carry

    jax.lax.fori_loop(0, U, step, 0, unroll=True)


def bilstm_layer(gf, gb, whhf, whhb):
    """gf/gb: [T, B, 4Hh] precomputed gates -> (y_fwd, y_bwd): each [T, B, Hh] bf16."""
    T, B, G = gf.shape
    Hh = whhf.shape[0]
    U = _pick_unroll(T)
    nblk = T // U
    return pl.pallas_call(
        bilstm_kernel,
        out_shape=(jax.ShapeDtypeStruct((T, B, Hh), jnp.bfloat16),
                   jax.ShapeDtypeStruct((T, B, Hh), jnp.bfloat16)),
        grid_spec=pltpu.PrefetchScalarGridSpec(
            num_scalar_prefetch=0,
            grid=(nblk,),
            in_specs=[
                pl.BlockSpec((U, B, G), lambda j: (j, 0, 0)),
                pl.BlockSpec((U, B, G), lambda j: (nblk - 1 - j, 0, 0)),
                _full_spec(whhf), _full_spec(whhb),
            ],
            out_specs=(pl.BlockSpec((U, B, Hh), lambda j: (j, 0, 0)),
                       pl.BlockSpec((U, B, Hh), lambda j: (nblk - 1 - j, 0, 0))),
            scratch_shapes=[pltpu.VMEM((B, Hh), jnp.float32)] * 4,
        ),
        compiler_params=pltpu.CompilerParams(
            dimension_semantics=("arbitrary",),
            vmem_limit_bytes=VMEM_LIMIT),
    )(gf, gb, whhf, whhb)


# --------------------------------------------------------------------------
# Parameter construction (deterministic, PyTorch-like uniform ranges).
# Weights are stored [in, out] (PyTorch W.T), matmul weights cast to bf16
# (f32 accumulation on the MXU), biases kept f32.  LSTM biases are the
# b_ih + b_hh fold; input-projection weights for fwd/bwd are pre-concatenated
# column-wise, and layer-2 / KV weights are pre-split row-wise so the kernels
# can consume fwd/bwd halves without a concat.
# --------------------------------------------------------------------------
def init_encoder_params(key, input_dim, encoder_hidden_dim, key_value_size):
    H = encoder_hidden_dim
    Hh = 2 * H                        # LSTM hidden size per direction
    keys = iter(jax.random.split(key, 24))

    def u(shape, scale):
        return jax.random.uniform(next(keys), shape, jnp.float32, -scale, scale)

    p = {}
    # linear_in
    s1 = 1.0 / math.sqrt(input_dim)
    p["w1"] = u((input_dim, H // 2), s1).astype(jnp.bfloat16)
    p["b1"] = u((1, H // 2), s1)
    s2 = 1.0 / math.sqrt(H // 2)
    p["w2"] = u((H // 2, H), s2).astype(jnp.bfloat16)
    p["b2"] = u((1, H), s2)

    s_l = 1.0 / math.sqrt(Hh)
    # ---- LSTM layer 1 (input H) ----
    wih1f = u((H, 4 * Hh), s_l)
    wih1b = u((H, 4 * Hh), s_l)
    b1f = u((1, 4 * Hh), s_l)         # b_ih + b_hh folded
    b1b = u((1, 4 * Hh), s_l)
    p["wg1"] = jnp.concatenate([wih1f, wih1b], axis=1).astype(jnp.bfloat16)   # [H, 8Hh]
    p["bg1"] = jnp.concatenate([b1f, b1b], axis=1)                            # [1, 8Hh]
    p["whh1f"] = u((Hh, 4 * Hh), s_l).astype(jnp.bfloat16)
    p["whh1b"] = u((Hh, 4 * Hh), s_l).astype(jnp.bfloat16)

    # ---- LSTM layer 2 (input 2*Hh = [fwd1 || bwd1]) ----
    wih2f = u((2 * Hh, 4 * Hh), s_l)
    wih2b = u((2 * Hh, 4 * Hh), s_l)
    b2f = u((1, 4 * Hh), s_l)
    b2b = u((1, 4 * Hh), s_l)
    p["wg2_top"] = jnp.concatenate([wih2f[:Hh], wih2b[:Hh]], axis=1).astype(jnp.bfloat16)
    p["wg2_bot"] = jnp.concatenate([wih2f[Hh:], wih2b[Hh:]], axis=1).astype(jnp.bfloat16)
    p["bg2"] = jnp.concatenate([b2f, b2b], axis=1)
    p["whh2f"] = u((Hh, 4 * Hh), s_l).astype(jnp.bfloat16)
    p["whh2b"] = u((Hh, 4 * Hh), s_l).astype(jnp.bfloat16)

    # ---- key / value heads (input 2*Hh = [fwd2 || bwd2]), fused wk||wv ----
    s_kv = 1.0 / math.sqrt(2 * Hh)
    wk = u((2 * Hh, key_value_size), s_kv)
    bk = u((1, key_value_size), s_kv)
    wv = u((2 * Hh, key_value_size), s_kv)
    bv = u((1, key_value_size), s_kv)
    p["wkv_top"] = jnp.concatenate([wk[:Hh], wv[:Hh]], axis=1).astype(jnp.bfloat16)
    p["wkv_bot"] = jnp.concatenate([wk[Hh:], wv[Hh:]], axis=1).astype(jnp.bfloat16)
    p["bkv"] = jnp.concatenate([bk, bv], axis=1)
    return p


# --------------------------------------------------------------------------
# Encoder forward
# --------------------------------------------------------------------------
def encoder_forward(x, params):
    """x: [B, T, input_dim] float32 -> (keys, value): each [B, T, key_value_size]."""
    B, T, D = x.shape
    Hh = params["whh1f"].shape[0]
    G = 4 * Hh
    kvs = params["bkv"].shape[1] // 2

    # Single time-major flatten of the (smallest) input tensor; all later
    # reshapes between [T*B, .] and [T, B, .] are free (row-major bitcasts).
    x_tm = x.transpose(1, 0, 2).reshape(T * B, D)

    # linear_in MLP fused with layer-1 LSTM input projections (both directions).
    gf1, gb1 = mlp_gates(x_tm, params["w1"], params["b1"], params["w2"], params["b2"],
                         params["wg1"], params["bg1"])

    # layer-1 bidirectional recurrence (U timesteps per grid step).
    yf1, yb1 = bilstm_layer(gf1.reshape(T, B, G), gb1.reshape(T, B, G),
                            params["whh1f"], params["whh1b"])

    # layer-2 input projections (both directions) from split fwd/bwd halves.
    gf2, gb2 = dual_proj(yf1.reshape(T * B, Hh), yb1.reshape(T * B, Hh),
                         params["wg2_top"], params["wg2_bot"], params["bg2"], G, G)

    # layer-2 bidirectional recurrence.
    yf2, yb2 = bilstm_layer(gf2.reshape(T, B, G), gb2.reshape(T, B, G),
                            params["whh2f"], params["whh2b"])

    # fused key/value heads (one matmul over wk||wv), split into two outputs.
    k2d, v2d = dual_proj(yf2.reshape(T * B, Hh), yb2.reshape(T * B, Hh),
                         params["wkv_top"], params["wkv_bot"], params["bkv"], kvs, kvs)

    keys = k2d.reshape(T, B, kvs).transpose(1, 0, 2)
    value = v2d.reshape(T, B, kvs).transpose(1, 0, 2)
    return keys, value


if __name__ == "__main__":
    # Small shapes consistent with the module.
    B, T = 2, 8
    input_dim = 16
    encoder_hidden_dim = 16
    key_value_size = 32

    root = jax.random.PRNGKey(0)
    kx, kp = jax.random.split(root)
    x = jax.random.normal(kx, (B, T, input_dim), jnp.float32)
    params = init_encoder_params(kp, input_dim, encoder_hidden_dim, key_value_size)

    fwd = jax.jit(encoder_forward)
    keys, value = fwd(x, params)
    keys = jax.block_until_ready(keys)
    value = jax.block_until_ready(value)

    assert keys.shape == (B, T, key_value_size)
    assert value.shape == (B, T, key_value_size)
    assert keys.dtype == jnp.float32 and value.dtype == jnp.float32
    print("KERNEL_OK")
</pallas_src>

<mosaic_0001>
module attributes {stable_mosaic.version = 11 : i64} {
  func.func @mlp_gates_kernel(%arg0: i32, %arg1: memref<16x16xf32, #tpu.memory_space<vmem>>, %arg2: memref<16x8xbf16, #tpu.memory_space<vmem>>, %arg3: memref<1x8xf32, #tpu.memory_space<vmem>>, %arg4: memref<8x16xbf16, #tpu.memory_space<vmem>>, %arg5: memref<1x16xf32, #tpu.memory_space<vmem>>, %arg6: memref<16x256xbf16, #tpu.memory_space<vmem>>, %arg7: memref<1x256xf32, #tpu.memory_space<vmem>>, %arg8: memref<16x128xf32, #tpu.memory_space<vmem>>, %arg9: memref<16x128xf32, #tpu.memory_space<vmem>>) attributes {dimension_semantics = [#tpu.dimension_semantics<parallel>], iteration_bounds = array<i64: 1>, scalar_prefetch = 0 : i64, scratch_operands = 0 : i64, tpu.core_type = #tpu.core_type<tc>, window_params = [{transform_indices = @transform_0, window_bounds = array<i64: 16, 16>}, {pipeline_mode = #tpu.pipeline_mode<synchronous>, transform_indices = @transform_1, window_bounds = array<i64: 16, 8>}, {pipeline_mode = #tpu.pipeline_mode<synchronous>, transform_indices = @transform_2, window_bounds = array<i64: 1, 8>}, {pipeline_mode = #tpu.pipeline_mode<synchronous>, transform_indices = @transform_3, window_bounds = array<i64: 8, 16>}, {pipeline_mode = #tpu.pipeline_mode<synchronous>, transform_indices = @transform_4, window_bounds = array<i64: 1, 16>}, {pipeline_mode = #tpu.pipeline_mode<synchronous>, transform_indices = @transform_5, window_bounds = array<i64: 16, 256>}, {pipeline_mode = #tpu.pipeline_mode<synchronous>, transform_indices = @transform_6, window_bounds = array<i64: 1, 256>}, {transform_indices = @transform_7, window_bounds = array<i64: 16, 128>}, {transform_indices = @transform_8, window_bounds = array<i64: 16, 128>}]} {
    %c0 = arith.constant 0 : index
    %c0_0 = arith.constant 0 : index
    %0 = vector.load %arg1[%c0, %c0_0] : memref<16x16xf32, #tpu.memory_space<vmem>>, vector<16x16xf32>
    %1 = arith.truncf %0 : vector<16x16xf32> to vector<16x16xbf16>
    %c0_1 = arith.constant 0 : index
    %c0_2 = arith.constant 0 : index
    %2 = vector.load %arg2[%c0_1, %c0_2] : memref<16x8xbf16, #tpu.memory_space<vmem>>, vector<16x8xbf16>
    %cst = arith.constant dense<0.000000e+00> : vector<16x8xf32>
    %3 = tpu.matmul %1, %2, %cst {dimension_numbers = #tpu.dot_dimension_numbers<[1], [0], [0], [1], [0, 0, 1, 1], [], []>} : vector<16x16xbf16>, vector<16x8xbf16>, vector<16x8xf32> -> vector<16x8xf32>
    %c0_3 = arith.constant 0 : index
    %c0_4 = arith.constant 0 : index
    %4 = vector.load %arg3[%c0_3, %c0_4] : memref<1x8xf32, #tpu.memory_space<vmem>>, vector<1x8xf32>
    %5 = vector.broadcast %4 : vector<1x8xf32> to vector<16x8xf32>
    %6 = arith.addf %3, %5 : vector<16x8xf32>
    %cst_5 = arith.constant 0.000000e+00 : f32
    %7 = vector.broadcast %cst_5 : f32 to vector<16x8xf32>
    %8 = arith.cmpf ogt, %6, %7 : vector<16x8xf32>
    %cst_6 = arith.constant 0.00999999977 : f32
    %9 = vector.broadcast %cst_6 : f32 to vector<16x8xf32>
    %10 = arith.mulf %9, %6 : vector<16x8xf32>
    %11 = arith.select %8, %6, %10 : vector<16x8xi1>, vector<16x8xf32>
    %12 = arith.truncf %11 : vector<16x8xf32> to vector<16x8xbf16>
    %c0_7 = arith.constant 0 : index
    %c0_8 = arith.constant 0 : index
    %13 = vector.load %arg4[%c0_7, %c0_8] : memref<8x16xbf16, #tpu.memory_space<vmem>>, vector<8x16xbf16>
    %cst_9 = arith.constant dense<0.000000e+00> : vector<16x16xf32>
    %14 = tpu.matmul %12, %13, %cst_9 {dimension_numbers = #tpu.dot_dimension_numbers<[1], [0], [0], [1], [0, 0, 1, 1], [], []>} : vector<16x8xbf16>, vector<8x16xbf16>, vector<16x16xf32> -> vector<16x16xf32>
    %c0_10 = arith.constant 0 : index
    %c0_11 = arith.constant 0 : index
    %15 = vector.load %arg5[%c0_10, %c0_11] : memref<1x16xf32, #tpu.memory_space<vmem>>, vector<1x16xf32>
    %16 = vector.broadcast %15 : vector<1x16xf32> to vector<16x16xf32>
    %17 = arith.addf %14, %16 : vector<16x16xf32>
    %cst_12 = arith.constant 0.000000e+00 : f32
    %18 = vector.broadcast %cst_12 : f32 to vector<16x16xf32>
    %19 = arith.cmpf ogt, %17, %18 : vector<16x16xf32>
    %cst_13 = arith.constant 0.00999999977 : f32
    %20 = vector.broadcast %cst_13 : f32 to vector<16x16xf32>
    %21 = arith.mulf %20, %17 : vector<16x16xf32>
    %22 = arith.select %19, %17, %21 : vector<16x16xi1>, vector<16x16xf32>
    %23 = arith.truncf %22 : vector<16x16xf32> to vector<16x16xbf16>
    %c0_14 = arith.constant 0 : index
    %c0_15 = arith.constant 0 : index
    %24 = vector.load %arg6[%c0_14, %c0_15] : memref<16x256xbf16, #tpu.memory_space<vmem>>, vector<16x256xbf16>
    %cst_16 = arith.constant dense<0.000000e+00> : vector<16x256xf32>
    %25 = tpu.matmul %23, %24, %cst_16 {dimension_numbers = #tpu.dot_dimension_numbers<[1], [0], [0], [1], [0, 0, 1, 1], [], []>} : vector<16x16xbf16>, vector<16x256xbf16>, vector<16x256xf32> -> vector<16x256xf32>
    %c0_17 = arith.constant 0 : index
    %c0_18 = arith.constant 0 : index
    %26 = vector.load %arg7[%c0_17, %c0_18] : memref<1x256xf32, #tpu.memory_space<vmem>>, vector<1x256xf32>
    %27 = vector.broadcast %26 : vector<1x256xf32> to vector<16x256xf32>
    %28 = arith.addf %25, %27 : vector<16x256xf32>
    %29 = vector.extract_strided_slice %28 {offsets = [0, 0], sizes = [16, 128], strides = [1, 1]} : vector<16x256xf32> to vector<16x128xf32>
    %c0_19 = arith.constant 0 : index
    %c0_20 = arith.constant 0 : index
    %30 = vector.load %arg8[%c0_19, %c0_20] : memref<16x128xf32, #tpu.memory_space<vmem>>, vector<16x128xf32>
    tpu.vector_store %arg8[%c0_19, %c0_20], %29 {strides = array<i32>} : memref<16x128xf32, #tpu.memory_space<vmem>>, vector<16x128xf32>,
    %31 = vector.extract_strided_slice %28 {offsets = [0, 128], sizes = [16, 128], strides = [1, 1]} : vector<16x256xf32> to vector<16x128xf32>
    %c0_21 = arith.constant 0 : index
    %c0_22 = arith.constant 0 : index
    %32 = vector.load %arg9[%c0_21, %c0_22] : memref<16x128xf32, #tpu.memory_space<vmem>>, vector<16x128xf32>
    tpu.vector_store %arg9[%c0_21, %c0_22], %31 {strides = array<i32>} : memref<16x128xf32, #tpu.memory_space<vmem>>, vector<16x128xf32>,
    return
  }
  func.func @transform_0(%arg0: i32) -> (i32, i32) {
    %c0_i32 = arith.constant 0 : i32
    %c0_i32_0 = arith.constant 0 : i32
    return %arg0, %c0_i32 : i32, i32
  }
  func.func @transform_1(%arg0: i32) -> (i32, i32) {
    %c0_i32 = arith.constant 0 : i32
    %c0_i32_0 = arith.constant 0 : i32
    %c0_i32_1 = arith.constant 0 : i32
    return %c0_i32, %c0_i32_0 : i32, i32
  }
  func.func @transform_2(%arg0: i32) -> (i32, i32) {
    %c0_i32 = arith.constant 0 : i32
    %c0_i32_0 = arith.constant 0 : i32
    %c0_i32_1 = arith.constant 0 : i32
    return %c0_i32, %c0_i32_0 : i32, i32
  }
  func.func @transform_3(%arg0: i32) -> (i32, i32) {
    %c0_i32 = arith.constant 0 : i32
    %c0_i32_0 = arith.constant 0 : i32
    %c0_i32_1 = arith.constant 0 : i32
    return %c0_i32, %c0_i32_0 : i32, i32
  }
  func.func @transform_4(%arg0: i32) -> (i32, i32) {
    %c0_i32 = arith.constant 0 : i32
    %c0_i32_0 = arith.constant 0 : i32
    %c0_i32_1 = arith.constant 0 : i32
    return %c0_i32, %c0_i32_0 : i32, i32
  }
  func.func @transform_5(%arg0: i32) -> (i32, i32) {
    %c0_i32 = arith.constant 0 : i32
    %c0_i32_0 = arith.constant 0 : i32
    %c0_i32_1 = arith.constant 0 : i32
    return %c0_i32, %c0_i32_0 : i32, i32
  }
  func.func @transform_6(%arg0: i32) -> (i32, i32) {
    %c0_i32 = arith.constant 0 : i32
    %c0_i32_0 = arith.constant 0 : i32
    %c0_i32_1 = arith.constant 0 : i32
    return %c0_i32, %c0_i32_0 : i32, i32
  }
  func.func @transform_7(%arg0: i32) -> (i32, i32) {
    %c0_i32 = arith.constant 0 : i32
    %c0_i32_0 = arith.constant 0 : i32
    return %arg0, %c0_i32 : i32, i32
  }
  func.func @transform_8(%arg0: i32) -> (i32, i32) {
    %c0_i32 = arith.constant 0 : i32
    %c0_i32_0 = arith.constant 0 : i32
    return %arg0, %c0_i32 : i32, i32
  }
}

module attributes {stable_mosaic.version = 11 : i64} {
  func.func @bilstm_kernel(%arg0: i32, %arg1: memref<8x2x128xf32, #tpu.memory_space<vmem>>, %arg2: memref<8x2x128xf32, #tpu.memory_space<vmem>>, %arg3: memref<32x128xbf16, #tpu.memory_space<vmem>>, %arg4: memref<32x128xbf16, #tpu.memory_space<vmem>>, %arg5: memref<8x2x32xbf16, #tpu.memory_space<vmem>>, %arg6: memref<8x2x32xbf16, #tpu.memory_space<vmem>>, %arg7: memref<2x32xf32, #tpu.memory_space<vmem>>, %arg8: memref<2x32xf32, #tpu.memory_space<vmem>>, %arg9: memref<2x32xf32, #tpu.memory_space<vmem>>, %arg10: memref<2x32xf32, #tpu.memory_space<vmem>>) attributes {dimension_semantics = [#tpu.dimension_semantics<arbitrary>], iteration_bounds = array<i64: 1>, scalar_prefetch = 0 : i64, scratch_operands = 4 : i64, tpu.core_type = #tpu.core_type<tc>, window_params = [{transform_indices = @transform_0, window_bounds = array<i64: 8, 2, 128>}, {transform_indices = @transform_1, window_bounds = array<i64: 8, 2, 128>}, {pipeline_mode = #tpu.pipeline_mode<synchronous>, transform_indices = @transform_2, window_bounds = array<i64: 32, 128>}, {pipeline_mode = #tpu.pipeline_mode<synchronous>, transform_indices = @transform_3, window_bounds = array<i64: 32, 128>}, {transform_indices = @transform_4, window_bounds = array<i64: 8, 2, 32>}, {transform_indices = @transform_5, window_bounds = array<i64: 8, 2, 32>}]} {
    %c0_i32 = arith.constant 0 : i32
    %0 = arith.cmpi eq, %arg0, %c0_i32 : i32
    %1 = arith.extui %0 : i1 to i32
    %c0_i32_0 = arith.constant 0 : i32
    %2 = arith.cmpi ne, %1, %c0_i32_0 : i32
    scf.if %2 {
      %cst_296 = arith.constant 0.000000e+00 : f32
      %667 = vector.broadcast %cst_296 : f32 to vector<2x32xf32>
      %c0_297 = arith.constant 0 : index
      %c0_298 = arith.constant 0 : index
      %668 = vector.load %arg7[%c0_297, %c0_298] : memref<2x32xf32, #tpu.memory_space<vmem>>, vector<2x32xf32>
      tpu.vector_store %arg7[%c0_297, %c0_298], %667 {strides = array<i32>} : memref<2x32xf32, #tpu.memory_space<vmem>>, vector<2x32xf32>,
      %cst_299 = arith.constant 0.000000e+00 : f32
      %669 = vector.broadcast %cst_299 : f32 to vector<2x32xf32>
      %c0_300 = arith.constant 0 : index
      %c0_301 = arith.constant 0 : index
      %670 = vector.load %arg8[%c0_300, %c0_301] : memref<2x32xf32, #tpu.memory_space<vmem>>, vector<2x32xf32>
      tpu.vector_store %arg8[%c0_300, %c0_301], %669 {strides = array<i32>} : memref<2x32xf32, #tpu.memory_space<vmem>>, vector<2x32xf32>,
      %cst_302 = arith.constant 0.000000e+00 : f32
      %671 = vector.broadcast %cst_302 : f32 to vector<2x32xf32>
      %c0_303 = arith.constant 0 : index
      %c0_304 = arith.constant 0 : index
      %672 = vector.load %arg9[%c0_303, %c0_304] : memref<2x32xf32, #tpu.memory_space<vmem>>, vector<2x32xf32>
      tpu.vector_store %arg9[%c0_303, %c0_304], %671 {strides = array<i32>} : memref<2x32xf32, #tpu.memory_space<vmem>>, vector<2x32xf32>,
      %cst_305 = arith.constant 0.000000e+00 : f32
      %673 = vector.broadcast %cst_305 : f32 to vector<2x32xf32>
      %c0_306 = arith.constant 0 : index
      %c0_307 = arith.constant 0 : index
      %674 = vector.load %arg10[%c0_306, %c0_307] : memref<2x32xf32, #tpu.memory_space<vmem>>, vector<2x32xf32>
      tpu.vector_store %arg10[%c0_306, %c0_307], %673 {strides = array<i32>} : memref<2x32xf32, #tpu.memory_space<vmem>>, vector<2x32xf32>,
    } else {
    }
    %c0_i32_1 = arith.constant 0 : i32
    %3 = arith.index_cast %c0_i32_1 : i32 to index
    %c0 = arith.constant 0 : index
    %c0_2 = arith.constant 0 : index
    %4 = vector.load %arg1[%3, %c0, %c0_2] : memref<8x2x128xf32, #tpu.memory_space<vmem>>, vector<1x2x128xf32>
    %5 = vector.shape_cast %4 : vector<1x2x128xf32> to vector<2x128xf32>
    %c0_3 = arith.constant 0 : index
    %c0_4 = arith.constant 0 : index
    %6 = vector.load %arg7[%c0_3, %c0_4] : memref<2x32xf32, #tpu.memory_space<vmem>>, vector<2x32xf32>
    %7 = arith.truncf %6 : vector<2x32xf32> to vector<2x32xbf16>
    %c0_5 = arith.constant 0 : index
    %c0_6 = arith.constant 0 : index
    %8 = vector.load %arg3[%c0_5, %c0_6] : memref<32x128xbf16, #tpu.memory_space<vmem>>, vector<32x128xbf16>
    %cst = arith.constant dense<0.000000e+00> : vector<2x128xf32>
    %9 = tpu.matmul %7, %8, %cst {dimension_numbers = #tpu.dot_dimension_numbers<[1], [0], [0], [1], [0, 0, 1, 1], [], []>} : vector<2x32xbf16>, vector<32x128xbf16>, vector<2x128xf32> -> vector<2x128xf32>
    %10 = arith.addf %5, %9 : vector<2x128xf32>
    %11 = vector.extract_strided_slice %10 {offsets = [0, 0], sizes = [2, 32], strides = [1, 1]} : vector<2x128xf32> to vector<2x32xf32>
    %12 = arith.negf %11 : vector<2x32xf32>
    %13 = math.exp %12 : vector<2x32xf32>
    %cst_7 = arith.constant 1.000000e+00 : f32
    %14 = vector.broadcast %cst_7 : f32 to vector<2x32xf32>
    %15 = arith.addf %14, %13 : vector<2x32xf32>
    %16 = arith.divf %14, %15 : vector<2x32xf32>
    %17 = vector.extract_strided_slice %10 {offsets = [0, 32], sizes = [2, 32], strides = [1, 1]} : vector<2x128xf32> to vector<2x32xf32>
    %18 = arith.negf %17 : vector<2x32xf32>
    %19 = math.exp %18 : vector<2x32xf32>
    %cst_8 = arith.constant 1.000000e+00 : f32
    %20 = vector.broadcast %cst_8 : f32 to vector<2x32xf32>
    %21 = arith.addf %20, %19 : vector<2x32xf32>
    %22 = arith.divf %20, %21 : vector<2x32xf32>
    %23 = vector.extract_strided_slice %10 {offsets = [0, 64], sizes = [2, 32], strides = [1, 1]} : vector<2x128xf32> to vector<2x32xf32>
    %24 = math.tanh %23 : vector<2x32xf32>
    %25 = vector.extract_strided_slice %10 {offsets = [0, 96], sizes = [2, 32], strides = [1, 1]} : vector<2x128xf32> to vector<2x32xf32>
    %26 = arith.negf %25 : vector<2x32xf32>
    %27 = math.exp %26 : vector<2x32xf32>
    %cst_9 = arith.constant 1.000000e+00 : f32
    %28 = vector.broadcast %cst_9 : f32 to vector<2x32xf32>
    %29 = arith.addf %28, %27 : vector<2x32xf32>
    %30 = arith.divf %28, %29 : vector<2x32xf32>
    %c0_10 = arith.constant 0 : index
    %c0_11 = arith.constant 0 : index
    %31 = vector.load %arg8[%c0_10, %c0_11] : memref<2x32xf32, #tpu.memory_space<vmem>>, vector<2x32xf32>
    %32 = arith.mulf %22, %31 : vector<2x32xf32>
    %33 = arith.mulf %16, %24 : vector<2x32xf32>
    %34 = arith.addf %32, %33 : vector<2x32xf32>
    %35 = math.tanh %34 : vector<2x32xf32>
    %36 = arith.mulf %30, %35 : vector<2x32xf32>
    %c0_12 = arith.constant 0 : index
    %c0_13 = arith.constant 0 : index
    %37 = vector.load %arg7[%c0_12, %c0_13] : memref<2x32xf32, #tpu.memory_space<vmem>>, vector<2x32xf32>
    tpu.vector_store %arg7[%c0_12, %c0_13], %36 {strides = array<i32>} : memref<2x32xf32, #tpu.memory_space<vmem>>, vector<2x32xf32>,
    %c0_14 = arith.constant 0 : index
    %c0_15 = arith.constant 0 : index
    %38 = vector.load %arg8[%c0_14, %c0_15] : memref<2x32xf32, #tpu.memory_space<vmem>>, vector<2x32xf32>
    tpu.vector_store %arg8[%c0_14, %c0_15], %34 {strides = array<i32>} : memref<2x32xf32, #tpu.memory_space<vmem>>, vector<2x32xf32>,
    %39 = arith.truncf %36 : vector<2x32xf32> to vector<2x32xbf16>
    %40 = arith.index_cast %c0_i32_1 : i32 to index
    %c0_16 = arith.constant 0 : index
    %c0_17 = arith.constant 0 : index
    %41 = vector.load %arg5[%40, %c0_16, %c0_17] : memref<8x2x32xbf16, #tpu.memory_space<vmem>>, vector<1x2x32xbf16>
    %42 = vector.shape_cast %41 : vector<1x2x32xbf16> to vector<2x32xbf16>
    %43 = vector.shape_cast %39 : vector<2x32xbf16> to vector<1x2x32xbf16>
    tpu.vector_store %arg5[%40, %c0_16, %c0_17], %43 {strides = array<i32>} : memref<8x2x32xbf16, #tpu.memory_space<vmem>>, vector<1x2x32xbf16>,
    %c7_i32 = arith.constant 7 : i32
    %44 = arith.subi %c7_i32, %c0_i32_1 : i32
    %45 = arith.index_cast %44 : i32 to index
    %c0_18 = arith.constant 0 : index
    %c0_19 = arith.constant 0 : index
    %46 = vector.load %arg2[%45, %c0_18, %c0_19] : memref<8x2x128xf32, #tpu.memory_space<vmem>>, vector<1x2x128xf32>
    %47 = vector.shape_cast %46 : vector<1x2x128xf32> to vector<2x128xf32>
    %c0_20 = arith.constant 0 : index
    %c0_21 = arith.constant 0 : index
    %48 = vector.load %arg9[%c0_20, %c0_21] : memref<2x32xf32, #tpu.memory_space<vmem>>, vector<2x32xf32>
    %49 = arith.truncf %48 : vector<2x32xf32> to vector<2x32xbf16>
    %c0_22 = arith.constant 0 : index
    %c0_23 = arith.constant 0 : index
    %50 = vector.load %arg4[%c0_22, %c0_23] : memref<32x128xbf16, #tpu.memory_space<vmem>>, vector<32x128xbf16>
    %cst_24 = arith.constant dense<0.000000e+00> : vector<2x128xf32>
    %51 = tpu.matmul %49, %50, %cst_24 {dimension_numbers = #tpu.dot_dimension_numbers<[1], [0], [0], [1], [0, 0, 1, 1], [], []>} : vector<2x32xbf16>, vector<32x128xbf16>, vector<2x128xf32> -> vector<2x128xf32>
    %52 = arith.addf %47, %51 : vector<2x128xf32>
    %53 = vector.extract_strided_slice %52 {offsets = [0, 0], sizes = [2, 32], strides = [1, 1]} : vector<2x128xf32> to vector<2x32xf32>
    %54 = arith.negf %53 : vector<2x32xf32>
    %55 = math.exp %54 : vector<2x32xf32>
    %cst_25 = arith.constant 1.000000e+00 : f32
    %56 = vector.broadcast %cst_25 : f32 to vector<2x32xf32>
    %57 = arith.addf %56, %55 : vector<2x32xf32>
    %58 = arith.divf %56, %57 : vector<2x32xf32>
    %59 = vector.extract_strided_slice %52 {offsets = [0, 32], sizes = [2, 32], strides = [1, 1]} : vector<2x128xf32> to vector<2x32xf32>
    %60 = arith.negf %59 : vector<2x32xf32>
    %61 = math.exp %60 : vector<2x32xf32>
    %cst_26 = arith.constant 1.000000e+00 : f32
    %62 = vector.broadcast %cst_26 : f32 to vector<2x32xf32>
    %63 = arith.addf %62, %61 : vector<2x32xf32>
    %64 = arith.divf %62, %63 : vector<2x32xf32>
    %65 = vector.extract_strided_slice %52 {offsets = [0, 64], sizes = [2, 32], strides = [1, 1]} : vector<2x128xf32> to vector<2x32xf32>
    %66 = math.tanh %65 : vector<2x32xf32>
    %67 = vector.extract_strided_slice %52 {offsets = [0, 96], sizes = [2, 32], strides = [1, 1]} : vector<2x128xf32> to vector<2x32xf32>
    %68 = arith.negf %67 : vector<2x32xf32>
    %69 = math.exp %68 : vector<2x32xf32>
    %cst_27 = arith.constant 1.000000e+00 : f32
    %70 = vector.broadcast %cst_27 : f32 to vector<2x32xf32>
    %71 = arith.addf %70, %69 : vector<2x32xf32>
    %72 = arith.divf %70, %71 : vector<2x32xf32>
    %c0_28 = arith.constant 0 : index
    %c0_29 = arith.constant 0 : index
    %73 = vector.load %arg10[%c0_28, %c0_29] : memref<2x32xf32, #tpu.memory_space<vmem>>, vector<2x32xf32>
    %74 = arith.mulf %64, %73 : vector<2x32xf32>
    %75 = arith.mulf %58, %66 : vector<2x32xf32>
    %76 = arith.addf %74, %75 : vector<2x32xf32>
    %77 = math.tanh %76 : vector<2x32xf32>
    %78 = arith.mulf %72, %77 : vector<2x32xf32>
    %c0_30 = arith.constant 0 : index
    %c0_31 = arith.constant 0 : index
    %79 = vector.load %arg9[%c0_30, %c0_31] : memref<2x32xf32, #tpu.memory_space<vmem>>, vector<2x32xf32>
    tpu.vector_store %arg9[%c0_30, %c0_31], %78 {strides = array<i32>} : memref<2x32xf32, #tpu.memory_space<vmem>>, vector<2x32xf32>,
    %c0_32 = arith.constant 0 : index
    %c0_33 = arith.constant 0 : index
    %80 = vector.load %arg10[%c0_32, %c0_33] : memref<2x32xf32, #tpu.memory_space<vmem>>, vector<2x32xf32>
    tpu.vector_store %arg10[%c0_32, %c0_33], %76 {strides = array<i32>} : memref<2x32xf32, #tpu.memory_space<vmem>>, vector<2x32xf32>,
    %81 = arith.truncf %78 : vector<2x32xf32> to vector<2x32xbf16>
    %82 = arith.index_cast %44 : i32 to index
    %c0_34 = arith.constant 0 : index
    %c0_35 = arith.constant 0 : index
    %83 = vector.load %arg6[%82, %c0_34, %c0_35] : memref<8x2x32xbf16, #tpu.memory_space<vmem>>, vector<1x2x32xbf16>
    %84 = vector.shape_cast %83 : vector<1x2x32xbf16> to vector<2x32xbf16>
    %85 = vector.shape_cast %81 : vector<2x32xbf16> to vector<1x2x32xbf16>
    tpu.vector_store %arg6[%82, %c0_34, %c0_35], %85 {strides = array<i32>} : memref<8x2x32xbf16, #tpu.memory_space<vmem>>, vector<1x2x32xbf16>,
    %c1_i32 = arith.constant 1 : i32
    %86 = arith.index_cast %c1_i32 : i32 to index
    %c0_36 = arith.constant 0 : index
    %c0_37 = arith.constant 0 : index
    %87 = vector.load %arg1[%86, %c0_36, %c0_37] : memref<8x2x128xf32, #tpu.memory_space<vmem>>, vector<1x2x128xf32>
    %88 = vector.shape_cast %87 : vector<1x2x128xf32> to vector<2x128xf32>
    %c0_38 = arith.constant 0 : index
    %c0_39 = arith.constant 0 : index
    %89 = vector.load %arg7[%c0_38, %c0_39] : memref<2x32xf32, #tpu.memory_space<vmem>>, vector<2x32xf32>
    %90 = arith.truncf %89 : vector<2x32xf32> to vector<2x32xbf16>
    %c0_40 = arith.constant 0 : index
    %c0_41 = arith.constant 0 : index
    %91 = vector.load %arg3[%c0_40, %c0_41] : memref<32x128xbf16, #tpu.memory_space<vmem>>, vector<32x128xbf16>
    %cst_42 = arith.constant dense<0.000000e+00> : vector<2x128xf32>
    %92 = tpu.matmul %90, %91, %cst_42 {dimension_numbers = #tpu.dot_dimension_numbers<[1], [0], [0], [1], [0, 0, 1, 1], [], []>} : vector<2x32xbf16>, vector<32x128xbf16>, vector<2x128xf32> -> vector<2x128xf32>
    %93 = arith.addf %88, %92 : vector<2x128xf32>
    %94 = vector.extract_strided_slice %93 {offsets = [0, 0], sizes = [2, 32], strides = [1, 1]} : vector<2x128xf32> to vector<2x32xf32>
    %95 = arith.negf %94 : vector<2x32xf32>
    %96 = math.exp %95 : vector<2x32xf32>
    %cst_43 = arith.constant 1.000000e+00 : f32
    %97 = vector.broadcast %cst_43 : f32 to vector<2x32xf32>
    %98 = arith.addf %97, %96 : vector<2x32xf32>
    %99 = arith.divf %97, %98 : vector<2x32xf32>
    %100 = vector.extract_strided_slice %93 {offsets = [0, 32], sizes = [2, 32], strides = [1, 1]} : vector<2x128xf32> to vector<2x32xf32>
    %101 = arith.negf %100 : vector<2x32xf32>
    %102 = math.exp %101 : vector<2x32xf32>
    %cst_44 = arith.constant 1.000000e+00 : f32
    %103 = vector.broadcast %cst_44 : f32 to vector<2x32xf32>
    %104 = arith.addf %103, %102 : vector<2x32xf32>
    %105 = arith.divf %103, %104 : vector<2x32xf32>
    %106 = vector.extract_strided_slice %93 {offsets = [0, 64], sizes = [2, 32], strides = [1, 1]} : vector<2x128xf32> to vector<2x32xf32>
    %107 = math.tanh %106 : vector<2x32xf32>
    %108 = vector.extract_strided_slice %93 {offsets = [0, 96], sizes = [2, 32], strides = [1, 1]} : vector<2x128xf32> to vector<2x32xf32>
    %109 = arith.negf %108 : vector<2x32xf32>
    %110 = math.exp %109 : vector<2x32xf32>
    %cst_45 = arith.constant 1.000000e+00 : f32
    %111 = vector.broadcast %cst_45 : f32 to vector<2x32xf32>
    %112 = arith.addf %111, %110 : vector<2x32xf32>
    %113 = arith.divf %111, %112 : vector<2x32xf32>
    %c0_46 = arith.constant 0 : index
    %c0_47 = arith.constant 0 : index
    %114 = vector.load %arg8[%c0_46, %c0_47] : memref<2x32xf32, #tpu.memory_space<vmem>>, vector<2x32xf32>
    %115 = arith.mulf %105, %114 : vector<2x32xf32>
    %116 = arith.mulf %99, %107 : vector<2x32xf32>
    %117 = arith.addf %115, %116 : vector<2x32xf32>
    %118 = math.tanh %117 : vector<2x32xf32>
    %119 = arith.mulf %113, %118 : vector<2x32xf32>
    %c0_48 = arith.constant 0 : index
    %c0_49 = arith.constant 0 : index
    %120 = vector.load %arg7[%c0_48, %c0_49] : memref<2x32xf32, #tpu.memory_space<vmem>>, vector<2x32xf32>
    tpu.vector_store %arg7[%c0_48, %c0_49], %119 {strides = array<i32>} : memref<2x32xf32, #tpu.memory_space<vmem>>, vector<2x32xf32>,
    %c0_50 = arith.constant 0 : index
    %c0_51 = arith.constant 0 : index
    %121 = vector.load %arg8[%c0_50, %c0_51] : memref<2x32xf32, #tpu.memory_space<vmem>>, vector<2x32xf32>
    tpu.vector_store %arg8[%c0_50, %c0_51], %117 {strides = array<i32>} : memref<2x32xf32, #tpu.memory_space<vmem>>, vector<2x32xf32>,
    %122 = arith.truncf %119 : vector<2x32xf32> to vector<2x32xbf16>
    %123 = arith.index_cast %c1_i32 : i32 to index
    %c0_52 = arith.constant 0 : index
    %c0_53 = arith.constant 0 : index
    %124 = vector.load %arg5[%123, %c0_52, %c0_53] : memref<8x2x32xbf16, #tpu.memory_space<vmem>>, vector<1x2x32xbf16>
    %125 = vector.shape_cast %124 : vector<1x2x32xbf16> to vector<2x32xbf16>
    %126 = vector.shape_cast %122 : vector<2x32xbf16> to vector<1x2x32xbf16>
    tpu.vector_store %arg5[%123, %c0_52, %c0_53], %126 {strides = array<i32>} : memref<8x2x32xbf16, #tpu.memory_space<vmem>>, vector<1x2x32xbf16>,
    %c7_i32_54 = arith.constant 7 : i32
    %127 = arith.subi %c7_i32_54, %c1_i32 : i32
    %128 = arith.index_cast %127 : i32 to index
    %c0_55 = arith.constant 0 : index
    %c0_56 = arith.constant 0 : index
    %129 = vector.load %arg2[%128, %c0_55, %c0_56] : memref<8x2x128xf32, #tpu.memory_space<vmem>>, vector<1x2x128xf32>
    %130 = vector.shape_cast %129 : vector<1x2x128xf32> to vector<2x128xf32>
    %c0_57 = arith.constant 0 : index
    %c0_58 = arith.constant 0 : index
    %131 = vector.load %arg9[%c0_57, %c0_58] : memref<2x32xf32, #tpu.memory_space<vmem>>, vector<2x32xf32>
    %132 = arith.truncf %131 : vector<2x32xf32> to vector<2x32xbf16>
    %c0_59 = arith.constant 0 : index
    %c0_60 = arith.constant 0 : index
    %133 = vector.load %arg4[%c0_59, %c0_60] : memref<32x128xbf16, #tpu.memory_space<vmem>>, vector<32x128xbf16>
    %cst_61 = arith.constant dense<0.000000e+00> : vector<2x128xf32>
    %134 = tpu.matmul %132, %133, %cst_61 {dimension_numbers = #tpu.dot_dimension_numbers<[1], [0], [0], [1], [0, 0, 1, 1], [], []>} : vector<2x32xbf16>, vector<32x128xbf16>, vector<2x128xf32> -> vector<2x128xf32>
    %135 = arith.addf %130, %134 : vector<2x128xf32>
    %136 = vector.extract_strided_slice %135 {offsets = [0, 0], sizes = [2, 32], strides = [1, 1]} : vector<2x128xf32> to vector<2x32xf32>
    %137 = arith.negf %136 : vector<2x32xf32>
    %138 = math.exp %137 : vector<2x32xf32>
    %cst_62 = arith.constant 1.000000e+00 : f32
    %139 = vector.broadcast %cst_62 : f32 to vector<2x32xf32>
    %140 = arith.addf %139, %138 : vector<2x32xf32>
    %141 = arith.divf %139, %140 : vector<2x32xf32>
    %142 = vector.extract_strided_slice %135 {offsets = [0, 32], sizes = [2, 32], strides = [1, 1]} : vector<2x128xf32> to vector<2x32xf32>
    %143 = arith.negf %142 : vector<2x32xf32>
    %144 = math.exp %143 : vector<2x32xf32>
    %cst_63 = arith.constant 1.000000e+00 : f32
    %145 = vector.broadcast %cst_63 : f32 to vector<2x32xf32>
    %146 = arith.addf %145, %144 : vector<2x32xf32>
    %147 = arith.divf %145, %146 : vector<2x32xf32>
    %148 = vector.extract_strided_slice %135 {offsets = [0, 64], sizes = [2, 32], strides = [1, 1]} : vector<2x128xf32> to vector<2x32xf32>
    %149 = math.tanh %148 : vector<2x32xf32>
    %150 = vector.extract_strided_slice %135 {offsets = [0, 96], sizes = [2, 32], strides = [1, 1]} : vector<2x128xf32> to vector<2x32xf32>
    %151 = arith.negf %150 : vector<2x32xf32>
    %152 = math.exp %151 : vector<2x32xf32>
    %cst_64 = arith.constant 1.000000e+00 : f32
    %153 = vector.broadcast %cst_64 : f32 to vector<2x32xf32>
    %154 = arith.addf %153, %152 : vector<2x32xf32>
    %155 = arith.divf %153, %154 : vector<2x32xf32>
    %c0_65 = arith.constant 0 : index
    %c0_66 = arith.constant 0 : index
    %156 = vector.load %arg10[%c0_65, %c0_66] : memref<2x32xf32, #tpu.memory_space<vmem>>, vector<2x32xf32>
    %157 = arith.mulf %147, %156 : vector<2x32xf32>
    %158 = arith.mulf %141, %149 : vector<2x32xf32>
    %159 = arith.addf %157, %158 : vector<2x32xf32>
    %160 = math.tanh %159 : vector<2x32xf32>
    %161 = arith.mulf %155, %160 : vector<2x32xf32>
    %c0_67 = arith.constant 0 : index
    %c0_68 = arith.constant 0 : index
    %162 = vector.load %arg9[%c0_67, %c0_68] : memref<2x32xf32, #tpu.memory_space<vmem>>, vector<2x32xf32>
    tpu.vector_store %arg9[%c0_67, %c0_68], %161 {strides = array<i32>} : memref<2x32xf32, #tpu.memory_space<vmem>>, vector<2x32xf32>,
    %c0_69 = arith.constant 0 : index
    %c0_70 = arith.constant 0 : index
    %163 = vector.load %arg10[%c0_69, %c0_70] : memref<2x32xf32, #tpu.memory_space<vmem>>, vector<2x32xf32>
    tpu.vector_store %arg10[%c0_69, %c0_70], %159 {strides = array<i32>} : memref<2x32xf32, #tpu.memory_space<vmem>>, vector<2x32xf32>,
    %164 = arith.truncf %161 : vector<2x32xf32> to vector<2x32xbf16>
    %165 = arith.index_cast %127 : i32 to index
    %c0_71 = arith.constant 0 : index
    %c0_72 = arith.constant 0 : index
    %166 = vector.load %arg6[%165, %c0_71, %c0_72] : memref<8x2x32xbf16, #tpu.memory_space<vmem>>, vector<1x2x32xbf16>
    %167 = vector.shape_cast %166 : vector<1x2x32xbf16> to vector<2x32xbf16>
    %168 = vector.shape_cast %164 : vector<2x32xbf16> to vector<1x2x32xbf16>
    tpu.vector_store %arg6[%165, %c0_71, %c0_72], %168 {strides = array<i32>} : memref<8x2x32xbf16, #tpu.memory_space<vmem>>, vector<1x2x32xbf16>,
    %c2_i32 = arith.constant 2 : i32
    %169 = arith.index_cast %c2_i32 : i32 to index
    %c0_73 = arith.constant 0 : index
    %c0_74 = arith.constant 0 : index
    %170 = vector.load %arg1[%169, %c0_73, %c0_74] : memref<8x2x128xf32, #tpu.memory_space<vmem>>, vector<1x2x128xf32>
    %171 = vector.shape_cast %170 : vector<1x2x128xf32> to vector<2x128xf32>
    %c0_75 = arith.constant 0 : index
    %c0_76 = arith.constant 0 : index
    %172 = vector.load %arg7[%c0_75, %c0_76] : memref<2x32xf32, #tpu.memory_space<vmem>>, vector<2x32xf32>
    %173 = arith.truncf %172 : vector<2x32xf32> to vector<2x32xbf16>
    %c0_77 = arith.constant 0 : index
    %c0_78 = arith.constant 0 : index
    %174 = vector.load %arg3[%c0_77, %c0_78] : memref<32x128xbf16, #tpu.memory_space<vmem>>, vector<32x128xbf16>
    %cst_79 = arith.constant dense<0.000000e+00> : vector<2x128xf32>
    %175 = tpu.matmul %173, %174, %cst_79 {dimension_numbers = #tpu.dot_dimension_numbers<[1], [0], [0], [1], [0, 0, 1, 1], [], []>} : vector<2x32xbf16>, vector<32x128xbf16>, vector<2x128xf32> -> vector<2x128xf32>
    %176 = arith.addf %171, %175 : vector<2x128xf32>
    %177 = vector.extract_strided_slice %176 {offsets = [0, 0], sizes = [2, 32], strides = [1, 1]} : vector<2x128xf32> to vector<2x32xf32>
    %178 = arith.negf %177 : vector<2x32xf32>
    %179 = math.exp %178 : vector<2x32xf32>
    %cst_80 = arith.constant 1.000000e+00 : f32
    %180 = vector.broadcast %cst_80 : f32 to vector<2x32xf32>
    %181 = arith.addf %180, %179 : vector<2x32xf32>
    %182 = arith.divf %180, %181 : vector<2x32xf32>
    %183 = vector.extract_strided_slice %176 {offsets = [0, 32], sizes = [2, 32], strides = [1, 1]} : vector<2x128xf32> to vector<2x32xf32>
    %184 = arith.negf %183 : vector<2x32xf32>
    %185 = math.exp %184 : vector<2x32xf32>
    %cst_81 = arith.constant 1.000000e+00 : f32
    %186 = vector.broadcast %cst_81 : f32 to vector<2x32xf32>
    %187 = arith.addf %186, %185 : vector<2x32xf32>
    %188 = arith.divf %186, %187 : vector<2x32xf32>
    %189 = vector.extract_strided_slice %176 {offsets = [0, 64], sizes = [2, 32], strides = [1, 1]} : vector<2x128xf32> to vector<2x32xf32>
    %190 = math.tanh %189 : vector<2x32xf32>
    %191 = vector.extract_strided_slice %176 {offsets = [0, 96], sizes = [2, 32], strides = [1, 1]} : vector<2x128xf32> to vector<2x32xf32>
    %192 = arith.negf %191 : vector<2x32xf32>
    %193 = math.exp %192 : vector<2x32xf32>
    %cst_82 = arith.constant 1.000000e+00 : f32
    %194 = vector.broadcast %cst_82 : f32 to vector<2x32xf32>
    %195 = arith.addf %194, %193 : vector<2x32xf32>
    %196 = arith.divf %194, %195 : vector<2x32xf32>
    %c0_83 = arith.constant 0 : index
    %c0_84 = arith.constant 0 : index
    %197 = vector.load %arg8[%c0_83, %c0_84] : memref<2x32xf32, #tpu.memory_space<vmem>>, vector<2x32xf32>
    %198 = arith.mulf %188, %197 : vector<2x32xf32>
    %199 = arith.mulf %182, %190 : vector<2x32xf32>
    %200 = arith.addf %198, %199 : vector<2x32xf32>
    %201 = math.tanh %200 : vector<2x32xf32>
    %202 = arith.mulf %196, %201 : vector<2x32xf32>
    %c0_85 = arith.constant 0 : index
    %c0_86 = arith.constant 0 : index
    %203 = vector.load %arg7[%c0_85, %c0_86] : memref<2x32xf32, #tpu.memory_space<vmem>>, vector<2x32xf32>
    tpu.vector_store %arg7[%c0_85, %c0_86], %202 {strides = array<i32>} : memref<2x32xf32, #tpu.memory_space<vmem>>, vector<2x32xf32>,
    %c0_87 = arith.constant 0 : index
    %c0_88 = arith.constant 0 : index
    %204 = vector.load %arg8[%c0_87, %c0_88] : memref<2x32xf32, #tpu.memory_space<vmem>>, vector<2x32xf32>
    tpu.vector_store %arg8[%c0_87, %c0_88], %200 {strides = array<i32>} : memref<2x32xf32, #tpu.memory_space<vmem>>, vector<2x32xf32>,
    %205 = arith.truncf %202 : vector<2x32xf32> to vector<2x32xbf16>
    %206 = arith.index_cast %c2_i32 : i32 to index
    %c0_89 = arith.constant 0 : index
    %c0_90 = arith.constant 0 : index
    %207 = vector.load %arg5[%206, %c0_89, %c0_90] : memref<8x2x32xbf16, #tpu.memory_space<vmem>>, vector<1x2x32xbf16>
    %208 = vector.shape_cast %207 : vector<1x2x32xbf16> to vector<2x32xbf16>
    %209 = vector.shape_cast %205 : vector<2x32xbf16> to vector<1x2x32xbf16>
    tpu.vector_store %arg5[%206, %c0_89, %c0_90], %209 {strides = array<i32>} : memref<8x2x32xbf16, #tpu.memory_space<vmem>>, vector<1x2x32xbf16>,
    %c7_i32_91 = arith.constant 7 : i32
    %210 = arith.subi %c7_i32_91, %c2_i32 : i32
    %211 = arith.index_cast %210 : i32 to index
    %c0_92 = arith.constant 0 : index
    %c0_93 = arith.constant 0 : index
    %212 = vector.load %arg2[%211, %c0_92, %c0_93] : memref<8x2x128xf32, #tpu.memory_space<vmem>>, vector<1x2x128xf32>
    %213 = vector.shape_cast %212 : vector<1x2x128xf32> to vector<2x128xf32>
    %c0_94 = arith.constant 0 : index
    %c0_95 = arith.constant 0 : index
    %214 = vector.load %arg9[%c0_94, %c0_95] : memref<2x32xf32, #tpu.memory_space<vmem>>, vector<2x32xf32>
    %215 = arith.truncf %214 : vector<2x32xf32> to vector<2x32xbf16>
    %c0_96 = arith.constant 0 : index
    %c0_97 = arith.constant 0 : index
    %216 = vector.load %arg4[%c0_96, %c0_97] : memref<32x128xbf16, #tpu.memory_space<vmem>>, vector<32x128xbf16>
    %cst_98 = arith.constant dense<0.000000e+00> : vector<2x128xf32>
    %217 = tpu.matmul %215, %216, %cst_98 {dimension_numbers = #tpu.dot_dimension_numbers<[1], [0], [0], [1], [0, 0, 1, 1], [], []>} : vector<2x32xbf16>, vector<32x128xbf16>, vector<2x128xf32> -> vector<2x128xf32>
    %218 = arith.addf %213, %217 : vector<2x128xf32>
    %219 = vector.extract_strided_slice %218 {offsets = [0, 0], sizes = [2, 32], strides = [1, 1]} : vector<2x128xf32> to vector<2x32xf32>
    %220 = arith.negf %219 : vector<2x32xf32>
    %221 = math.exp %220 : vector<2x32xf32>
    %cst_99 = arith.constant 1.000000e+00 : f32
    %222 = vector.broadcast %cst_99 : f32 to vector<2x32xf32>
    %223 = arith.addf %222, %221 : vector<2x32xf32>
    %224 = arith.divf %222, %223 : vector<2x32xf32>
    %225 = vector.extract_strided_slice %218 {offsets = [0, 32], sizes = [2, 32], strides = [1, 1]} : vector<2x128xf32> to vector<2x32xf32>
    %226 = arith.negf %225 : vector<2x32xf32>
    %227 = math.exp %226 : vector<2x32xf32>
    %cst_100 = arith.constant 1.000000e+00 : f32
    %228 = vector.broadcast %cst_100 : f32 to vector<2x32xf32>
    %229 = arith.addf %228, %227 : vector<2x32xf32>
    %230 = arith.divf %228, %229 : vector<2x32xf32>
    %231 = vector.extract_strided_slice %218 {offsets = [0, 64], sizes = [2, 32], strides = [1, 1]} : vector<2x128xf32> to vector<2x32xf32>
    %232 = math.tanh %231 : vector<2x32xf32>
    %233 = vector.extract_strided_slice %218 {offsets = [0, 96], sizes = [2, 32], strides = [1, 1]} : vector<2x128xf32> to vector<2x32xf32>
    %234 = arith.negf %233 : vector<2x32xf32>
    %235 = math.exp %234 : vector<2x32xf32>
    %cst_101 = arith.constant 1.000000e+00 : f32
    %236 = vector.broadcast %cst_101 : f32 to vector<2x32xf32>
    %237 = arith.addf %236, %235 : vector<2x32xf32>
    %238 = arith.divf %236, %237 : vector<2x32xf32>
    %c0_102 = arith.constant 0 : index
    %c0_103 = arith.constant 0 : index
    %239 = vector.load %arg10[%c0_102, %c0_103] : memref<2x32xf32, #tpu.memory_space<vmem>>, vector<2x32xf32>
    %240 = arith.mulf %230, %239 : vector<2x32xf32>
    %241 = arith.mulf %224, %232 : vector<2x32xf32>
    %242 = arith.addf %240, %241 : vector<2x32xf32>
    %243 = math.tanh %242 : vector<2x32xf32>
    %244 = arith.mulf %238, %243 : vector<2x32xf32>
    %c0_104 = arith.constant 0 : index
    %c0_105 = arith.constant 0 : index
    %245 = vector.load %arg9[%c0_104, %c0_105] : memref<2x32xf32, #tpu.memory_space<vmem>>, vector<2x32xf32>
    tpu.vector_store %arg9[%c0_104, %c0_105], %244 {strides = array<i32>} : memref<2x32xf32, #tpu.memory_space<vmem>>, vector<2x32xf32>,
    %c0_106 = arith.constant 0 : index
    %c0_107 = arith.constant 0 : index
    %246 = vector.load %arg10[%c0_106, %c0_107] : memref<2x32xf32, #tpu.memory_space<vmem>>, vector<2x32xf32>
    tpu.vector_store %arg10[%c0_106, %c0_107], %242 {strides = array<i32>} : memref<2x32xf32, #tpu.memory_space<vmem>>, vector<2x32xf32>,
    %247 = arith.truncf %244 : vector<2x32xf32> to vector<2x32xbf16>
    %248 = arith.index_cast %210 : i32 to index
    %c0_108 = arith.constant 0 : index
    %c0_109 = arith.constant 0 : index
    %249 = vector.load %arg6[%248, %c0_108, %c0_109] : memref<8x2x32xbf16, #tpu.memory_space<vmem>>, vector<1x2x32xbf16>
    %250 = vector.shape_cast %249 : vector<1x2x32xbf16> to vector<2x32xbf16>
    %251 = vector.shape_cast %247 : vector<2x32xbf16> to vector<1x2x32xbf16>
    tpu.vector_store %arg6[%248, %c0_108, %c0_109], %251 {strides = array<i32>} : memref<8x2x32xbf16, #tpu.memory_space<vmem>>, vector<1x2x32xbf16>,
    %c3_i32 = arith.constant 3 : i32
    %252 = arith.index_cast %c3_i32 : i32 to index
    %c0_110 = arith.constant 0 : index
    %c0_111 = arith.constant 0 : index
    %253 = vector.load %arg1[%252, %c0_110, %c0_111] : memref<8x2x128xf32, #tpu.memory_space<vmem>>, vector<1x2x128xf32>
    %254 = vector.shape_cast %253 : vector<1x2x128xf32> to vector<2x128xf32>
    %c0_112 = arith.constant 0 : index
    %c0_113 = arith.constant 0 : index
    %255 = vector.load %arg7[%c0_112, %c0_113] : memref<2x32xf32, #tpu.memory_space<vmem>>, vector<2x32xf32>
    %256 = arith.truncf %255 : vector<2x32xf32> to vector<2x32xbf16>
    %c0_114 = arith.constant 0 : index
    %c0_115 = arith.constant 0 : index
    %257 = vector.load %arg3[%c0_114, %c0_115] : memref<32x128xbf16, #tpu.memory_space<vmem>>, vector<32x128xbf16>
    %cst_116 = arith.constant dense<0.000000e+00> : vector<2x128xf32>
    %258 = tpu.matmul %256, %257, %cst_116 {dimension_numbers = #tpu.dot_dimension_numbers<[1], [0], [0], [1], [0, 0, 1, 1], [], []>} : vector<2x32xbf16>, vector<32x128xbf16>, vector<2x128xf32> -> vector<2x128xf32>
    %259 = arith.addf %254, %258 : vector<2x128xf32>
    %260 = vector.extract_strided_slice %259 {offsets = [0, 0], sizes = [2, 32], strides = [1, 1]} : vector<2x128xf32> to vector<2x32xf32>
    %261 = arith.negf %260 : vector<2x32xf32>
    %262 = math.exp %261 : vector<2x32xf32>
    %cst_117 = arith.constant 1.000000e+00 : f32
    %263 = vector.broadcast %cst_117 : f32 to vector<2x32xf32>
    %264 = arith.addf %263, %262 : vector<2x32xf32>
    %265 = arith.divf %263, %264 : vector<2x32xf32>
    %266 = vector.extract_strided_slice %259 {offsets = [0, 32], sizes = [2, 32], strides = [1, 1]} : vector<2x128xf32> to vector<2x32xf32>
    %267 = arith.negf %266 : vector<2x32xf32>
    %268 = math.exp %267 : vector<2x32xf32>
    %cst_118 = arith.constant 1.000000e+00 : f32
    %269 = vector.broadcast %cst_118 : f32 to vector<2x32xf32>
    %270 = arith.addf %269, %268 : vector<2x32xf32>
    %271 = arith.divf %269, %270 : vector<2x32xf32>
    %272 = vector.extract_strided_slice %259 {offsets = [0, 64], sizes = [2, 32], strides = [1, 1]} : vector<2x128xf32> to vector<2x32xf32>
    %273 = math.tanh %272 : vector<2x32xf32>
    %274 = vector.extract_strided_slice %259 {offsets = [0, 96], sizes = [2, 32], strides = [1, 1]} : vector<2x128xf32> to vector<2x32xf32>
    %275 = arith.negf %274 : vector<2x32xf32>
    %276 = math.exp %275 : vector<2x32xf32>
    %cst_119 = arith.constant 1.000000e+00 : f32
    %277 = vector.broadcast %cst_119 : f32 to vector<2x32xf32>
    %278 = arith.addf %277, %276 : vector<2x32xf32>
    %279 = arith.divf %277, %278 : vector<2x32xf32>
    %c0_120 = arith.constant 0 : index
    %c0_121 = arith.constant 0 : index
    %280 = vector.load %arg8[%c0_120, %c0_121] : memref<2x32xf32, #tpu.memory_space<vmem>>, vector<2x32xf32>
    %281 = arith.mulf %271, %280 : vector<2x32xf32>
    %282 = arith.mulf %265, %273 : vector<2x32xf32>
    %283 = arith.addf %281, %282 : vector<2x32xf32>
    %284 = math.tanh %283 : vector<2x32xf32>
    %285 = arith.mulf %279, %284 : vector<2x32xf32>
    %c0_122 = arith.constant 0 : index
    %c0_123 = arith.constant 0 : index
    %286 = vector.load %arg7[%c0_122, %c0_123] : memref<2x32xf32, #tpu.memory_space<vmem>>, vector<2x32xf32>
    tpu.vector_store %arg7[%c0_122, %c0_123], %285 {strides = array<i32>} : memref<2x32xf32, #tpu.memory_space<vmem>>, vector<2x32xf32>,
    %c0_124 = arith.constant 0 : index
    %c0_125 = arith.constant 0 : index
    %287 = vector.load %arg8[%c0_124, %c0_125] : memref<2x32xf32, #tpu.memory_space<vmem>>, vector<2x32xf32>
    tpu.vector_store %arg8[%c0_124, %c0_125], %283 {strides = array<i32>} : memref<2x32xf32, #tpu.memory_space<vmem>>, vector<2x32xf32>,
    %288 = arith.truncf %285 : vector<2x32xf32> to vector<2x32xbf16>
    %289 = arith.index_cast %c3_i32 : i32 to index
    %c0_126 = arith.constant 0 : index
    %c0_127 = arith.constant 0 : index
    %290 = vector.load %arg5[%289, %c0_126, %c0_127] : memref<8x2x32xbf16, #tpu.memory_space<vmem>>, vector<1x2x32xbf16>
    %291 = vector.shape_cast %290 : vector<1x2x32xbf16> to vector<2x32xbf16>
    %292 = vector.shape_cast %288 : vector<2x32xbf16> to vector<1x2x32xbf16>
    tpu.vector_store %arg5[%289, %c0_126, %c0_127], %292 {strides = array<i32>} : memref<8x2x32xbf16, #tpu.memory_space<vmem>>, vector<1x2x32xbf16>,
    %c7_i32_128 = arith.constant 7 : i32
    %293 = arith.subi %c7_i32_128, %c3_i32 : i32
    %294 = arith.index_cast %293 : i32 to index
    %c0_129 = arith.constant 0 : index
    %c0_130 = arith.constant 0 : index
    %295 = vector.load %arg2[%294, %c0_129, %c0_130] : memref<8x2x128xf32, #tpu.memory_space<vmem>>, vector<1x2x128xf32>
    %296 = vector.shape_cast %295 : vector<1x2x128xf32> to vector<2x128xf32>
    %c0_131 = arith.constant 0 : index
    %c0_132 = arith.constant 0 : index
    %297 = vector.load %arg9[%c0_131, %c0_132] : memref<2x32xf32, #tpu.memory_space<vmem>>, vector<2x32xf32>
    %298 = arith.truncf %297 : vector<2x32xf32> to vector<2x32xbf16>
    %c0_133 = arith.constant 0 : index
    %c0_134 = arith.constant 0 : index
    %299 = vector.load %arg4[%c0_133, %c0_134] : memref<32x128xbf16, #tpu.memory_space<vmem>>, vector<32x128xbf16>
    %cst_135 = arith.constant dense<0.000000e+00> : vector<2x128xf32>
    %300 = tpu.matmul %298, %299, %cst_135 {dimension_numbers = #tpu.dot_dimension_numbers<[1], [0], [0], [1], [0, 0, 1, 1], [], []>} : vector<2x32xbf16>, vector<32x128xbf16>, vector<2x128xf32> -> vector<2x128xf32>
    %301 = arith.addf %296, %300 : vector<2x128xf32>
    %302 = vector.extract_strided_slice %301 {offsets = [0, 0], sizes = [2, 32], strides = [1, 1]} : vector<2x128xf32> to vector<2x32xf32>
    %303 = arith.negf %302 : vector<2x32xf32>
    %304 = math.exp %303 : vector<2x32xf32>
    %cst_136 = arith.constant 1.000000e+00 : f32
    %305 = vector.broadcast %cst_136 : f32 to vector<2x32xf32>
    %306 = arith.addf %305, %304 : vector<2x32xf32>
    %307 = arith.divf %305, %306 : vector<2x32xf32>
    %308 = vector.extract_strided_slice %301 {offsets = [0, 32], sizes = [2, 32], strides = [1, 1]} : vector<2x128xf32> to vector<2x32xf32>
    %309 = arith.negf %308 : vector<2x32xf32>
    %310 = math.exp %309 : vector<2x32xf32>
    %cst_137 = arith.constant 1.000000e+00 : f32
    %311 = vector.broadcast %cst_137 : f32 to vector<2x32xf32>
    %312 = arith.addf %311, %310 : vector<2x32xf32>
    %313 = arith.divf %311, %312 : vector<2x32xf32>
    %314 = vector.extract_strided_slice %301 {offsets = [0, 64], sizes = [2, 32], strides = [1, 1]} : vector<2x128xf32> to vector<2x32xf32>
    %315 = math.tanh %314 : vector<2x32xf32>
    %316 = vector.extract_strided_slice %301 {offsets = [0, 96], sizes = [2, 32], strides = [1, 1]} : vector<2x128xf32> to vector<2x32xf32>
    %317 = arith.negf %316 : vector<2x32xf32>
    %318 = math.exp %317 : vector<2x32xf32>
    %cst_138 = arith.constant 1.000000e+00 : f32
    %319 = vector.broadcast %cst_138 : f32 to vector<2x32xf32>
    %320 = arith.addf %319, %318 : vector<2x32xf32>
    %321 = arith.divf %319, %320 : vector<2x32xf32>
    %c0_139 = arith.constant 0 : index
    %c0_140 = arith.constant 0 : index
    %322 = vector.load %arg10[%c0_139, %c0_140] : memref<2x32xf32, #tpu.memory_space<vmem>>, vector<2x32xf32>
    %323 = arith.mulf %313, %322 : vector<2x32xf32>
    %324 = arith.mulf %307, %315 : vector<2x32xf32>
    %325 = arith.addf %323, %324 : vector<2x32xf32>
    %326 = math.tanh %325 : vector<2x32xf32>
    %327 = arith.mulf %321, %326 : vector<2x32xf32>
    %c0_141 = arith.constant 0 : index
    %c0_142 = arith.constant 0 : index
    %328 = vector.load %arg9[%c0_141, %c0_142] : memref<2x32xf32, #tpu.memory_space<vmem>>, vector<2x32xf32>
    tpu.vector_store %arg9[%c0_141, %c0_142], %327 {strides = array<i32>} : memref<2x32xf32, #tpu.memory_space<vmem>>, vector<2x32xf32>,
    %c0_143 = arith.constant 0 : index
    %c0_144 = arith.constant 0 : index
    %329 = vector.load %arg10[%c0_143, %c0_144] : memref<2x32xf32, #tpu.memory_space<vmem>>, vector<2x32xf32>
    tpu.vector_store %arg10[%c0_143, %c0_144], %325 {strides = array<i32>} : memref<2x32xf32, #tpu.memory_space<vmem>>, vector<2x32xf32>,
    %330 = arith.truncf %327 : vector<2x32xf32> to vector<2x32xbf16>
    %331 = arith.index_cast %293 : i32 to index
    %c0_145 = arith.constant 0 : index
    %c0_146 = arith.constant 0 : index
    %332 = vector.load %arg6[%331, %c0_145, %c0_146] : memref<8x2x32xbf16, #tpu.memory_space<vmem>>, vector<1x2x32xbf16>
    %333 = vector.shape_cast %332 : vector<1x2x32xbf16> to vector<2x32xbf16>
    %334 = vector.shape_cast %330 : vector<2x32xbf16> to vector<1x2x32xbf16>
    tpu.vector_store %arg6[%331, %c0_145, %c0_146], %334 {strides = array<i32>} : memref<8x2x32xbf16, #tpu.memory_space<vmem>>, vector<1x2x32xbf16>,
    %c4_i32 = arith.constant 4 : i32
    %335 = arith.index_cast %c4_i32 : i32 to index
    %c0_147 = arith.constant 0 : index
    %c0_148 = arith.constant 0 : index
    %336 = vector.load %arg1[%335, %c0_147, %c0_148] : memref<8x2x128xf32, #tpu.memory_space<vmem>>, vector<1x2x128xf32>
    %337 = vector.shape_cast %336 : vector<1x2x128xf32> to vector<2x128xf32>
    %c0_149 = arith.constant 0 : index
    %c0_150 = arith.constant 0 : index
    %338 = vector.load %arg7[%c0_149, %c0_150] : memref<2x32xf32, #tpu.memory_space<vmem>>, vector<2x32xf32>
    %339 = arith.truncf %338 : vector<2x32xf32> to vector<2x32xbf16>
    %c0_151 = arith.constant 0 : index
    %c0_152 = arith.constant 0 : index
    %340 = vector.load %arg3[%c0_151, %c0_152] : memref<32x128xbf16, #tpu.memory_space<vmem>>, vector<32x128xbf16>
    %cst_153 = arith.constant dense<0.000000e+00> : vector<2x128xf32>
    %341 = tpu.matmul %339, %340, %cst_153 {dimension_numbers = #tpu.dot_dimension_numbers<[1], [0], [0], [1], [0, 0, 1, 1], [], []>} : vector<2x32xbf16>, vector<32x128xbf16>, vector<2x128xf32> -> vector<2x128xf32>
    %342 = arith.addf %337, %341 : vector<2x128xf32>
    %343 = vector.extract_strided_slice %342 {offsets = [0, 0], sizes = [2, 32], strides = [1, 1]} : vector<2x128xf32> to vector<2x32xf32>
    %344 = arith.negf %343 : vector<2x32xf32>
    %345 = math.exp %344 : vector<2x32xf32>
    %cst_154 = arith.constant 1.000000e+00 : f32
    %346 = vector.broadcast %cst_154 : f32 to vector<2x32xf32>
    %347 = arith.addf %346, %345 : vector<2x32xf32>
    %348 = arith.divf %346, %347 : vector<2x32xf32>
    %349 = vector.extract_strided_slice %342 {offsets = [0, 32], sizes = [2, 32], strides = [1, 1]} : vector<2x128xf32> to vector<2x32xf32>
    %350 = arith.negf %349 : vector<2x32xf32>
    %351 = math.exp %350 : vector<2x32xf32>
    %cst_155 = arith.constant 1.000000e+00 : f32
    %352 = vector.broadcast %cst_155 : f32 to vector<2x32xf32>
    %353 = arith.addf %352, %351 : vector<2x32xf32>
    %354 = arith.divf %352, %353 : vector<2x32xf32>
    %355 = vector.extract_strided_slice %342 {offsets = [0, 64], sizes = [2, 32], strides = [1, 1]} : vector<2x128xf32> to vector<2x32xf32>
    %356 = math.tanh %355 : vector<2x32xf32>
    %357 = vector.extract_strided_slice %342 {offsets = [0, 96], sizes = [2, 32], strides = [1, 1]} : vector<2x128xf32> to vector<2x32xf32>
    %358 = arith.negf %357 : vector<2x32xf32>
    %359 = math.exp %358 : vector<2x32xf32>
    %cst_156 = arith.constant 1.000000e+00 : f32
    %360 = vector.broadcast %cst_156 : f32 to vector<2x32xf32>
    %361 = arith.addf %360, %359 : vector<2x32xf32>
    %362 = arith.divf %360, %361 : vector<2x32xf32>
    %c0_157 = arith.constant 0 : index
    %c0_158 = arith.constant 0 : index
    %363 = vector.load %arg8[%c0_157, %c0_158] : memref<2x32xf32, #tpu.memory_space<vmem>>, vector<2x32xf32>
    %364 = arith.mulf %354, %363 : vector<2x32xf32>
    %365 = arith.mulf %348, %356 : vector<2x32xf32>
    %366 = arith.addf %364, %365 : vector<2x32xf32>
    %367 = math.tanh %366 : vector<2x32xf32>
    %368 = arith.mulf %362, %367 : vector<2x32xf32>
    %c0_159 = arith.constant 0 : index
    %c0_160 = arith.constant 0 : index
    %369 = vector.load %arg7[%c0_159, %c0_160] : memref<2x32xf32, #tpu.memory_space<vmem>>, vector<2x32xf32>
    tpu.vector_store %arg7[%c0_159, %c0_160], %368 {strides = array<i32>} : memref<2x32xf32, #tpu.memory_space<vmem>>, vector<2x32xf32>,
    %c0_161 = arith.constant 0 : index
    %c0_162 = arith.constant 0 : index
    %370 = vector.load %arg8[%c0_161, %c0_162] : memref<2x32xf32, #tpu.memory_space<vmem>>, vector<2x32xf32>
    tpu.vector_store %arg8[%c0_161, %c0_162], %366 {strides = array<i32>} : memref<2x32xf32, #tpu.memory_space<vmem>>, vector<2x32xf32>,
    %371 = arith.truncf %368 : vector<2x32xf32> to vector<2x32xbf16>
    %372 = arith.index_cast %c4_i32 : i32 to index
    %c0_163 = arith.constant 0 : index
    %c0_164 = arith.constant 0 : index
    %373 = vector.load %arg5[%372, %c0_163, %c0_164] : memref<8x2x32xbf16, #tpu.memory_space<vmem>>, vector<1x2x32xbf16>
    %374 = vector.shape_cast %373 : vector<1x2x32xbf16> to vector<2x32xbf16>
    %375 = vector.shape_cast %371 : vector<2x32xbf16> to vector<1x2x32xbf16>
    tpu.vector_store %arg5[%372, %c0_163, %c0_164], %375 {strides = array<i32>} : memref<8x2x32xbf16, #tpu.memory_space<vmem>>, vector<1x2x32xbf16>,
    %c7_i32_165 = arith.constant 7 : i32
    %376 = arith.subi %c7_i32_165, %c4_i32 : i32
    %377 = arith.index_cast %376 : i32 to index
    %c0_166 = arith.constant 0 : index
    %c0_167 = arith.constant 0 : index
    %378 = vector.load %arg2[%377, %c0_166, %c0_167] : memref<8x2x128xf32, #tpu.memory_space<vmem>>, vector<1x2x128xf32>
    %379 = vector.shape_cast %378 : vector<1x2x128xf32> to vector<2x128xf32>
    %c0_168 = arith.constant 0 : index
    %c0_169 = arith.constant 0 : index
    %380 = vector.load %arg9[%c0_168, %c0_169] : memref<2x32xf32, #tpu.memory_space<vmem>>, vector<2x32xf32>
    %381 = arith.truncf %380 : vector<2x32xf32> to vector<2x32xbf16>
    %c0_170 = arith.constant 0 : index
    %c0_171 = arith.constant 0 : index
    %382 = vector.load %arg4[%c0_170, %c0_171] : memref<32x128xbf16, #tpu.memory_space<vmem>>, vector<32x128xbf16>
    %cst_172 = arith.constant dense<0.000000e+00> : vector<2x128xf32>
    %383 = tpu.matmul %381, %382, %cst_172 {dimension_numbers = #tpu.dot_dimension_numbers<[1], [0], [0], [1], [0, 0, 1, 1], [], []>} : vector<2x32xbf16>, vector<32x128xbf16>, vector<2x128xf32> -> vector<2x128xf32>
    %384 = arith.addf %379, %383 : vector<2x128xf32>
    %385 = vector.extract_strided_slice %384 {offsets = [0, 0], sizes = [2, 32], strides = [1, 1]} : vector<2x128xf32> to vector<2x32xf32>
    %386 = arith.negf %385 : vector<2x32xf32>
    %387 = math.exp %386 : vector<2x32xf32>
    %cst_173 = arith.constant 1.000000e+00 : f32
    %388 = vector.broadcast %cst_173 : f32 to vector<2x32xf32>
    %389 = arith.addf %388, %387 : vector<2x32xf32>
    %390 = arith.divf %388, %389 : vector<2x32xf32>
    %391 = vector.extract_strided_slice %384 {offsets = [0, 32], sizes = [2, 32], strides = [1, 1]} : vector<2x128xf32> to vector<2x32xf32>
    %392 = arith.negf %391 : vector<2x32xf32>
    %393 = math.exp %392 : vector<2x32xf32>
    %cst_174 = arith.constant 1.000000e+00 : f32
    %394 = vector.broadcast %cst_174 : f32 to vector<2x32xf32>
    %395 = arith.addf %394, %393 : vector<2x32xf32>
    %396 = arith.divf %394, %395 : vector<2x32xf32>
    %397 = vector.extract_strided_slice %384 {offsets = [0, 64], sizes = [2, 32], strides = [1, 1]} : vector<2x128xf32> to vector<2x32xf32>
    %398 = math.tanh %397 : vector<2x32xf32>
    %399 = vector.extract_strided_slice %384 {offsets = [0, 96], sizes = [2, 32], strides = [1, 1]} : vector<2x128xf32> to vector<2x32xf32>
    %400 = arith.negf %399 : vector<2x32xf32>
    %401 = math.exp %400 : vector<2x32xf32>
    %cst_175 = arith.constant 1.000000e+00 : f32
    %402 = vector.broadcast %cst_175 : f32 to vector<2x32xf32>
    %403 = arith.addf %402, %401 : vector<2x32xf32>
    %404 = arith.divf %402, %403 : vector<2x32xf32>
    %c0_176 = arith.constant 0 : index
    %c0_177 = arith.constant 0 : index
    %405 = vector.load %arg10[%c0_176, %c0_177] : memref<2x32xf32, #tpu.memory_space<vmem>>, vector<2x32xf32>
    %406 = arith.mulf %396, %405 : vector<2x32xf32>
    %407 = arith.mulf %390, %398 : vector<2x32xf32>
    %408 = arith.addf %406, %407 : vector<2x32xf32>
    %409 = math.tanh %408 : vector<2x32xf32>
    %410 = arith.mulf %404, %409 : vector<2x32xf32>
    %c0_178 = arith.constant 0 : index
    %c0_179 = arith.constant 0 : index
    %411 = vector.load %arg9[%c0_178, %c0_179] : memref<2x32xf32, #tpu.memory_space<vmem>>, vector<2x32xf32>
    tpu.vector_store %arg9[%c0_178, %c0_179], %410 {strides = array<i32>} : memref<2x32xf32, #tpu.memory_space<vmem>>, vector<2x32xf32>,
    %c0_180 = arith.constant 0 : index
    %c0_181 = arith.constant 0 : index
    %412 = vector.load %arg10[%c0_180, %c0_181] : memref<2x32xf32, #tpu.memory_space<vmem>>, vector<2x32xf32>
    tpu.vector_store %arg10[%c0_180, %c0_181], %408 {strides = array<i32>} : memref<2x32xf32, #tpu.memory_space<vmem>>, vector<2x32xf32>,
    %413 = arith.truncf %410 : vector<2x32xf32> to vector<2x32xbf16>
    %414 = arith.index_cast %376 : i32 to index
    %c0_182 = arith.constant 0 : index
    %c0_183 = arith.constant 0 : index
    %415 = vector.load %arg6[%414, %c0_182, %c0_183] : memref<8x2x32xbf16, #tpu.memory_space<vmem>>, vector<1x2x32xbf16>
    %416 = vector.shape_cast %415 : vector<1x2x32xbf16> to vector<2x32xbf16>
    %417 = vector.shape_cast %413 : vector<2x32xbf16> to vector<1x2x32xbf16>
    tpu.vector_store %arg6[%414, %c0_182, %c0_183], %417 {strides = array<i32>} : memref<8x2x32xbf16, #tpu.memory_space<vmem>>, vector<1x2x32xbf16>,
    %c5_i32 = arith.constant 5 : i32
    %418 = arith.index_cast %c5_i32 : i32 to index
    %c0_184 = arith.constant 0 : index
    %c0_185 = arith.constant 0 : index
    %419 = vector.load %arg1[%418, %c0_184, %c0_185] : memref<8x2x128xf32, #tpu.memory_space<vmem>>, vector<1x2x128xf32>
    %420 = vector.shape_cast %419 : vector<1x2x128xf32> to vector<2x128xf32>
    %c0_186 = arith.constant 0 : index
    %c0_187 = arith.constant 0 : index
    %421 = vector.load %arg7[%c0_186, %c0_187] : memref<2x32xf32, #tpu.memory_space<vmem>>, vector<2x32xf32>
    %422 = arith.truncf %421 : vector<2x32xf32> to vector<2x32xbf16>
    %c0_188 = arith.constant 0 : index
    %c0_189 = arith.constant 0 : index
    %423 = vector.load %arg3[%c0_188, %c0_189] : memref<32x128xbf16, #tpu.memory_space<vmem>>, vector<32x128xbf16>
    %cst_190 = arith.constant dense<0.000000e+00> : vector<2x128xf32>
    %424 = tpu.matmul %422, %423, %cst_190 {dimension_numbers = #tpu.dot_dimension_numbers<[1], [0], [0], [1], [0, 0, 1, 1], [], []>} : vector<2x32xbf16>, vector<32x128xbf16>, vector<2x128xf32> -> vector<2x128xf32>
    %425 = arith.addf %420, %424 : vector<2x128xf32>
    %426 = vector.extract_strided_slice %425 {offsets = [0, 0], sizes = [2, 32], strides = [1, 1]} : vector<2x128xf32> to vector<2x32xf32>
    %427 = arith.negf %426 : vector<2x32xf32>
    %428 = math.exp %427 : vector<2x32xf32>
    %cst_191 = arith.constant 1.000000e+00 : f32
    %429 = vector.broadcast %cst_191 : f32 to vector<2x32xf32>
    %430 = arith.addf %429, %428 : vector<2x32xf32>
    %431 = arith.divf %429, %430 : vector<2x32xf32>
    %432 = vector.extract_strided_slice %425 {offsets = [0, 32], sizes = [2, 32], strides = [1, 1]} : vector<2x128xf32> to vector<2x32xf32>
    %433 = arith.negf %432 : vector<2x32xf32>
    %434 = math.exp %433 : vector<2x32xf32>
    %cst_192 = arith.constant 1.000000e+00 : f32
    %435 = vector.broadcast %cst_192 : f32 to vector<2x32xf32>
    %436 = arith.addf %435, %434 : vector<2x32xf32>
    %437 = arith.divf %435, %436 : vector<2x32xf32>
    %438 = vector.extract_strided_slice %425 {offsets = [0, 64], sizes = [2, 32], strides = [1, 1]} : vector<2x128xf32> to vector<2x32xf32>
    %439 = math.tanh %438 : vector<2x32xf32>
    %440 = vector.extract_strided_slice %425 {offsets = [0, 96], sizes = [2, 32], strides = [1, 1]} : vector<2x128xf32> to vector<2x32xf32>
    %441 = arith.negf %440 : vector<2x32xf32>
    %442 = math.exp %441 : vector<2x32xf32>
    %cst_193 = arith.constant 1.000000e+00 : f32
    %443 = vector.broadcast %cst_193 : f32 to vector<2x32xf32>
    %444 = arith.addf %443, %442 : vector<2x32xf32>
    %445 = arith.divf %443, %444 : vector<2x32xf32>
    %c0_194 = arith.constant 0 : index
    %c0_195 = arith.constant 0 : index
    %446 = vector.load %arg8[%c0_194, %c0_195] : memref<2x32xf32, #tpu.memory_space<vmem>>, vector<2x32xf32>
    %447 = arith.mulf %437, %446 : vector<2x32xf32>
    %448 = arith.mulf %431, %439 : vector<2x32xf32>
    %449 = arith.addf %447, %448 : vector<2x32xf32>
    %450 = math.tanh %449 : vector<2x32xf32>
    %451 = arith.mulf %445, %450 : vector<2x32xf32>
    %c0_196 = arith.constant 0 : index
    %c0_197 = arith.constant 0 : index
    %452 = vector.load %arg7[%c0_196, %c0_197] : memref<2x32xf32, #tpu.memory_space<vmem>>, vector<2x32xf32>
    tpu.vector_store %arg7[%c0_196, %c0_197], %451 {strides = array<i32>} : memref<2x32xf32, #tpu.memory_space<vmem>>, vector<2x32xf32>,
    %c0_198 = arith.constant 0 : index
    %c0_199 = arith.constant 0 : index
    %453 = vector.load %arg8[%c0_198, %c0_199] : memref<2x32xf32, #tpu.memory_space<vmem>>, vector<2x32xf32>
    tpu.vector_store %arg8[%c0_198, %c0_199], %449 {strides = array<i32>} : memref<2x32xf32, #tpu.memory_space<vmem>>, vector<2x32xf32>,
    %454 = arith.truncf %451 : vector<2x32xf32> to vector<2x32xbf16>
    %455 = arith.index_cast %c5_i32 : i32 to index
    %c0_200 = arith.constant 0 : index
    %c0_201 = arith.constant 0 : index
    %456 = vector.load %arg5[%455, %c0_200, %c0_201] : memref<8x2x32xbf16, #tpu.memory_space<vmem>>, vector<1x2x32xbf16>
    %457 = vector.shape_cast %456 : vector<1x2x32xbf16> to vector<2x32xbf16>
    %458 = vector.shape_cast %454 : vector<2x32xbf16> to vector<1x2x32xbf16>
    tpu.vector_store %arg5[%455, %c0_200, %c0_201], %458 {strides = array<i32>} : memref<8x2x32xbf16, #tpu.memory_space<vmem>>, vector<1x2x32xbf16>,
    %c7_i32_202 = arith.constant 7 : i32
    %459 = arith.subi %c7_i32_202, %c5_i32 : i32
    %460 = arith.index_cast %459 : i32 to index
    %c0_203 = arith.constant 0 : index
    %c0_204 = arith.constant 0 : index
    %461 = vector.load %arg2[%460, %c0_203, %c0_204] : memref<8x2x128xf32, #tpu.memory_space<vmem>>, vector<1x2x128xf32>
    %462 = vector.shape_cast %461 : vector<1x2x128xf32> to vector<2x128xf32>
    %c0_205 = arith.constant 0 : index
    %c0_206 = arith.constant 0 : index
    %463 = vector.load %arg9[%c0_205, %c0_206] : memref<2x32xf32, #tpu.memory_space<vmem>>, vector<2x32xf32>
    %464 = arith.truncf %463 : vector<2x32xf32> to vector<2x32xbf16>
    %c0_207 = arith.constant 0 : index
    %c0_208 = arith.constant 0 : index
    %465 = vector.load %arg4[%c0_207, %c0_208] : memref<32x128xbf16, #tpu.memory_space<vmem>>, vector<32x128xbf16>
    %cst_209 = arith.constant dense<0.000000e+00> : vector<2x128xf32>
    %466 = tpu.matmul %464, %465, %cst_209 {dimension_numbers = #tpu.dot_dimension_numbers<[1], [0], [0], [1], [0, 0, 1, 1], [], []>} : vector<2x32xbf16>, vector<32x128xbf16>, vector<2x128xf32> -> vector<2x128xf32>
    %467 = arith.addf %462, %466 : vector<2x128xf32>
    %468 = vector.extract_strided_slice %467 {offsets = [0, 0], sizes = [2, 32], strides = [1, 1]} : vector<2x128xf32> to vector<2x32xf32>
    %469 = arith.negf %468 : vector<2x32xf32>
    %470 = math.exp %469 : vector<2x32xf32>
    %cst_210 = arith.constant 1.000000e+00 : f32
    %471 = vector.broadcast %cst_210 : f32 to vector<2x32xf32>
    %472 = arith.addf %471, %470 : vector<2x32xf32>
    %473 = arith.divf %471, %472 : vector<2x32xf32>
    %474 = vector.extract_strided_slice %467 {offsets = [0, 32], sizes = [2, 32], strides = [1, 1]} : vector<2x128xf32> to vector<2x32xf32>
    %475 = arith.negf %474 : vector<2x32xf32>
    %476 = math.exp %475 : vector<2x32xf32>
    %cst_211 = arith.constant 1.000000e+00 : f32
    %477 = vector.broadcast %cst_211 : f32 to vector<2x32xf32>
    %478 = arith.addf %477, %476 : vector<2x32xf32>
    %479 = arith.divf %477, %478 : vector<2x32xf32>
    %480 = vector.extract_strided_slice %467 {offsets = [0, 64], sizes = [2, 32], strides = [1, 1]} : vector<2x128xf32> to vector<2x32xf32>
    %481 = math.tanh %480 : vector<2x32xf32>
    %482 = vector.extract_strided_slice %467 {offsets = [0, 96], sizes = [2, 32], strides = [1, 1]} : vector<2x128xf32> to vector<2x32xf32>
    %483 = arith.negf %482 : vector<2x32xf32>
    %484 = math.exp %483 : vector<2x32xf32>
    %cst_212 = arith.constant 1.000000e+00 : f32
    %485 = vector.broadcast %cst_212 : f32 to vector<2x32xf32>
    %486 = arith.addf %485, %484 : vector<2x32xf32>
    %487 = arith.divf %485, %486 : vector<2x32xf32>
    %c0_213 = arith.constant 0 : index
    %c0_214 = arith.constant 0 : index
    %488 = vector.load %arg10[%c0_213, %c0_214] : memref<2x32xf32, #tpu.memory_space<vmem>>, vector<2x32xf32>
    %489 = arith.mulf %479, %488 : vector<2x32xf32>
    %490 = arith.mulf %473, %481 : vector<2x32xf32>
    %491 = arith.addf %489, %490 : vector<2x32xf32>
    %492 = math.tanh %491 : vector<2x32xf32>
    %493 = arith.mulf %487, %492 : vector<2x32xf32>
    %c0_215 = arith.constant 0 : index
    %c0_216 = arith.constant 0 : index
    %494 = vector.load %arg9[%c0_215, %c0_216] : memref<2x32xf32, #tpu.memory_space<vmem>>, vector<2x32xf32>
    tpu.vector_store %arg9[%c0_215, %c0_216], %493 {strides = array<i32>} : memref<2x32xf32, #tpu.memory_space<vmem>>, vector<2x32xf32>,
    %c0_217 = arith.constant 0 : index
    %c0_218 = arith.constant 0 : index
    %495 = vector.load %arg10[%c0_217, %c0_218] : memref<2x32xf32, #tpu.memory_space<vmem>>, vector<2x32xf32>
    tpu.vector_store %arg10[%c0_217, %c0_218], %491 {strides = array<i32>} : memref<2x32xf32, #tpu.memory_space<vmem>>, vector<2x32xf32>,
    %496 = arith.truncf %493 : vector<2x32xf32> to vector<2x32xbf16>
    %497 = arith.index_cast %459 : i32 to index
    %c0_219 = arith.constant 0 : index
    %c0_220 = arith.constant 0 : index
    %498 = vector.load %arg6[%497, %c0_219, %c0_220] : memref<8x2x32xbf16, #tpu.memory_space<vmem>>, vector<1x2x32xbf16>
    %499 = vector.shape_cast %498 : vector<1x2x32xbf16> to vector<2x32xbf16>
    %500 = vector.shape_cast %496 : vector<2x32xbf16> to vector<1x2x32xbf16>
    tpu.vector_store %arg6[%497, %c0_219, %c0_220], %500 {strides = array<i32>} : memref<8x2x32xbf16, #tpu.memory_space<vmem>>, vector<1x2x32xbf16>,
    %c6_i32 = arith.constant 6 : i32
    %501 = arith.index_cast %c6_i32 : i32 to index
    %c0_221 = arith.constant 0 : index
    %c0_222 = arith.constant 0 : index
    %502 = vector.load %arg1[%501, %c0_221, %c0_222] : memref<8x2x128xf32, #tpu.memory_space<vmem>>, vector<1x2x128xf32>
    %503 = vector.shape_cast %502 : vector<1x2x128xf32> to vector<2x128xf32>
    %c0_223 = arith.constant 0 : index
    %c0_224 = arith.constant 0 : index
    %504 = vector.load %arg7[%c0_223, %c0_224] : memref<2x32xf32, #tpu.memory_space<vmem>>, vector<2x32xf32>
    %505 = arith.truncf %504 : vector<2x32xf32> to vector<2x32xbf16>
    %c0_225 = arith.constant 0 : index
    %c0_226 = arith.constant 0 : index
    %506 = vector.load %arg3[%c0_225, %c0_226] : memref<32x128xbf16, #tpu.memory_space<vmem>>, vector<32x128xbf16>
    %cst_227 = arith.constant dense<0.000000e+00> : vector<2x128xf32>
    %507 = tpu.matmul %505, %506, %cst_227 {dimension_numbers = #tpu.dot_dimension_numbers<[1], [0], [0], [1], [0, 0, 1, 1], [], []>} : vector<2x32xbf16>, vector<32x128xbf16>, vector<2x128xf32> -> vector<2x128xf32>
    %508 = arith.addf %503, %507 : vector<2x128xf32>
    %509 = vector.extract_strided_slice %508 {offsets = [0, 0], sizes = [2, 32], strides = [1, 1]} : vector<2x128xf32> to vector<2x32xf32>
    %510 = arith.negf %509 : vector<2x32xf32>
    %511 = math.exp %510 : vector<2x32xf32>
    %cst_228 = arith.constant 1.000000e+00 : f32
    %512 = vector.broadcast %cst_228 : f32 to vector<2x32xf32>
    %513 = arith.addf %512, %511 : vector<2x32xf32>
    %514 = arith.divf %512, %513 : vector<2x32xf32>
    %515 = vector.extract_strided_slice %508 {offsets = [0, 32], sizes = [2, 32], strides = [1, 1]} : vector<2x128xf32> to vector<2x32xf32>
    %516 = arith.negf %515 : vector<2x32xf32>
    %517 = math.exp %516 : vector<2x32xf32>
    %cst_229 = arith.constant 1.000000e+00 : f32
    %518 = vector.broadcast %cst_229 : f32 to vector<2x32xf32>
    %519 = arith.addf %518, %517 : vector<2x32xf32>
    %520 = arith.divf %518, %519 : vector<2x32xf32>
    %521 = vector.extract_strided_slice %508 {offsets = [0, 64], sizes = [2, 32], strides = [1, 1]} : vector<2x128xf32> to vector<2x32xf32>
    %522 = math.tanh %521 : vector<2x32xf32>
    %523 = vector.extract_strided_slice %508 {offsets = [0, 96], sizes = [2, 32], strides = [1, 1]} : vector<2x128xf32> to vector<2x32xf32>
    %524 = arith.negf %523 : vector<2x32xf32>
    %525 = math.exp %524 : vector<2x32xf32>
    %cst_230 = arith.constant 1.000000e+00 : f32
    %526 = vector.broadcast %cst_230 : f32 to vector<2x32xf32>
    %527 = arith.addf %526, %525 : vector<2x32xf32>
    %528 = arith.divf %526, %527 : vector<2x32xf32>
    %c0_231 = arith.constant 0 : index
    %c0_232 = arith.constant 0 : index
    %529 = vector.load %arg8[%c0_231, %c0_232] : memref<2x32xf32, #tpu.memory_space<vmem>>, vector<2x32xf32>
    %530 = arith.mulf %520, %529 : vector<2x32xf32>
    %531 = arith.mulf %514, %522 : vector<2x32xf32>
    %532 = arith.addf %530, %531 : vector<2x32xf32>
    %533 = math.tanh %532 : vector<2x32xf32>
    %534 = arith.mulf %528, %533 : vector<2x32xf32>
    %c0_233 = arith.constant 0 : index
    %c0_234 = arith.constant 0 : index
    %535 = vector.load %arg7[%c0_233, %c0_234] : memref<2x32xf32, #tpu.memory_space<vmem>>, vector<2x32xf32>
    tpu.vector_store %arg7[%c0_233, %c0_234], %534 {strides = array<i32>} : memref<2x32xf32, #tpu.memory_space<vmem>>, vector<2x32xf32>,
    %c0_235 = arith.constant 0 : index
    %c0_236 = arith.constant 0 : index
    %536 = vector.load %arg8[%c0_235, %c0_236] : memref<2x32xf32, #tpu.memory_space<vmem>>, vector<2x32xf32>
    tpu.vector_store %arg8[%c0_235, %c0_236], %532 {strides = array<i32>} : memref<2x32xf32, #tpu.memory_space<vmem>>, vector<2x32xf32>,
    %537 = arith.truncf %534 : vector<2x32xf32> to vector<2x32xbf16>
    %538 = arith.index_cast %c6_i32 : i32 to index
    %c0_237 = arith.constant 0 : index
    %c0_238 = arith.constant 0 : index
    %539 = vector.load %arg5[%538, %c0_237, %c0_238] : memref<8x2x32xbf16, #tpu.memory_space<vmem>>, vector<1x2x32xbf16>
    %540 = vector.shape_cast %539 : vector<1x2x32xbf16> to vector<2x32xbf16>
    %541 = vector.shape_cast %537 : vector<2x32xbf16> to vector<1x2x32xbf16>
    tpu.vector_store %arg5[%538, %c0_237, %c0_238], %541 {strides = array<i32>} : memref<8x2x32xbf16, #tpu.memory_space<vmem>>, vector<1x2x32xbf16>,
    %c7_i32_239 = arith.constant 7 : i32
    %542 = arith.subi %c7_i32_239, %c6_i32 : i32
    %543 = arith.index_cast %542 : i32 to index
    %c0_240 = arith.constant 0 : index
    %c0_241 = arith.constant 0 : index
    %544 = vector.load %arg2[%543, %c0_240, %c0_241] : memref<8x2x128xf32, #tpu.memory_space<vmem>>, vector<1x2x128xf32>
    %545 = vector.shape_cast %544 : vector<1x2x128xf32> to vector<2x128xf32>
    %c0_242 = arith.constant 0 : index
    %c0_243 = arith.constant 0 : index
    %546 = vector.load %arg9[%c0_242, %c0_243] : memref<2x32xf32, #tpu.memory_space<vmem>>, vector<2x32xf32>
    %547 = arith.truncf %546 : vector<2x32xf32> to vector<2x32xbf16>
    %c0_244 = arith.constant 0 : index
    %c0_245 = arith.constant 0 : index
    %548 = vector.load %arg4[%c0_244, %c0_245] : memref<32x128xbf16, #tpu.memory_space<vmem>>, vector<32x128xbf16>
    %cst_246 = arith.constant dense<0.000000e+00> : vector<2x128xf32>
    %549 = tpu.matmul %547, %548, %cst_246 {dimension_numbers = #tpu.dot_dimension_numbers<[1], [0], [0], [1], [0, 0, 1, 1], [], []>} : vector<2x32xbf16>, vector<32x128xbf16>, vector<2x128xf32> -> vector<2x128xf32>
    %550 = arith.addf %545, %549 : vector<2x128xf32>
    %551 = vector.extract_strided_slice %550 {offsets = [0, 0], sizes = [2, 32], strides = [1, 1]} : vector<2x128xf32> to vector<2x32xf32>
    %552 = arith.negf %551 : vector<2x32xf32>
    %553 = math.exp %552 : vector<2x32xf32>
    %cst_247 = arith.constant 1.000000e+00 : f32
    %554 = vector.broadcast %cst_247 : f32 to vector<2x32xf32>
    %555 = arith.addf %554, %553 : vector<2x32xf32>
    %556 = arith.divf %554, %555 : vector<2x32xf32>
    %557 = vector.extract_strided_slice %550 {offsets = [0, 32], sizes = [2, 32], strides = [1, 1]} : vector<2x128xf32> to vector<2x32xf32>
    %558 = arith.negf %557 : vector<2x32xf32>
    %559 = math.exp %558 : vector<2x32xf32>
    %cst_248 = arith.constant 1.000000e+00 : f32
    %560 = vector.broadcast %cst_248 : f32 to vector<2x32xf32>
    %561 = arith.addf %560, %559 : vector<2x32xf32>
    %562 = arith.divf %560, %561 : vector<2x32xf32>
    %563 = vector.extract_strided_slice %550 {offsets = [0, 64], sizes = [2, 32], strides = [1, 1]} : vector<2x128xf32> to vector<2x32xf32>
    %564 = math.tanh %563 : vector<2x32xf32>
    %565 = vector.extract_strided_slice %550 {offsets = [0, 96], sizes = [2, 32], strides = [1, 1]} : vector<2x128xf32> to vector<2x32xf32>
    %566 = arith.negf %565 : vector<2x32xf32>
    %567 = math.exp %566 : vector<2x32xf32>
    %cst_249 = arith.constant 1.000000e+00 : f32
    %568 = vector.broadcast %cst_249 : f32 to vector<2x32xf32>
    %569 = arith.addf %568, %567 : vector<2x32xf32>
    %570 = arith.divf %568, %569 : vector<2x32xf32>
    %c0_250 = arith.constant 0 : index
    %c0_251 = arith.constant 0 : index
    %571 = vector.load %arg10[%c0_250, %c0_251] : memref<2x32xf32, #tpu.memory_space<vmem>>, vector<2x32xf32>
    %572 = arith.mulf %562, %571 : vector<2x32xf32>
    %573 = arith.mulf %556, %564 : vector<2x32xf32>
    %574 = arith.addf %572, %573 : vector<2x32xf32>
    %575 = math.tanh %574 : vector<2x32xf32>
    %576 = arith.mulf %570, %575 : vector<2x32xf32>
    %c0_252 = arith.constant 0 : index
    %c0_253 = arith.constant 0 : index
    %577 = vector.load %arg9[%c0_252, %c0_253] : memref<2x32xf32, #tpu.memory_space<vmem>>, vector<2x32xf32>
    tpu.vector_store %arg9[%c0_252, %c0_253], %576 {strides = array<i32>} : memref<2x32xf32, #tpu.memory_space<vmem>>, vector<2x32xf32>,
    %c0_254 = arith.constant 0 : index
    %c0_255 = arith.constant 0 : index
    %578 = vector.load %arg10[%c0_254, %c0_255] : memref<2x32xf32, #tpu.memory_space<vmem>>, vector<2x32xf32>
    tpu.vector_store %arg10[%c0_254, %c0_255], %574 {strides = array<i32>} : memref<2x32xf32, #tpu.memory_space<vmem>>, vector<2x32xf32>,
    %579 = arith.truncf %576 : vector<2x32xf32> to vector<2x32xbf16>
    %580 = arith.index_cast %542 : i32 to index
    %c0_256 = arith.constant 0 : index
    %c0_257 = arith.constant 0 : index
    %581 = vector.load %arg6[%580, %c0_256, %c0_257] : memref<8x2x32xbf16, #tpu.memory_space<vmem>>, vector<1x2x32xbf16>
    %582 = vector.shape_cast %581 : vector<1x2x32xbf16> to vector<2x32xbf16>
    %583 = vector.shape_cast %579 : vector<2x32xbf16> to vector<1x2x32xbf16>
    tpu.vector_store %arg6[%580, %c0_256, %c0_257], %583 {strides = array<i32>} : memref<8x2x32xbf16, #tpu.memory_space<vmem>>, vector<1x2x32xbf16>,
    %c7_i32_258 = arith.constant 7 : i32
    %584 = arith.index_cast %c7_i32_258 : i32 to index
    %c0_259 = arith.constant 0 : index
    %c0_260 = arith.constant 0 : index
    %585 = vector.load %arg1[%584, %c0_259, %c0_260] : memref<8x2x128xf32, #tpu.memory_space<vmem>>, vector<1x2x128xf32>
    %586 = vector.shape_cast %585 : vector<1x2x128xf32> to vector<2x128xf32>
    %c0_261 = arith.constant 0 : index
    %c0_262 = arith.constant 0 : index
    %587 = vector.load %arg7[%c0_261, %c0_262] : memref<2x32xf32, #tpu.memory_space<vmem>>, vector<2x32xf32>
    %588 = arith.truncf %587 : vector<2x32xf32> to vector<2x32xbf16>
    %c0_263 = arith.constant 0 : index
    %c0_264 = arith.constant 0 : index
    %589 = vector.load %arg3[%c0_263, %c0_264] : memref<32x128xbf16, #tpu.memory_space<vmem>>, vector<32x128xbf16>
    %cst_265 = arith.constant dense<0.000000e+00> : vector<2x128xf32>
    %590 = tpu.matmul %588, %589, %cst_265 {dimension_numbers = #tpu.dot_dimension_numbers<[1], [0], [0], [1], [0, 0, 1, 1], [], []>} : vector<2x32xbf16>, vector<32x128xbf16>, vector<2x128xf32> -> vector<2x128xf32>
    %591 = arith.addf %586, %590 : vector<2x128xf32>
    %592 = vector.extract_strided_slice %591 {offsets = [0, 0], sizes = [2, 32], strides = [1, 1]} : vector<2x128xf32> to vector<2x32xf32>
    %593 = arith.negf %592 : vector<2x32xf32>
    %594 = math.exp %593 : vector<2x32xf32>
    %cst_266 = arith.constant 1.000000e+00 : f32
    %595 = vector.broadcast %cst_266 : f32 to vector<2x32xf32>
    %596 = arith.addf %595, %594 : vector<2x32xf32>
    %597 = arith.divf %595, %596 : vector<2x32xf32>
    %598 = vector.extract_strided_slice %591 {offsets = [0, 32], sizes = [2, 32], strides = [1, 1]} : vector<2x128xf32> to vector<2x32xf32>
    %599 = arith.negf %598 : vector<2x32xf32>
    %600 = math.exp %599 : vector<2x32xf32>
    %cst_267 = arith.constant 1.000000e+00 : f32
    %601 = vector.broadcast %cst_267 : f32 to vector<2x32xf32>
    %602 = arith.addf %601, %600 : vector<2x32xf32>
    %603 = arith.divf %601, %602 : vector<2x32xf32>
    %604 = vector.extract_strided_slice %591 {offsets = [0, 64], sizes = [2, 32], strides = [1, 1]} : vector<2x128xf32> to vector<2x32xf32>
    %605 = math.tanh %604 : vector<2x32xf32>
    %606 = vector.extract_strided_slice %591 {offsets = [0, 96], sizes = [2, 32], strides = [1, 1]} : vector<2x128xf32> to vector<2x32xf32>
    %607 = arith.negf %606 : vector<2x32xf32>
    %608 = math.exp %607 : vector<2x32xf32>
    %cst_268 = arith.constant 1.000000e+00 : f32
    %609 = vector.broadcast %cst_268 : f32 to vector<2x32xf32>
    %610 = arith.addf %609, %608 : vector<2x32xf32>
    %611 = arith.divf %609, %610 : vector<2x32xf32>
    %c0_269 = arith.constant 0 : index
    %c0_270 = arith.constant 0 : index
    %612 = vector.load %arg8[%c0_269, %c0_270] : memref<2x32xf32, #tpu.memory_space<vmem>>, vector<2x32xf32>
    %613 = arith.mulf %603, %612 : vector<2x32xf32>
    %614 = arith.mulf %597, %605 : vector<2x32xf32>
    %615 = arith.addf %613, %614 : vector<2x32xf32>
    %616 = math.tanh %615 : vector<2x32xf32>
    %617 = arith.mulf %611, %616 : vector<2x32xf32>
    %c0_271 = arith.constant 0 : index
    %c0_272 = arith.constant 0 : index
    %618 = vector.load %arg7[%c0_271, %c0_272] : memref<2x32xf32, #tpu.memory_space<vmem>>, vector<2x32xf32>
    tpu.vector_store %arg7[%c0_271, %c0_272], %617 {strides = array<i32>} : memref<2x32xf32, #tpu.memory_space<vmem>>, vector<2x32xf32>,
    %c0_273 = arith.constant 0 : index
    %c0_274 = arith.constant 0 : index
    %619 = vector.load %arg8[%c0_273, %c0_274] : memref<2x32xf32, #tpu.memory_space<vmem>>, vector<2x32xf32>
    tpu.vector_store %arg8[%c0_273, %c0_274], %615 {strides = array<i32>} : memref<2x32xf32, #tpu.memory_space<vmem>>, vector<2x32xf32>,
    %620 = arith.truncf %617 : vector<2x32xf32> to vector<2x32xbf16>
    %621 = arith.index_cast %c7_i32_258 : i32 to index
    %c0_275 = arith.constant 0 : index
    %c0_276 = arith.constant 0 : index
    %622 = vector.load %arg5[%621, %c0_275, %c0_276] : memref<8x2x32xbf16, #tpu.memory_space<vmem>>, vector<1x2x32xbf16>
    %623 = vector.shape_cast %622 : vector<1x2x32xbf16> to vector<2x32xbf16>
    %624 = vector.shape_cast %620 : vector<2x32xbf16> to vector<1x2x32xbf16>
    tpu.vector_store %arg5[%621, %c0_275, %c0_276], %624 {strides = array<i32>} : memref<8x2x32xbf16, #tpu.memory_space<vmem>>, vector<1x2x32xbf16>,
    %c7_i32_277 = arith.constant 7 : i32
    %625 = arith.subi %c7_i32_277, %c7_i32_258 : i32
    %626 = arith.index_cast %625 : i32 to index
    %c0_278 = arith.constant 0 : index
    %c0_279 = arith.constant 0 : index
    %627 = vector.load %arg2[%626, %c0_278, %c0_279] : memref<8x2x128xf32, #tpu.memory_space<vmem>>, vector<1x2x128xf32>
    %628 = vector.shape_cast %627 : vector<1x2x128xf32> to vector<2x128xf32>
    %c0_280 = arith.constant 0 : index
    %c0_281 = arith.constant 0 : index
    %629 = vector.load %arg9[%c0_280, %c0_281] : memref<2x32xf32, #tpu.memory_space<vmem>>, vector<2x32xf32>
    %630 = arith.truncf %629 : vector<2x32xf32> to vector<2x32xbf16>
    %c0_282 = arith.constant 0 : index
    %c0_283 = arith.constant 0 : index
    %631 = vector.load %arg4[%c0_282, %c0_283] : memref<32x128xbf16, #tpu.memory_space<vmem>>, vector<32x128xbf16>
    %cst_284 = arith.constant dense<0.000000e+00> : vector<2x128xf32>
    %632 = tpu.matmul %630, %631, %cst_284 {dimension_numbers = #tpu.dot_dimension_numbers<[1], [0], [0], [1], [0, 0, 1, 1], [], []>} : vector<2x32xbf16>, vector<32x128xbf16>, vector<2x128xf32> -> vector<2x128xf32>
    %633 = arith.addf %628, %632 : vector<2x128xf32>
    %634 = vector.extract_strided_slice %633 {offsets = [0, 0], sizes = [2, 32], strides = [1, 1]} : vector<2x128xf32> to vector<2x32xf32>
    %635 = arith.negf %634 : vector<2x32xf32>
    %636 = math.exp %635 : vector<2x32xf32>
    %cst_285 = arith.constant 1.000000e+00 : f32
    %637 = vector.broadcast %cst_285 : f32 to vector<2x32xf32>
    %638 = arith.addf %637, %636 : vector<2x32xf32>
    %639 = arith.divf %637, %638 : vector<2x32xf32>
    %640 = vector.extract_strided_slice %633 {offsets = [0, 32], sizes = [2, 32], strides = [1, 1]} : vector<2x128xf32> to vector<2x32xf32>
    %641 = arith.negf %640 : vector<2x32xf32>
    %642 = math.exp %641 : vector<2x32xf32>
    %cst_286 = arith.constant 1.000000e+00 : f32
    %643 = vector.broadcast %cst_286 : f32 to vector<2x32xf32>
    %644 = arith.addf %643, %642 : vector<2x32xf32>
    %645 = arith.divf %643, %644 : vector<2x32xf32>
    %646 = vector.extract_strided_slice %633 {offsets = [0, 64], sizes = [2, 32], strides = [1, 1]} : vector<2x128xf32> to vector<2x32xf32>
    %647 = math.tanh %646 : vector<2x32xf32>
    %648 = vector.extract_strided_slice %633 {offsets = [0, 96], sizes = [2, 32], strides = [1, 1]} : vector<2x128xf32> to vector<2x32xf32>
    %649 = arith.negf %648 : vector<2x32xf32>
    %650 = math.exp %649 : vector<2x32xf32>
    %cst_287 = arith.constant 1.000000e+00 : f32
    %651 = vector.broadcast %cst_287 : f32 to vector<2x32xf32>
    %652 = arith.addf %651, %650 : vector<2x32xf32>
    %653 = arith.divf %651, %652 : vector<2x32xf32>
    %c0_288 = arith.constant 0 : index
    %c0_289 = arith.constant 0 : index
    %654 = vector.load %arg10[%c0_288, %c0_289] : memref<2x32xf32, #tpu.memory_space<vmem>>, vector<2x32xf32>
    %655 = arith.mulf %645, %654 : vector<2x32xf32>
    %656 = arith.mulf %639, %647 : vector<2x32xf32>
    %657 = arith.addf %655, %656 : vector<2x32xf32>
    %658 = math.tanh %657 : vector<2x32xf32>
    %659 = arith.mulf %653, %658 : vector<2x32xf32>
    %c0_290 = arith.constant 0 : index
    %c0_291 = arith.constant 0 : index
    %660 = vector.load %arg9[%c0_290, %c0_291] : memref<2x32xf32, #tpu.memory_space<vmem>>, vector<2x32xf32>
    tpu.vector_store %arg9[%c0_290, %c0_291], %659 {strides = array<i32>} : memref<2x32xf32, #tpu.memory_space<vmem>>, vector<2x32xf32>,
    %c0_292 = arith.constant 0 : index
    %c0_293 = arith.constant 0 : index
    %661 = vector.load %arg10[%c0_292, %c0_293] : memref<2x32xf32, #tpu.memory_space<vmem>>, vector<2x32xf32>
    tpu.vector_store %arg10[%c0_292, %c0_293], %657 {strides = array<i32>} : memref<2x32xf32, #tpu.memory_space<vmem>>, vector<2x32xf32>,
    %662 = arith.truncf %659 : vector<2x32xf32> to vector<2x32xbf16>
    %663 = arith.index_cast %625 : i32 to index
    %c0_294 = arith.constant 0 : index
    %c0_295 = arith.constant 0 : index
    %664 = vector.load %arg6[%663, %c0_294, %c0_295] : memref<8x2x32xbf16, #tpu.memory_space<vmem>>, vector<1x2x32xbf16>
    %665 = vector.shape_cast %664 : vector<1x2x32xbf16> to vector<2x32xbf16>
    %666 = vector.shape_cast %662 : vector<2x32xbf16> to vector<1x2x32xbf16>
    tpu.vector_store %arg6[%663, %c0_294, %c0_295], %666 {strides = array<i32>} : memref<8x2x32xbf16, #tpu.memory_space<vmem>>, vector<1x2x32xbf16>,
    %c8_i32 = arith.constant 8 : i32
    return
  }
  func.func @transform_0(%arg0: i32) -> (i32, i32, i32) {
    %c0_i32 = arith.constant 0 : i32
    %c0_i32_0 = arith.constant 0 : i32
    %c0_i32_1 = arith.constant 0 : i32
    return %arg0, %c0_i32, %c0_i32_0 : i32, i32, i32
  }
  func.func @transform_1(%arg0: i32) -> (i32, i32, i32) {
    %c0_i32 = arith.constant 0 : i32
    %0 = arith.subi %c0_i32, %arg0 : i32
    %c0_i32_0 = arith.constant 0 : i32
    %c0_i32_1 = arith.constant 0 : i32
    %c0_i32_2 = arith.constant 0 : i32
    return %0, %c0_i32_0, %c0_i32_1 : i32, i32, i32
  }
  func.func @transform_2(%arg0: i32) -> (i32, i32) {
    %c0_i32 = arith.constant 0 : i32
    %c0_i32_0 = arith.constant 0 : i32
    %c0_i32_1 = arith.constant 0 : i32
    return %c0_i32, %c0_i32_0 : i32, i32
  }
  func.func @transform_3(%arg0: i32) -> (i32, i32) {
    %c0_i32 = arith.constant 0 : i32
    %c0_i32_0 = arith.constant 0 : i32
    %c0_i32_1 = arith.constant 0 : i32
    return %c0_i32, %c0_i32_0 : i32, i32
  }
  func.func @transform_4(%arg0: i32) -> (i32, i32, i32) {
    %c0_i32 = arith.constant 0 : i32
    %c0_i32_0 = arith.constant 0 : i32
    %c0_i32_1 = arith.constant 0 : i32
    return %arg0, %c0_i32, %c0_i32_0 : i32, i32, i32
  }
  func.func @transform_5(%arg0: i32) -> (i32, i32, i32) {
    %c0_i32 = arith.constant 0 : i32
    %0 = arith.subi %c0_i32, %arg0 : i32
    %c0_i32_0 = arith.constant 0 : i32
    %c0_i32_1 = arith.constant 0 : i32
    %c0_i32_2 = arith.constant 0 : i32
    return %0, %c0_i32_0, %c0_i32_1 : i32, i32, i32
  }
}

module attributes {stable_mosaic.version = 11 : i64} {
  func.func @dual_proj_kernel(%arg0: i32, %arg1: memref<16x32xbf16, #tpu.memory_space<vmem>>, %arg2: memref<16x32xbf16, #tpu.memory_space<vmem>>, %arg3: memref<32x256xbf16, #tpu.memory_space<vmem>>, %arg4: memref<32x256xbf16, #tpu.memory_space<vmem>>, %arg5: memref<1x256xf32, #tpu.memory_space<vmem>>, %arg6: memref<16x128xf32, #tpu.memory_space<vmem>>, %arg7: memref<16x128xf32, #tpu.memory_space<vmem>>) attributes {dimension_semantics = [#tpu.dimension_semantics<parallel>], iteration_bounds = array<i64: 1>, scalar_prefetch = 0 : i64, scratch_operands = 0 : i64, tpu.core_type = #tpu.core_type<tc>, window_params = [{transform_indices = @transform_0, window_bounds = array<i64: 16, 32>}, {transform_indices = @transform_1, window_bounds = array<i64: 16, 32>}, {pipeline_mode = #tpu.pipeline_mode<synchronous>, transform_indices = @transform_2, window_bounds = array<i64: 32, 256>}, {pipeline_mode = #tpu.pipeline_mode<synchronous>, transform_indices = @transform_3, window_bounds = array<i64: 32, 256>}, {pipeline_mode = #tpu.pipeline_mode<synchronous>, transform_indices = @transform_4, window_bounds = array<i64: 1, 256>}, {transform_indices = @transform_5, window_bounds = array<i64: 16, 128>}, {transform_indices = @transform_6, window_bounds = array<i64: 16, 128>}]} {
    %c0 = arith.constant 0 : index
    %c0_0 = arith.constant 0 : index
    %0 = vector.load %arg1[%c0, %c0_0] : memref<16x32xbf16, #tpu.memory_space<vmem>>, vector<16x32xbf16>
    %c0_1 = arith.constant 0 : index
    %c0_2 = arith.constant 0 : index
    %1 = vector.load %arg3[%c0_1, %c0_2] : memref<32x256xbf16, #tpu.memory_space<vmem>>, vector<32x256xbf16>
    %cst = arith.constant dense<0.000000e+00> : vector<16x256xf32>
    %2 = tpu.matmul %0, %1, %cst {dimension_numbers = #tpu.dot_dimension_numbers<[1], [0], [0], [1], [0, 0, 1, 1], [], []>} : vector<16x32xbf16>, vector<32x256xbf16>, vector<16x256xf32> -> vector<16x256xf32>
    %c0_3 = arith.constant 0 : index
    %c0_4 = arith.constant 0 : index
    %3 = vector.load %arg2[%c0_3, %c0_4] : memref<16x32xbf16, #tpu.memory_space<vmem>>, vector<16x32xbf16>
    %c0_5 = arith.constant 0 : index
    %c0_6 = arith.constant 0 : index
    %4 = vector.load %arg4[%c0_5, %c0_6] : memref<32x256xbf16, #tpu.memory_space<vmem>>, vector<32x256xbf16>
    %cst_7 = arith.constant dense<0.000000e+00> : vector<16x256xf32>
    %5 = tpu.matmul %3, %4, %cst_7 {dimension_numbers = #tpu.dot_dimension_numbers<[1], [0], [0], [1], [0, 0, 1, 1], [], []>} : vector<16x32xbf16>, vector<32x256xbf16>, vector<16x256xf32> -> vector<16x256xf32>
    %6 = arith.addf %2, %5 : vector<16x256xf32>
    %c0_8 = arith.constant 0 : index
    %c0_9 = arith.constant 0 : index
    %7 = vector.load %arg5[%c0_8, %c0_9] : memref<1x256xf32, #tpu.memory_space<vmem>>, vector<1x256xf32>
    %8 = vector.broadcast %7 : vector<1x256xf32> to vector<16x256xf32>
    %9 = arith.addf %6, %8 : vector<16x256xf32>
    %10 = vector.extract_strided_slice %9 {offsets = [0, 0], sizes = [16, 128], strides = [1, 1]} : vector<16x256xf32> to vector<16x128xf32>
    %c0_10 = arith.constant 0 : index
    %c0_11 = arith.constant 0 : index
    %11 = vector.load %arg6[%c0_10, %c0_11] : memref<16x128xf32, #tpu.memory_space<vmem>>, vector<16x128xf32>
    tpu.vector_store %arg6[%c0_10, %c0_11], %10 {strides = array<i32>} : memref<16x128xf32, #tpu.memory_space<vmem>>, vector<16x128xf32>,
    %12 = vector.extract_strided_slice %9 {offsets = [0, 128], sizes = [16, 128], strides = [1, 1]} : vector<16x256xf32> to vector<16x128xf32>
    %c0_12 = arith.constant 0 : index
    %c0_13 = arith.constant 0 : index
    %13 = vector.load %arg7[%c0_12, %c0_13] : memref<16x128xf32, #tpu.memory_space<vmem>>, vector<16x128xf32>
    tpu.vector_store %arg7[%c0_12, %c0_13], %12 {strides = array<i32>} : memref<16x128xf32, #tpu.memory_space<vmem>>, vector<16x128xf32>,
    return
  }
  func.func @transform_0(%arg0: i32) -> (i32, i32) {
    %c0_i32 = arith.constant 0 : i32
    %c0_i32_0 = arith.constant 0 : i32
    return %arg0, %c0_i32 : i32, i32
  }
  func.func @transform_1(%arg0: i32) -> (i32, i32) {
    %c0_i32 = arith.constant 0 : i32
    %c0_i32_0 = arith.constant 0 : i32
    return %arg0, %c0_i32 : i32, i32
  }
  func.func @transform_2(%arg0: i32) -> (i32, i32) {
    %c0_i32 = arith.constant 0 : i32
    %c0_i32_0 = arith.constant 0 : i32
    %c0_i32_1 = arith.constant 0 : i32
    return %c0_i32, %c0_i32_0 : i32, i32
  }
  func.func @transform_3(%arg0: i32) -> (i32, i32) {
    %c0_i32 = arith.constant 0 : i32
    %c0_i32_0 = arith.constant 0 : i32
    %c0_i32_1 = arith.constant 0 : i32
    return %c0_i32, %c0_i32_0 : i32, i32
  }
  func.func @transform_4(%arg0: i32) -> (i32, i32) {
    %c0_i32 = arith.constant 0 : i32
    %c0_i32_0 = arith.constant 0 : i32
    %c0_i32_1 = arith.constant 0 : i32
    return %c0_i32, %c0_i32_0 : i32, i32
  }
  func.func @transform_5(%arg0: i32) -> (i32, i32) {
    %c0_i32 = arith.constant 0 : i32
    %c0_i32_0 = arith.constant 0 : i32
    return %arg0, %c0_i32 : i32, i32
  }
  func.func @transform_6(%arg0: i32) -> (i32, i32) {
    %c0_i32 = arith.constant 0 : i32
    %c0_i32_0 = arith.constant 0 : i32
    return %arg0, %c0_i32 : i32, i32
  }
}

module attributes {stable_mosaic.version = 11 : i64} {
  func.func @dual_proj_kernel(%arg0: i32, %arg1: memref<16x32xbf16, #tpu.memory_space<vmem>>, %arg2: memref<16x32xbf16, #tpu.memory_space<vmem>>, %arg3: memref<32x64xbf16, #tpu.memory_space<vmem>>, %arg4: memref<32x64xbf16, #tpu.memory_space<vmem>>, %arg5: memref<1x64xf32, #tpu.memory_space<vmem>>, %arg6: memref<16x32xf32, #tpu.memory_space<vmem>>, %arg7: memref<16x32xf32, #tpu.memory_space<vmem>>) attributes {dimension_semantics = [#tpu.dimension_semantics<parallel>], iteration_bounds = array<i64: 1>, scalar_prefetch = 0 : i64, scratch_operands = 0 : i64, tpu.core_type = #tpu.core_type<tc>, window_params = [{transform_indices = @transform_0, window_bounds = array<i64: 16, 32>}, {transform_indices = @transform_1, window_bounds = array<i64: 16, 32>}, {pipeline_mode = #tpu.pipeline_mode<synchronous>, transform_indices = @transform_2, window_bounds = array<i64: 32, 64>}, {pipeline_mode = #tpu.pipeline_mode<synchronous>, transform_indices = @transform_3, window_bounds = array<i64: 32, 64>}, {pipeline_mode = #tpu.pipeline_mode<synchronous>, transform_indices = @transform_4, window_bounds = array<i64: 1, 64>}, {transform_indices = @transform_5, window_bounds = array<i64: 16, 32>}, {transform_indices = @transform_6, window_bounds = array<i64: 16, 32>}]} {
    %c0 = arith.constant 0 : index
    %c0_0 = arith.constant 0 : index
    %0 = vector.load %arg1[%c0, %c0_0] : memref<16x32xbf16, #tpu.memory_space<vmem>>, vector<16x32xbf16>
    %c0_1 = arith.constant 0 : index
    %c0_2 = arith.constant 0 : index
    %1 = vector.load %arg3[%c0_1, %c0_2] : memref<32x64xbf16, #tpu.memory_space<vmem>>, vector<32x64xbf16>
    %cst = arith.constant dense<0.000000e+00> : vector<16x64xf32>
    %2 = tpu.matmul %0, %1, %cst {dimension_numbers = #tpu.dot_dimension_numbers<[1], [0], [0], [1], [0, 0, 1, 1], [], []>} : vector<16x32xbf16>, vector<32x64xbf16>, vector<16x64xf32> -> vector<16x64xf32>
    %c0_3 = arith.constant 0 : index
    %c0_4 = arith.constant 0 : index
    %3 = vector.load %arg2[%c0_3, %c0_4] : memref<16x32xbf16, #tpu.memory_space<vmem>>, vector<16x32xbf16>
    %c0_5 = arith.constant 0 : index
    %c0_6 = arith.constant 0 : index
    %4 = vector.load %arg4[%c0_5, %c0_6] : memref<32x64xbf16, #tpu.memory_space<vmem>>, vector<32x64xbf16>
    %cst_7 = arith.constant dense<0.000000e+00> : vector<16x64xf32>
    %5 = tpu.matmul %3, %4, %cst_7 {dimension_numbers = #tpu.dot_dimension_numbers<[1], [0], [0], [1], [0, 0, 1, 1], [], []>} : vector<16x32xbf16>, vector<32x64xbf16>, vector<16x64xf32> -> vector<16x64xf32>
    %6 = arith.addf %2, %5 : vector<16x64xf32>
    %c0_8 = arith.constant 0 : index
    %c0_9 = arith.constant 0 : index
    %7 = vector.load %arg5[%c0_8, %c0_9] : memref<1x64xf32, #tpu.memory_space<vmem>>, vector<1x64xf32>
    %8 = vector.broadcast %7 : vector<1x64xf32> to vector<16x64xf32>
    %9 = arith.addf %6, %8 : vector<16x64xf32>
    %10 = vector.extract_strided_slice %9 {offsets = [0, 0], sizes = [16, 32], strides = [1, 1]} : vector<16x64xf32> to vector<16x32xf32>
    %c0_10 = arith.constant 0 : index
    %c0_11 = arith.constant 0 : index
    %11 = vector.load %arg6[%c0_10, %c0_11] : memref<16x32xf32, #tpu.memory_space<vmem>>, vector<16x32xf32>
    tpu.vector_store %arg6[%c0_10, %c0_11], %10 {strides = array<i32>} : memref<16x32xf32, #tpu.memory_space<vmem>>, vector<16x32xf32>,
    %12 = vector.extract_strided_slice %9 {offsets = [0, 32], sizes = [16, 32], strides = [1, 1]} : vector<16x64xf32> to vector<16x32xf32>
    %c0_12 = arith.constant 0 : index
    %c0_13 = arith.constant 0 : index
    %13 = vector.load %arg7[%c0_12, %c0_13] : memref<16x32xf32, #tpu.memory_space<vmem>>, vector<16x32xf32>
    tpu.vector_store %arg7[%c0_12, %c0_13], %12 {strides = array<i32>} : memref<16x32xf32, #tpu.memory_space<vmem>>, vector<16x32xf32>,
    return
  }
  func.func @transform_0(%arg0: i32) -> (i32, i32) {
    %c0_i32 = arith.constant 0 : i32
    %c0_i32_0 = arith.constant 0 : i32
    return %arg0, %c0_i32 : i32, i32
  }
  func.func @transform_1(%arg0: i32) -> (i32, i32) {
    %c0_i32 = arith.constant 0 : i32
    %c0_i32_0 = arith.constant 0 : i32
    return %arg0, %c0_i32 : i32, i32
  }
  func.func @transform_2(%arg0: i32) -> (i32, i32) {
    %c0_i32 = arith.constant 0 : i32
    %c0_i32_0 = arith.constant 0 : i32
    %c0_i32_1 = arith.constant 0 : i32
    return %c0_i32, %c0_i32_0 : i32, i32
  }
  func.func @transform_3(%arg0: i32) -> (i32, i32) {
    %c0_i32 = arith.constant 0 : i32
    %c0_i32_0 = arith.constant 0 : i32
    %c0_i32_1 = arith.constant 0 : i32
    return %c0_i32, %c0_i32_0 : i32, i32
  }
  func.func @transform_4(%arg0: i32) -> (i32, i32) {
    %c0_i32 = arith.constant 0 : i32
    %c0_i32_0 = arith.constant 0 : i32
    %c0_i32_1 = arith.constant 0 : i32
    return %c0_i32, %c0_i32_0 : i32, i32
  }
  func.func @transform_5(%arg0: i32) -> (i32, i32) {
    %c0_i32 = arith.constant 0 : i32
    %c0_i32_0 = arith.constant 0 : i32
    return %arg0, %c0_i32 : i32, i32
  }
  func.func @transform_6(%arg0: i32) -> (i32, i32) {
    %c0_i32 = arith.constant 0 : i32
    %c0_i32_0 = arith.constant 0 : i32
    return %arg0, %c0_i32 : i32, i32
  }
}

</mosaic_0001>

<llo_original>
// kernel: encoder_forward.5
$region0: #{encoder_forward.5}
  #allocation0 [shape = 'u32[]', space=smem, size = 0x4, offset = 0x4, fixed_abs, tag = 'smem constant byte address 0x4 - core index']
  #allocation1 [shape = 'u32[144,128]{1,0:T(1,128)}', space=vmem, size = 0x12000, scoped, tag = 'internal scratch']
  %s0 = inlined_call_operand.vmem [shape: f32[16,16], index: 0, kind: input, shape index: {}]
  %s1 = inlined_call_operand.vmem [shape: bf16[16,8], index: 1, kind: input, shape index: {}]
  %s2 = inlined_call_operand.vmem [shape: f32[1,8], index: 2, kind: input, shape index: {}]
  %s3 = inlined_call_operand.vmem [shape: bf16[8,16], index: 3, kind: input, shape index: {}]
  %s4 = inlined_call_operand.vmem [shape: f32[1,16], index: 4, kind: input, shape index: {}]
  %s5 = inlined_call_operand.vmem [shape: bf16[16,256], index: 5, kind: input, shape index: {}]
  %s6 = inlined_call_operand.vmem [shape: f32[1,256], index: 6, kind: input, shape index: {}]
  %s7 = inlined_call_operand.vmem [shape: f32[16,128], index: 7, kind: output, shape index: {0}]
  %s8 = inlined_call_operand.vmem [shape: f32[16,128], index: 8, kind: output, shape index: {1}]
  %9 = xla_tuple %s7, %s8
  %s10 = sld [smem:[#allocation0]]
  $region46: #{encoder_forward.5} parent=0
    _
  %s12 = ssub.s32 1, %s10
  %s13 = scalar_select 0, %s12, %s10
  // Predicated region
  $region2: #{encoder_forward.5} parent=0 // pred_check
    _
  $region3: #{encoder_forward.5} parent=0 // pred_check_branch
    %15 = sbr.rel (0) target = $region5
  $region4: #{encoder_forward.5} parent=0 // pred_region
    _
  $region5: #{encoder_forward.5} parent=0 // pred_fallthru
    _
  // Predicated region
  $region6: #{encoder_forward.5} parent=0 // pred_check
    _
  $region7: #{encoder_forward.5} parent=0 // pred_check_branch
    %17 = sbr.rel (0) target = $region9
  $region8: #{encoder_forward.5} parent=0 // pred_region
    _
  $region9: #{encoder_forward.5} parent=0 // pred_fallthru
    _
  // Predicated region
  $region10: #{encoder_forward.5} parent=0 // pred_check
    _
  $region11: #{encoder_forward.5} parent=0 // pred_check_branch
    %19 = sbr.rel (0) target = $region13
  $region12: #{encoder_forward.5} parent=0 // pred_region
    _
  $region13: #{encoder_forward.5} parent=0 // pred_fallthru
    _
  // Predicated region
  $region14: #{encoder_forward.5} parent=0 // pred_check
    _
  $region15: #{encoder_forward.5} parent=0 // pred_check_branch
    %21 = sbr.rel (0) target = $region17
  $region16: #{encoder_forward.5} parent=0 // pred_region
    _
  $region17: #{encoder_forward.5} parent=0 // pred_fallthru
    _
  // Predicated region
  $region18: #{encoder_forward.5} parent=0 // pred_check
    _
  $region19: #{encoder_forward.5} parent=0 // pred_check_branch
    %23 = sbr.rel (0) target = $region21
  $region20: #{encoder_forward.5} parent=0 // pred_region
    _
  $region21: #{encoder_forward.5} parent=0 // pred_fallthru
    _
  // Predicated region
  $region22: #{encoder_forward.5} parent=0 // pred_check
    _
  $region23: #{encoder_forward.5} parent=0 // pred_check_branch
    %25 = sbr.rel (0) target = $region25
  $region24: #{encoder_forward.5} parent=0 // pred_region
    _
  $region25: #{encoder_forward.5} parent=0 // pred_fallthru
    _
  // Predicated region
  $region26: #{encoder_forward.5} parent=0 // pred_check
    _
  $region27: #{encoder_forward.5} parent=0 // pred_check_branch
    %27 = sbr.rel (0) target = $region29
  $region28: #{encoder_forward.5} parent=0 // pred_region
    _
  $region29: #{encoder_forward.5} parent=0 // pred_fallthru
    _
  %v29 = vld [vmem:[%s0] sm:$0xff]
  %v30 = vld [vmem:[%s0 + $0x8] sm:$0xff]
  %v31 = vpack.c.bf16 %v30, %v29
  %v32 = vld [vmem:[%s1] sm:$0xf]
  %v33 = vld [vmem:[%s1 + $0x4] sm:$0xf]
  %v34 = vld [vmem:[%s2] sm:$0x1]
  %v36 = vlaneseq
  %v37 = vshrl.u32 %v36, 7
  %v38 = vsub.s32 0, %v37
  %v39 = vrot.slane %v34, %v38
  %v43 = vunpack.c.l.b16 %v32
  %v44 = vunpack.c.l.b16 %v33
  %v45 = vpack.c.b16 %v44, %v43
  %vm47 = vcmask 130048
  %v49 = vsel %vm47, %v31, 0
  %51 = vmatprep.subr.bf16.mxu0 0
  %52 = vmatpush1.bf16.msra.mxu0 0
  %53 = vmatprep.subr.bf16.mxu0 0
  %54 = vmatpush1.bf16.msra.mxu0 0
  %55 = vmatprep.subr.bf16.mxu0 0
  %56 = vmatpush1.bf16.msra.mxu0 0
  %57 = vmatprep.subr.bf16.mxu0 0
  %58 = vmatpush1.bf16.msra.mxu0 0
  %59 = vmatprep.subr.bf16.mxu0 0
  %60 = vmatpush1.bf16.msra.mxu0 0
  %61 = vmatprep.subr.bf16.mxu0 0
  %62 = vmatpush1.bf16.msra.mxu0 0
  %63 = vmatprep.subr.bf16.mxu0 0
  %64 = vmatpush1.bf16.msra.mxu0 0
  %65 = vmatprep.subr.bf16.mxu0 0
  %66 = vmatpush1.bf16.msra.mxu0 %v45
  %67 = vmatprep.subr.bf16.mxu0 0
  %68 = vmatpush2.bf16.msra.mxu0 0
  %69 = vmatprep.subr.bf16.mxu0 0
  %70 = vmatpush2.bf16.msra.mxu0 0
  %71 = vmatprep.subr.bf16.mxu0 0
  %72 = vmatpush2.bf16.msra.mxu0 0
  %73 = vmatprep.subr.bf16.mxu0 0
  %74 = vmatpush2.bf16.msra.mxu0 0
  %75 = vmatprep.subr.bf16.mxu0 0
  %76 = vmatpush2.bf16.msra.mxu0 0
  %77 = vmatprep.subr.bf16.mxu0 0
  %78 = vmatpush2.bf16.msra.mxu0 0
  %79 = vmatprep.subr.bf16.mxu0 0
  %80 = vmatpush2.bf16.msra.mxu0 0
  %81 = vmatprep.subr.bf16.mxu0 0
  %82 = vmatpush2.bf16.msra.mxu0 0
  %83 = vmatprep.mubr.bf16.mxu0 0
  %84 = vmatmul.mubr.bf16.gmra.mxu0 %v49
  %v85 = vpop.f32.mrf.mxu0
  %v86 = vadd.f32 %v39, %v85
  %v87 = vpop.f32.mrf.mxu0
  %v88 = vpop.f32.mrf.mxu0
  %v89 = vadd.f32 %v39, %v88
  %v90 = vpop.f32.mrf.mxu0
  %91 = vdwg.mxu0
  %vm92 = vcmp.gt.f32.partialorder %v86, 0.0
  %vm93 = vcmp.gt.f32.partialorder %v89, 0.0
  %v94 = vmul.f32 %v86, 0.01
  %v95 = vmul.f32 %v89, 0.01
  %v96 = vsel %vm92, %v86, %v94
  %v97 = vsel %vm93, %v89, %v95
  %v98 = vpack.c.bf16 %v97, %v96
  %v99 = vld [vmem:[%s3] sm:$0xf]
  %v100 = vld [vmem:[%s4] sm:$0x1]
  %v102 = vlaneseq
  %v103 = vshrl.u32 %v102, 7
  %v104 = vsub.s32 0, %v103
  %v105 = vrot.slane %v100, %v104
  %vm107 = vcmask 64512
  %v109 = vsel %vm107, %v98, 0
  %vm111 = vcmask 1043456
  %v113 = vsel %vm111, %v99, 0
  %115 = vmatprep.subr.bf16.mxu0 0
  %116 = vmatpush1.bf16.msra.mxu0 0
  %117 = vmatprep.subr.bf16.mxu0 0
  %118 = vmatpush1.bf16.msra.mxu0 0
  %119 = vmatprep.subr.bf16.mxu0 0
  %120 = vmatpush1.bf16.msra.mxu0 0
  %121 = vmatprep.subr.bf16.mxu0 0
  %122 = vmatpush1.bf16.msra.mxu0 0
  %123 = vmatprep.subr.bf16.mxu0 0
  %124 = vmatpush1.bf16.msra.mxu0 0
  %125 = vmatprep.subr.bf16.mxu0 0
  %126 = vmatpush1.bf16.msra.mxu0 0
  %127 = vmatprep.subr.bf16.mxu0 0
  %128 = vmatpush1.bf16.msra.mxu0 0
  %129 = vmatprep.subr.bf16.mxu0 0
  %130 = vmatpush1.bf16.msra.mxu0 %v113
  %131 = vmatprep.subr.bf16.mxu0 0
  %132 = vmatpush2.bf16.msra.mxu0 0
  %133 = vmatprep.subr.bf16.mxu0 0
  %134 = vmatpush2.bf16.msra.mxu0 0
  %135 = vmatprep.subr.bf16.mxu0 0
  %136 = vmatpush2.bf16.msra.mxu0 0
  %137 = vmatprep.subr.bf16.mxu0 0
  %138 = vmatpush2.bf16.msra.mxu0 0
  %139 = vmatprep.subr.bf16.mxu0 0
  %140 = vmatpush2.bf16.msra.mxu0 0
  %141 = vmatprep.subr.bf16.mxu0 0
  %142 = vmatpush2.bf16.msra.mxu0 0
  %143 = vmatprep.subr.bf16.mxu0 0
  %144 = vmatpush2.bf16.msra.mxu0 0
  %145 = vmatprep.subr.bf16.mxu0 0
  %146 = vmatpush2.bf16.msra.mxu0 0
  %147 = vmatprep.mubr.bf16.mxu0 0
  %148 = vmatmul.mubr.bf16.gmra.mxu0 %v109
  %v149 = vpop.f32.mrf.mxu0
  %v150 = vadd.f32 %v105, %v149
  %v151 = vpop.f32.mrf.mxu0
  %v152 = vpop.f32.mrf.mxu0
  %v153 = vadd.f32 %v105, %v152
  %v154 = vpop.f32.mrf.mxu0
  %155 = vdwg.mxu0
  %vm156 = vcmp.gt.f32.partialorder %v150, 0.0
  %vm157 = vcmp.gt.f32.partialorder %v153, 0.0
  %v158 = vmul.f32 %v150, 0.01
  %v159 = vmul.f32 %v153, 0.01
  %v160 = vsel %vm156, %v150, %v158
  %v161 = vsel %vm157, %v153, %v159
  %v162 = vpack.c.bf16 %v161, %v160
  %v163 = vld [vmem:[%s5] sm:$0xff]
  %v164 = vld [vmem:[%s5 + $0x8] sm:$0xff]
  %v165 = vld [vmem:[%s6] sm:$0x3]
  %v167 = vlaneseq
  %v168 = vshrl.u32 %v167, 7
  %v169 = vsub.s32 0, %v168
  %v170 = vrot.slane %v165, %v169
  %v171 = vlaneseq
  %v172 = vshrl.u32 %v171, 7
  %v173 = vsub.s32 1, %v172
  %v174 = vrot.slane %v165, %v173
  %v179 = vunpack.c.l.b16 %v163
  %v180 = vunpack.c.h.b16 %v163
  %v181 = vunpack.c.l.b16 %v164
  %v182 = vunpack.c.h.b16 %v164
  %v183 = vpack.c.b16 %v181, %v179
  %v184 = vpack.c.b16 %v182, %v180
  %v188 = vsel %vm47, %v162, 0
  %190 = vmatprep.subr.bf16.mxu0 0
  %191 = vmatpush1.bf16.msra.mxu0 0
  %192 = vmatprep.subr.bf16.mxu0 0
  %193 = vmatpush1.bf16.msra.mxu0 0
  %194 = vmatprep.subr.bf16.mxu0 0
  %195 = vmatpush1.bf16.msra.mxu0 0
  %196 = vmatprep.subr.bf16.mxu0 0
  %197 = vmatpush1.bf16.msra.mxu0 0
  %198 = vmatprep.subr.bf16.mxu0 0
  %199 = vmatpush1.bf16.msra.mxu0 0
  %200 = vmatprep.subr.bf16.mxu0 0
  %201 = vmatpush1.bf16.msra.mxu0 0
  %202 = vmatprep.subr.bf16.mxu0 0
  %203 = vmatpush1.bf16.msra.mxu0 0
  %204 = vmatprep.subr.bf16.mxu0 %v184
  %205 = vmatpush1.bf16.msra.mxu0 %v183
  %206 = vmatprep.subr.bf16.mxu0 0
  %207 = vmatpush2.bf16.msra.mxu0 0
  %208 = vmatprep.subr.bf16.mxu0 0
  %209 = vmatpush2.bf16.msra.mxu0 0
  %210 = vmatprep.subr.bf16.mxu0 0
  %211 = vmatpush2.bf16.msra.mxu0 0
  %212 = vmatprep.subr.bf16.mxu0 0
  %213 = vmatpush2.bf16.msra.mxu0 0
  %214 = vmatprep.subr.bf16.mxu0 0
  %215 = vmatpush2.bf16.msra.mxu0 0
  %216 = vmatprep.subr.bf16.mxu0 0
  %217 = vmatpush2.bf16.msra.mxu0 0
  %218 = vmatprep.subr.bf16.mxu0 0
  %219 = vmatpush2.bf16.msra.mxu0 0
  %220 = vmatprep.subr.bf16.mxu0 0
  %221 = vmatpush2.bf16.msra.mxu0 0
  %222 = vmatprep.mubr.bf16.mxu0 0
  %223 = vmatmul.mubr.bf16.gmra.mxu0 %v188
  %v224 = vpop.f32.mrf.mxu0
  %v225 = vadd.f32 %v170, %v224
  %v226 = vpop.f32.mrf.mxu0
  %v227 = vadd.f32 %v174, %v226
  %v228 = vpop.f32.mrf.mxu0
  %v229 = vadd.f32 %v170, %v228
  %v230 = vpop.f32.mrf.mxu0
  %v231 = vadd.f32 %v174, %v230
  %232 = vdwg.mxu0
  %233 = vst [vmem:[%s7] sm:$0xff] %v225
  %234 = vst [vmem:[%s7 + $0x8] sm:$0xff] %v229
  %235 = vst [vmem:[%s8] sm:$0xff] %v227
  %236 = vst [vmem:[%s8 + $0x8] sm:$0xff] %v231
  // Predicated region
  $region30: #{encoder_forward.5} parent=0 // pred_check
    _
  $region31: #{encoder_forward.5} parent=0 // pred_check_branch
    %238 = sbr.rel (0) target = $region33
  $region32: #{encoder_forward.5} parent=0 // pred_region
    _
  $region33: #{encoder_forward.5} parent=0 // pred_fallthru
    _
  // Predicated region
  $region34: #{encoder_forward.5} parent=0 // pred_check
    _
  $region35: #{encoder_forward.5} parent=0 // pred_check_branch
    %240 = sbr.rel (0) target = $region37
  $region36: #{encoder_forward.5} parent=0 // pred_region
    _
  $region37: #{encoder_forward.5} parent=0 // pred_fallthru
    _
  // Predicated region
  $region38: #{encoder_forward.5} parent=0 // pred_check
    _
  $region39: #{encoder_forward.5} parent=0 // pred_check_branch
    %242 = sbr.rel (0) target = $region41
  $region40: #{encoder_forward.5} parent=0 // pred_region
    _
  $region41: #{encoder_forward.5} parent=0 // pred_fallthru
    _
  // Predicated region
  $region42: #{encoder_forward.5} parent=0 // pred_check
    _
  $region43: #{encoder_forward.5} parent=0 // pred_check_branch
    %244 = sbr.rel (0) target = $region45
  $region44: #{encoder_forward.5} parent=0 // pred_region
    _
  $region45: #{encoder_forward.5} parent=0 // pred_fallthru
    _

// kernel: encoder_forward.7
$region0: #{encoder_forward.7}
  #allocation0 [shape = 'u32[]', space=smem, size = 0x4, offset = 0x4, fixed_abs, tag = 'smem constant byte address 0x4 - core index']
  #allocation1 [shape = 'u32[144,128]{1,0:T(1,128)}', space=vmem, size = 0x12000, scoped, tag = 'internal scratch']
  %s0 = inlined_call_operand.vmem [shape: bf16[16,32], index: 0, kind: input, shape index: {}]
  %s1 = inlined_call_operand.vmem [shape: bf16[16,32], index: 1, kind: input, shape index: {}]
  %s2 = inlined_call_operand.vmem [shape: bf16[32,256], index: 2, kind: input, shape index: {}]
  %s3 = inlined_call_operand.vmem [shape: bf16[32,256], index: 3, kind: input, shape index: {}]
  %s4 = inlined_call_operand.vmem [shape: f32[1,256], index: 4, kind: input, shape index: {}]
  %s5 = inlined_call_operand.vmem [shape: f32[16,128], index: 5, kind: output, shape index: {0}]
  %s6 = inlined_call_operand.vmem [shape: f32[16,128], index: 6, kind: output, shape index: {1}]
  %7 = xla_tuple %s5, %s6
  %s8 = sld [smem:[#allocation0]]
  $region38: #{encoder_forward.7} parent=0
    _
  %s10 = ssub.s32 1, %s8
  %s11 = scalar_select 0, %s10, %s8
  // Predicated region
  $region2: #{encoder_forward.7} parent=0 // pred_check
    _
  $region3: #{encoder_forward.7} parent=0 // pred_check_branch
    %13 = sbr.rel (0) target = $region5
  $region4: #{encoder_forward.7} parent=0 // pred_region
    _
  $region5: #{encoder_forward.7} parent=0 // pred_fallthru
    _
  // Predicated region
  $region6: #{encoder_forward.7} parent=0 // pred_check
    _
  $region7: #{encoder_forward.7} parent=0 // pred_check_branch
    %15 = sbr.rel (0) target = $region9
  $region8: #{encoder_forward.7} parent=0 // pred_region
    _
  $region9: #{encoder_forward.7} parent=0 // pred_fallthru
    _
  // Predicated region
  $region10: #{encoder_forward.7} parent=0 // pred_check
    _
  $region11: #{encoder_forward.7} parent=0 // pred_check_branch
    %17 = sbr.rel (0) target = $region13
  $region12: #{encoder_forward.7} parent=0 // pred_region
    _
  $region13: #{encoder_forward.7} parent=0 // pred_fallthru
    _
  // Predicated region
  $region14: #{encoder_forward.7} parent=0 // pred_check
    _
  $region15: #{encoder_forward.7} parent=0 // pred_check_branch
    %19 = sbr.rel (0) target = $region17
  $region16: #{encoder_forward.7} parent=0 // pred_region
    _
  $region17: #{encoder_forward.7} parent=0 // pred_fallthru
    _
  // Predicated region
  $region18: #{encoder_forward.7} parent=0 // pred_check
    _
  $region19: #{encoder_forward.7} parent=0 // pred_check_branch
    %21 = sbr.rel (0) target = $region21
  $region20: #{encoder_forward.7} parent=0 // pred_region
    _
  $region21: #{encoder_forward.7} parent=0 // pred_fallthru
    _
  %v23 = vld [vmem:[%s0] sm:$0xf]
  %v24 = vld [vmem:[%s0 + $0x4] sm:$0xf]
  %v25 = vld [vmem:[%s2] sm:$0xff]
  %v26 = vld [vmem:[%s2 + $0x8] sm:$0xff]
  %v27 = vld [vmem:[%s2 + $0x10] sm:$0xff]
  %v28 = vld [vmem:[%s2 + $0x18] sm:$0xff]
  %v29 = vld [vmem:[%s1] sm:$0xf]
  %v30 = vld [vmem:[%s1 + $0x4] sm:$0xf]
  %v31 = vld [vmem:[%s3] sm:$0xff]
  %v32 = vld [vmem:[%s3 + $0x8] sm:$0xff]
  %v33 = vld [vmem:[%s3 + $0x10] sm:$0xff]
  %v34 = vld [vmem:[%s3 + $0x18] sm:$0xff]
  %v37 = vunpack.c.l.b16 %v29
  %v38 = vunpack.c.l.b16 %v30
  %v39 = vpack.c.b16 %v38, %v37
  %v44 = vunpack.c.l.b16 %v31
  %v45 = vunpack.c.h.b16 %v31
  %v46 = vunpack.c.l.b16 %v32
  %v47 = vunpack.c.h.b16 %v32
  %v48 = vunpack.c.l.b16 %v33
  %v49 = vunpack.c.h.b16 %v33
  %v50 = vunpack.c.l.b16 %v34
  %v51 = vunpack.c.h.b16 %v34
  %v52 = vpack.c.b16 %v46, %v44
  %v53 = vpack.c.b16 %v47, %v45
  %v54 = vpack.c.b16 %v50, %v48
  %v55 = vpack.c.b16 %v51, %v49
  %vm60 = vcmask 261120
  %v62 = vsel %vm60, %v39, 0
  %64 = vmatprep.subr.bf16.mxu0 0
  %65 = vmatpush1.bf16.msra.mxu0 0
  %66 = vmatprep.subr.bf16.mxu0 0
  %67 = vmatpush1.bf16.msra.mxu0 0
  %68 = vmatprep.subr.bf16.mxu0 0
  %69 = vmatpush1.bf16.msra.mxu0 0
  %70 = vmatprep.subr.bf16.mxu0 0
  %71 = vmatpush1.bf16.msra.mxu0 0
  %72 = vmatprep.subr.bf16.mxu0 0
  %73 = vmatpush1.bf16.msra.mxu0 0
  %74 = vmatprep.subr.bf16.mxu0 0
  %75 = vmatpush1.bf16.msra.mxu0 0
  %76 = vmatprep.subr.bf16.mxu0 %v55
  %77 = vmatpush1.bf16.msra.mxu0 %v54
  %78 = vmatprep.subr.bf16.mxu0 %v53
  %79 = vmatpush1.bf16.msra.mxu0 %v52
  %80 = vmatprep.subr.bf16.mxu0 0
  %81 = vmatpush2.bf16.msra.mxu0 0
  %82 = vmatprep.subr.bf16.mxu0 0
  %83 = vmatpush2.bf16.msra.mxu0 0
  %84 = vmatprep.subr.bf16.mxu0 0
  %85 = vmatpush2.bf16.msra.mxu0 0
  %86 = vmatprep.subr.bf16.mxu0 0
  %87 = vmatpush2.bf16.msra.mxu0 0
  %88 = vmatprep.subr.bf16.mxu0 0
  %89 = vmatpush2.bf16.msra.mxu0 0
  %90 = vmatprep.subr.bf16.mxu0 0
  %91 = vmatpush2.bf16.msra.mxu0 0
  %92 = vmatprep.subr.bf16.mxu0 0
  %93 = vmatpush2.bf16.msra.mxu0 0
  %94 = vmatprep.subr.bf16.mxu0 0
  %95 = vmatpush2.bf16.msra.mxu0 0
  %96 = vmatprep.mubr.bf16.mxu0 0
  %97 = vmatmul.mubr.bf16.gmra.mxu0 %v62
  %v98 = vpop.f32.mrf.mxu0
  %v99 = vadd.f32 0.0, %v98
  %v100 = vpop.f32.mrf.mxu0
  %v101 = vadd.f32 0.0, %v100
  %v102 = vpop.f32.mrf.mxu0
  %v103 = vadd.f32 0.0, %v102
  %v104 = vpop.f32.mrf.mxu0
  %v105 = vadd.f32 0.0, %v104
  %106 = vdwg.mxu0
  %v109 = vunpack.c.l.b16 %v23
  %v110 = vunpack.c.l.b16 %v24
  %v111 = vpack.c.b16 %v110, %v109
  %v116 = vunpack.c.l.b16 %v25
  %v117 = vunpack.c.h.b16 %v25
  %v118 = vunpack.c.l.b16 %v26
  %v119 = vunpack.c.h.b16 %v26
  %v120 = vunpack.c.l.b16 %v27
  %v121 = vunpack.c.h.b16 %v27
  %v122 = vunpack.c.l.b16 %v28
  %v123 = vunpack.c.h.b16 %v28
  %v124 = vpack.c.b16 %v118, %v116
  %v125 = vpack.c.b16 %v119, %v117
  %v126 = vpack.c.b16 %v122, %v120
  %v127 = vpack.c.b16 %v123, %v121
  %v133 = vsel %vm60, %v111, 0
  %135 = vmatprep.subr.bf16.mxu0 0
  %136 = vmatpush1.bf16.msra.mxu0 0
  %137 = vmatprep.subr.bf16.mxu0 0
  %138 = vmatpush1.bf16.msra.mxu0 0
  %139 = vmatprep.subr.bf16.mxu0 0
  %140 = vmatpush1.bf16.msra.mxu0 0
  %141 = vmatprep.subr.bf16.mxu0 0
  %142 = vmatpush1.bf16.msra.mxu0 0
  %143 = vmatprep.subr.bf16.mxu0 0
  %144 = vmatpush1.bf16.msra.mxu0 0
  %145 = vmatprep.subr.bf16.mxu0 0
  %146 = vmatpush1.bf16.msra.mxu0 0
  %147 = vmatprep.subr.bf16.mxu0 %v127
  %148 = vmatpush1.bf16.msra.mxu0 %v126
  %149 = vmatprep.subr.bf16.mxu0 %v125
  %150 = vmatpush1.bf16.msra.mxu0 %v124
  %151 = vmatprep.subr.bf16.mxu0 0
  %152 = vmatpush2.bf16.msra.mxu0 0
  %153 = vmatprep.subr.bf16.mxu0 0
  %154 = vmatpush2.bf16.msra.mxu0 0
  %155 = vmatprep.subr.bf16.mxu0 0
  %156 = vmatpush2.bf16.msra.mxu0 0
  %157 = vmatprep.subr.bf16.mxu0 0
  %158 = vmatpush2.bf16.msra.mxu0 0
  %159 = vmatprep.subr.bf16.mxu0 0
  %160 = vmatpush2.bf16.msra.mxu0 0
  %161 = vmatprep.subr.bf16.mxu0 0
  %162 = vmatpush2.bf16.msra.mxu0 0
  %163 = vmatprep.subr.bf16.mxu0 0
  %164 = vmatpush2.bf16.msra.mxu0 0
  %165 = vmatprep.subr.bf16.mxu0 0
  %166 = vmatpush2.bf16.msra.mxu0 0
  %167 = vmatprep.mubr.bf16.mxu0 0
  %168 = vmatmul.mubr.bf16.gmra.mxu0 %v133
  %v169 = vpop.f32.mrf.mxu0
  %v170 = vadd.f32 %v99, %v169
  %v171 = vpop.f32.mrf.mxu0
  %v172 = vadd.f32 %v101, %v171
  %v173 = vpop.f32.mrf.mxu0
  %v174 = vadd.f32 %v103, %v173
  %v175 = vpop.f32.mrf.mxu0
  %v176 = vadd.f32 %v105, %v175
  %177 = vdwg.mxu0
  %v178 = vld [vmem:[%s4] sm:$0x3]
  %v180 = vlaneseq
  %v181 = vshrl.u32 %v180, 7
  %v182 = vsub.s32 0, %v181
  %v183 = vrot.slane %v178, %v182
  %v184 = vlaneseq
  %v185 = vshrl.u32 %v184, 7
  %v186 = vsub.s32 1, %v185
  %v187 = vrot.slane %v178, %v186
  %v190 = vadd.f32 %v170, %v183
  %v191 = vadd.f32 %v172, %v187
  %v192 = vadd.f32 %v174, %v183
  %v193 = vadd.f32 %v176, %v187
  %194 = vst [vmem:[%s5] sm:$0xff] %v190
  %195 = vst [vmem:[%s5 + $0x8] sm:$0xff] %v192
  %196 = vst [vmem:[%s6] sm:$0xff] %v191
  %197 = vst [vmem:[%s6 + $0x8] sm:$0xff] %v193
  // Predicated region
  $region22: #{encoder_forward.7} parent=0 // pred_check
    _
  $region23: #{encoder_forward.7} parent=0 // pred_check_branch
    %199 = sbr.rel (0) target = $region25
  $region24: #{encoder_forward.7} parent=0 // pred_region
    _
  $region25: #{encoder_forward.7} parent=0 // pred_fallthru
    _
  // Predicated region
  $region26: #{encoder_forward.7} parent=0 // pred_check
    _
  $region27: #{encoder_forward.7} parent=0 // pred_check_branch
    %201 = sbr.rel (0) target = $region29
  $region28: #{encoder_forward.7} parent=0 // pred_region
    _
  $region29: #{encoder_forward.7} parent=0 // pred_fallthru
    _
  // Predicated region
  $region30: #{encoder_forward.7} parent=0 // pred_check
    _
  $region31: #{encoder_forward.7} parent=0 // pred_check_branch
    %203 = sbr.rel (0) target = $region33
  $region32: #{encoder_forward.7} parent=0 // pred_region
    _
  $region33: #{encoder_forward.7} parent=0 // pred_fallthru
    _
  // Predicated region
  $region34: #{encoder_forward.7} parent=0 // pred_check
    _
  $region35: #{encoder_forward.7} parent=0 // pred_check_branch
    %205 = sbr.rel (0) target = $region37
  $region36: #{encoder_forward.7} parent=0 // pred_region
    _
  $region37: #{encoder_forward.7} parent=0 // pred_fallthru
    _

// kernel: encoder_forward.9
$region0: #{encoder_forward.9}
  #allocation0 [shape = 'u32[]', space=smem, size = 0x4, offset = 0x4, fixed_abs, tag = 'smem constant byte address 0x4 - core index']
  #allocation1 [shape = 'u32[144,128]{1,0:T(1,128)}', space=vmem, size = 0x12000, scoped, tag = 'internal scratch']
  %s0 = inlined_call_operand.vmem [shape: bf16[16,32], index: 0, kind: input, shape index: {}]
  %s1 = inlined_call_operand.vmem [shape: bf16[16,32], index: 1, kind: input, shape index: {}]
  %s2 = inlined_call_operand.vmem [shape: bf16[32,64], index: 2, kind: input, shape index: {}]
  %s3 = inlined_call_operand.vmem [shape: bf16[32,64], index: 3, kind: input, shape index: {}]
  %s4 = inlined_call_operand.vmem [shape: f32[1,64], index: 4, kind: input, shape index: {}]
  %s5 = inlined_call_operand.vmem [shape: f32[16,32], index: 5, kind: output, shape index: {0}]
  %s6 = inlined_call_operand.vmem [shape: f32[16,32], index: 6, kind: output, shape index: {1}]
  %7 = xla_tuple %s5, %s6
  %s8 = sld [smem:[#allocation0]]
  $region38: #{encoder_forward.9} parent=0
    _
  %s10 = ssub.s32 1, %s8
  %s11 = scalar_select 0, %s10, %s8
  // Predicated region
  $region2: #{encoder_forward.9} parent=0 // pred_check
    _
  $region3: #{encoder_forward.9} parent=0 // pred_check_branch
    %13 = sbr.rel (0) target = $region5
  $region4: #{encoder_forward.9} parent=0 // pred_region
    _
  $region5: #{encoder_forward.9} parent=0 // pred_fallthru
    _
  // Predicated region
  $region6: #{encoder_forward.9} parent=0 // pred_check
    _
  $region7: #{encoder_forward.9} parent=0 // pred_check_branch
    %15 = sbr.rel (0) target = $region9
  $region8: #{encoder_forward.9} parent=0 // pred_region
    _
  $region9: #{encoder_forward.9} parent=0 // pred_fallthru
    _
  // Predicated region
  $region10: #{encoder_forward.9} parent=0 // pred_check
    _
  $region11: #{encoder_forward.9} parent=0 // pred_check_branch
    %17 = sbr.rel (0) target = $region13
  $region12: #{encoder_forward.9} parent=0 // pred_region
    _
  $region13: #{encoder_forward.9} parent=0 // pred_fallthru
    _
  // Predicated region
  $region14: #{encoder_forward.9} parent=0 // pred_check
    _
  $region15: #{encoder_forward.9} parent=0 // pred_check_branch
    %19 = sbr.rel (0) target = $region17
  $region16: #{encoder_forward.9} parent=0 // pred_region
    _
  $region17: #{encoder_forward.9} parent=0 // pred_fallthru
    _
  // Predicated region
  $region18: #{encoder_forward.9} parent=0 // pred_check
    _
  $region19: #{encoder_forward.9} parent=0 // pred_check_branch
    %21 = sbr.rel (0) target = $region21
  $region20: #{encoder_forward.9} parent=0 // pred_region
    _
  $region21: #{encoder_forward.9} parent=0 // pred_fallthru
    _
  %v23 = vld [vmem:[%s0] sm:$0xf]
  %v24 = vld [vmem:[%s0 + $0x4] sm:$0xf]
  %v25 = vld [vmem:[%s2] sm:$0xf]
  %v26 = vld [vmem:[%s2 + $0x4] sm:$0xf]
  %v27 = vld [vmem:[%s2 + $0x8] sm:$0xf]
  %v28 = vld [vmem:[%s2 + $0xc] sm:$0xf]
  %v29 = vld [vmem:[%s1] sm:$0xf]
  %v30 = vld [vmem:[%s1 + $0x4] sm:$0xf]
  %v31 = vld [vmem:[%s3] sm:$0xf]
  %v32 = vld [vmem:[%s3 + $0x4] sm:$0xf]
  %v33 = vld [vmem:[%s3 + $0x8] sm:$0xf]
  %v34 = vld [vmem:[%s3 + $0xc] sm:$0xf]
  %v37 = vunpack.c.l.b16 %v29
  %v38 = vunpack.c.l.b16 %v30
  %v39 = vpack.c.b16 %v38, %v37
  %v44 = vunpack.c.l.b16 %v31
  %v45 = vunpack.c.l.b16 %v32
  %v46 = vunpack.c.l.b16 %v33
  %v47 = vunpack.c.l.b16 %v34
  %v48 = vpack.c.b16 %v45, %v44
  %v49 = vpack.c.b16 %v47, %v46
  %vm52 = vcmask 261120
  %v54 = vsel %vm52, %v39, 0
  %56 = vmatprep.subr.bf16.mxu0 0
  %57 = vmatpush1.bf16.msra.mxu0 0
  %58 = vmatprep.subr.bf16.mxu0 0
  %59 = vmatpush1.bf16.msra.mxu0 0
  %60 = vmatprep.subr.bf16.mxu0 0
  %61 = vmatpush1.bf16.msra.mxu0 0
  %62 = vmatprep.subr.bf16.mxu0 0
  %63 = vmatpush1.bf16.msra.mxu0 0
  %64 = vmatprep.subr.bf16.mxu0 0
  %65 = vmatpush1.bf16.msra.mxu0 0
  %66 = vmatprep.subr.bf16.mxu0 0
  %67 = vmatpush1.bf16.msra.mxu0 0
  %68 = vmatprep.subr.bf16.mxu0 0
  %69 = vmatpush1.bf16.msra.mxu0 %v49
  %70 = vmatprep.subr.bf16.mxu0 0
  %71 = vmatpush1.bf16.msra.mxu0 %v48
  %72 = vmatprep.subr.bf16.mxu0 0
  %73 = vmatpush2.bf16.msra.mxu0 0
  %74 = vmatprep.subr.bf16.mxu0 0
  %75 = vmatpush2.bf16.msra.mxu0 0
  %76 = vmatprep.subr.bf16.mxu0 0
  %77 = vmatpush2.bf16.msra.mxu0 0
  %78 = vmatprep.subr.bf16.mxu0 0
  %79 = vmatpush2.bf16.msra.mxu0 0
  %80 = vmatprep.subr.bf16.mxu0 0
  %81 = vmatpush2.bf16.msra.mxu0 0
  %82 = vmatprep.subr.bf16.mxu0 0
  %83 = vmatpush2.bf16.msra.mxu0 0
  %84 = vmatprep.subr.bf16.mxu0 0
  %85 = vmatpush2.bf16.msra.mxu0 0
  %86 = vmatprep.subr.bf16.mxu0 0
  %87 = vmatpush2.bf16.msra.mxu0 0
  %88 = vmatprep.mubr.bf16.mxu0 0
  %89 = vmatmul.mubr.bf16.gmra.mxu0 %v54
  %v90 = vpop.f32.mrf.mxu0
  %v91 = vadd.f32 0.0, %v90
  %v92 = vpop.f32.mrf.mxu0
  %v93 = vpop.f32.mrf.mxu0
  %v94 = vadd.f32 0.0, %v93
  %v95 = vpop.f32.mrf.mxu0
  %96 = vdwg.mxu0
  %v99 = vunpack.c.l.b16 %v23
  %v100 = vunpack.c.l.b16 %v24
  %v101 = vpack.c.b16 %v100, %v99
  %v106 = vunpack.c.l.b16 %v25
  %v107 = vunpack.c.l.b16 %v26
  %v108 = vunpack.c.l.b16 %v27
  %v109 = vunpack.c.l.b16 %v28
  %v110 = vpack.c.b16 %v107, %v106
  %v111 = vpack.c.b16 %v109, %v108
  %v115 = vsel %vm52, %v101, 0
  %117 = vmatprep.subr.bf16.mxu0 0
  %118 = vmatpush1.bf16.msra.mxu0 0
  %119 = vmatprep.subr.bf16.mxu0 0
  %120 = vmatpush1.bf16.msra.mxu0 0
  %121 = vmatprep.subr.bf16.mxu0 0
  %122 = vmatpush1.bf16.msra.mxu0 0
  %123 = vmatprep.subr.bf16.mxu0 0
  %124 = vmatpush1.bf16.msra.mxu0 0
  %125 = vmatprep.subr.bf16.mxu0 0
  %126 = vmatpush1.bf16.msra.mxu0 0
  %127 = vmatprep.subr.bf16.mxu0 0
  %128 = vmatpush1.bf16.msra.mxu0 0
  %129 = vmatprep.subr.bf16.mxu0 0
  %130 = vmatpush1.bf16.msra.mxu0 %v111
  %131 = vmatprep.subr.bf16.mxu0 0
  %132 = vmatpush1.bf16.msra.mxu0 %v110
  %133 = vmatprep.subr.bf16.mxu0 0
  %134 = vmatpush2.bf16.msra.mxu0 0
  %135 = vmatprep.subr.bf16.mxu0 0
  %136 = vmatpush2.bf16.msra.mxu0 0
  %137 = vmatprep.subr.bf16.mxu0 0
  %138 = vmatpush2.bf16.msra.mxu0 0
  %139 = vmatprep.subr.bf16.mxu0 0
  %140 = vmatpush2.bf16.msra.mxu0 0
  %141 = vmatprep.subr.bf16.mxu0 0
  %142 = vmatpush2.bf16.msra.mxu0 0
  %143 = vmatprep.subr.bf16.mxu0 0
  %144 = vmatpush2.bf16.msra.mxu0 0
  %145 = vmatprep.subr.bf16.mxu0 0
  %146 = vmatpush2.bf16.msra.mxu0 0
  %147 = vmatprep.subr.bf16.mxu0 0
  %148 = vmatpush2.bf16.msra.mxu0 0
  %149 = vmatprep.mubr.bf16.mxu0 0
  %150 = vmatmul.mubr.bf16.gmra.mxu0 %v115
  %v151 = vpop.f32.mrf.mxu0
  %v152 = vadd.f32 %v91, %v151
  %v153 = vpop.f32.mrf.mxu0
  %v154 = vpop.f32.mrf.mxu0
  %v155 = vadd.f32 %v94, %v154
  %v156 = vpop.f32.mrf.mxu0
  %157 = vdwg.mxu0
  %v158 = vld [vmem:[%s4] sm:$0x1]
  %v160 = vlaneseq
  %v161 = vshrl.u32 %v160, 7
  %v162 = vsub.s32 0, %v161
  %v163 = vrot.slane %v158, %v162
  %v165 = vadd.f32 %v152, %v163
  %v166 = vadd.f32 %v155, %v163
  %167 = vst.msk [vmem:[%s5] sm:$0xff] %vm52, %v165
  %168 = vst.msk [vmem:[%s5 + $0x8] sm:$0xff] %vm52, %v166
  %171 = vrot.lane.b32.xlu0 %v165, 96
  %v172 = vpop.permute.xlu0 %171
  %173 = vrot.lane.b32.xlu0 %v166, 96
  %v174 = vpop.permute.xlu0 %173
  %177 = vst.msk [vmem:[%s6] sm:$0xff] %vm52, %v172
  %178 = vst.msk [vmem:[%s6 + $0x8] sm:$0xff] %vm52, %v174
  // Predicated region
  $region22: #{encoder_forward.9} parent=0 // pred_check
    _
  $region23: #{encoder_forward.9} parent=0 // pred_check_branch
    %180 = sbr.rel (0) target = $region25
  $region24: #{encoder_forward.9} parent=0 // pred_region
    _
  $region25: #{encoder_forward.9} parent=0 // pred_fallthru
    _
  // Predicated region
  $region26: #{encoder_forward.9} parent=0 // pred_check
    _
  $region27: #{encoder_forward.9} parent=0 // pred_check_branch
    %182 = sbr.rel (0) target = $region29
  $region28: #{encoder_forward.9} parent=0 // pred_region
    _
  $region29: #{encoder_forward.9} parent=0 // pred_fallthru
    _
  // Predicated region
  $region30: #{encoder_forward.9} parent=0 // pred_check
    _
  $region31: #{encoder_forward.9} parent=0 // pred_check_branch
    %184 = sbr.rel (0) target = $region33
  $region32: #{encoder_forward.9} parent=0 // pred_region
    _
  $region33: #{encoder_forward.9} parent=0 // pred_fallthru
    _
  // Predicated region
  $region34: #{encoder_forward.9} parent=0 // pred_check
    _
  $region35: #{encoder_forward.9} parent=0 // pred_check_branch
    %186 = sbr.rel (0) target = $region37
  $region36: #{encoder_forward.9} parent=0 // pred_region
    _
  $region37: #{encoder_forward.9} parent=0 // pred_fallthru
    _

// kernel: encoder_forward.6
$region0: #{encoder_forward.6}
  #allocation0 [shape = 'u32[]', space=smem, size = 0x4, offset = 0x4, fixed_abs, tag = 'smem constant byte address 0x4 - core index']
  #allocation1 [shape = 'u32[144,128]{1,0:T(1,128)}', space=vmem, size = 0x12000, scoped, tag = 'internal scratch']
  #allocation2 [shape = 'f32[2,32]{1,0:T(2,128)}', space=vmem, size = 0x400, scoped, tag = 'scratch operand']
  #allocation3 [shape = 'f32[2,32]{1,0:T(2,128)}', space=vmem, size = 0x400, scoped, tag = 'scratch operand']
  #allocation4 [shape = 'f32[2,32]{1,0:T(2,128)}', space=vmem, size = 0x400, scoped, tag = 'scratch operand']
  #allocation5 [shape = 'f32[2,32]{1,0:T(2,128)}', space=vmem, size = 0x400, scoped, tag = 'scratch operand']
  %s0 = inlined_call_operand.vmem [shape: f32[8,2,128], index: 0, kind: input, shape index: {}]
  %s1 = inlined_call_operand.vmem [shape: f32[8,2,128], index: 1, kind: input, shape index: {}]
  %s2 = inlined_call_operand.vmem [shape: bf16[32,128], index: 2, kind: input, shape index: {}]
  %s3 = inlined_call_operand.vmem [shape: bf16[32,128], index: 3, kind: input, shape index: {}]
  %s4 = inlined_call_operand.vmem [shape: bf16[8,2,32], index: 4, kind: output, shape index: {0}]
  %s5 = inlined_call_operand.vmem [shape: bf16[8,2,32], index: 5, kind: output, shape index: {1}]
  %6 = xla_tuple %s4, %s5
  %s7 = sld [smem:[#allocation0]]
  $region38: #{encoder_forward.6} parent=0
    _
  %s9 = ssub.s32 1, %s7
  %s10 = scalar_select 0, %s9, %s7
  // Predicated region
  $region2: #{encoder_forward.6} parent=0 // pred_check
    _
  $region3: #{encoder_forward.6} parent=0 // pred_check_branch
    %12 = sbr.rel (0) target = $region5
  $region4: #{encoder_forward.6} parent=0 // pred_region
    _
  $region5: #{encoder_forward.6} parent=0 // pred_fallthru
    _
  // Predicated region
  $region6: #{encoder_forward.6} parent=0 // pred_check
    _
  $region7: #{encoder_forward.6} parent=0 // pred_check_branch
    %14 = sbr.rel (0) target = $region9
  $region8: #{encoder_forward.6} parent=0 // pred_region
    %s15 = ssub.s32 0, 0
    %s16 = smul.u32 8, %s15
    %p17 = scmp.lt.s32.totalorder %s16, 7
    %s18 = scalar_select %p17, %s16, 7
    %s19 = smul.addr %s18, 2
    %s20 = scalar_lea.vmem %s1, %s19
    %s21 = ssub.s32 0, 0
    %s22 = smul.u32 8, %s21
  $region9: #{encoder_forward.6} parent=0 // pred_fallthru
    _
  // Predicated region
  $region10: #{encoder_forward.6} parent=0 // pred_check
    _
  $region11: #{encoder_forward.6} parent=0 // pred_check_branch
    %24 = sbr.rel (0) target = $region13
  $region12: #{encoder_forward.6} parent=0 // pred_region
    _
  $region13: #{encoder_forward.6} parent=0 // pred_fallthru
    _
  // Predicated region
  $region14: #{encoder_forward.6} parent=0 // pred_check
    _
  $region15: #{encoder_forward.6} parent=0 // pred_check_branch
    %26 = sbr.rel (0) target = $region17
  $region16: #{encoder_forward.6} parent=0 // pred_region
    _
  $region17: #{encoder_forward.6} parent=0 // pred_fallthru
    _
  %s27 = ssub.s32 0, 0
  %s28 = smul.u32 8, %s27
  %p29 = scmp.lt.s32.totalorder %s28, 7
  %s30 = scalar_select %p29, %s28, 7
  %s31 = smul.addr %s30, 2
  %s32 = scalar_lea.vmem %s1, %s31
  %s33 = ssub.s32 0, 0
  %s34 = smul.u32 8, %s33
  %p35 = scmp.lt.s32.totalorder %s34, 7
  %s36 = scalar_select %p35, %s34, 7
  %s37 = scalar_lea.vmem %s5, %s36
  %s38 = ssub.s32 0, 0
  %s39 = smul.u32 8, %s38
  %p40 = scmp.lt.s32.totalorder %s39, 7
  %s41 = scalar_select %p40, %s39, 7
  %s42 = smul.addr %s41, 2
  %s43 = scalar_lea.vmem %s1, %s42
  %s44 = ssub.s32 0, 0
  %s45 = smul.u32 8, %s44
  %s46 = ssub.s32 0, 0
  %s47 = smul.u32 8, %s46
  %p48 = scmp.lt.s32.totalorder %s47, 7
  %s49 = scalar_select %p48, %s47, 7
  %s50 = scalar_lea.vmem %s5, %s49
  %s51 = ssub.s32 0, 0
  %s52 = smul.u32 8, %s51
  %p54 = scmp.eq.s32.totalorder 0, 0
  // Predicated region
  $region18: #{encoder_forward.6} parent=0 // pred_check
    %p55 = pneg %p54
  $region19: #{encoder_forward.6} parent=0 // pred_check_branch
    %57 = sbr.rel (%p55) target = $region21
  $region20: #{encoder_forward.6} parent=0 // pred_region
    %vm58 = vcmask 254976
    %59 = vst.msk [vmem:[#allocation2] sm:$0x3] %vm58, 0.0
    %60 = vst.msk [vmem:[#allocation3] sm:$0x3] %vm58, 0.0
    %61 = vst.msk [vmem:[#allocation4] sm:$0x3] %vm58, 0.0
    %62 = vst.msk [vmem:[#allocation5] sm:$0x3] %vm58, 0.0
  $region21: #{encoder_forward.6} parent=0 // pred_fallthru
    _
  %v63 = vld [vmem:[%s0] sm:$0x3]
  %v64 = vld [vmem:[#allocation2] sm:$0x3]
  %v65 = vpack.c.bf16 %v64, %v64
  %v66 = vld [vmem:[%s2] sm:$0xf]
  %v67 = vld [vmem:[%s2 + $0x4] sm:$0xf]
  %v68 = vld [vmem:[%s2 + $0x8] sm:$0xf]
  %v69 = vld [vmem:[%s2 + $0xc] sm:$0xf]
  %v74 = vunpack.c.l.b16 %v66
  %v75 = vunpack.c.l.b16 %v67
  %v76 = vunpack.c.l.b16 %v68
  %v77 = vunpack.c.l.b16 %v69
  %v78 = vpack.c.b16 %v75, %v74
  %v79 = vpack.c.b16 %v77, %v76
  %vm82 = vcmask 261120
  %v84 = vsel %vm82, %v65, 0
  %86 = vmatprep.subr.bf16.mxu0 0
  %87 = vmatpush1.bf16.msra.mxu0 0
  %88 = vmatprep.subr.bf16.mxu0 0
  %89 = vmatpush1.bf16.msra.mxu0 0
  %90 = vmatprep.subr.bf16.mxu0 0
  %91 = vmatpush1.bf16.msra.mxu0 0
  %92 = vmatprep.subr.bf16.mxu0 0
  %93 = vmatpush1.bf16.msra.mxu0 0
  %94 = vmatprep.subr.bf16.mxu0 0
  %95 = vmatpush1.bf16.msra.mxu0 0
  %96 = vmatprep.subr.bf16.mxu0 0
  %97 = vmatpush1.bf16.msra.mxu0 0
  %98 = vmatprep.subr.bf16.mxu0 0
  %99 = vmatpush1.bf16.msra.mxu0 %v79
  %100 = vmatprep.subr.bf16.mxu0 0
  %101 = vmatpush1.bf16.msra.mxu0 %v78
  %102 = vmatprep.subr.bf16.mxu0 0
  %103 = vmatpush2.bf16.msra.mxu0 0
  %104 = vmatprep.subr.bf16.mxu0 0
  %105 = vmatpush2.bf16.msra.mxu0 0
  %106 = vmatprep.subr.bf16.mxu0 0
  %107 = vmatpush2.bf16.msra.mxu0 0
  %108 = vmatprep.subr.bf16.mxu0 0
  %109 = vmatpush2.bf16.msra.mxu0 0
  %110 = vmatprep.subr.bf16.mxu0 0
  %111 = vmatpush2.bf16.msra.mxu0 0
  %112 = vmatprep.subr.bf16.mxu0 0
  %113 = vmatpush2.bf16.msra.mxu0 0
  %114 = vmatprep.subr.bf16.mxu0 0
  %115 = vmatpush2.bf16.msra.mxu0 0
  %116 = vmatprep.subr.bf16.mxu0 0
  %117 = vmatpush2.bf16.msra.mxu0 0
  %118 = vmatprep.mubr.bf16.mxu0 0
  %119 = vmatmul.mubr.bf16.gmra.mxu0 %v84
  %v120 = vpop.f32.mrf.mxu0
  %v121 = vadd.f32 0.0, %v120
  %v122 = vpop.f32.mrf.mxu0
  %v123 = vpop.f32.mrf.mxu0
  %v124 = vpop.f32.mrf.mxu0
  %125 = vdwg.mxu0
  %v126 = vadd.f32 %v63, %v121
  %v127 = vxor.u32 %v126, 2147483648
  %v128 = vmul.f32 %v127, 1.442695
  %v129 = vpow.pop %v128
  %v130 = vadd.f32 %v129, 1.0
  %v131 = vrcp.pop %v130
  %v132 = vmul.f32 1.0, %v131
  %v133 = vtanh.pop %v126
  %v134 = vld [vmem:[#allocation3] sm:$0x3]
  %136 = vrot.lane.b32.xlu0 %v134, 32
  %v137 = vpop.permute.xlu0 %136
  %v139 = vmul.f32 %v132, %v137
  %141 = vrot.lane.b32.xlu0 %v133, 64
  %v142 = vpop.permute.xlu0 %141
  %v144 = vmul.f32 %v132, %v142
  %146 = vrot.lane.b32.xlu0 %v144, 32
  %v147 = vpop.permute.xlu0 %146
  %v149 = vadd.f32 %v139, %v147
  %v150 = vtanh.pop %v149
  %152 = vrot.lane.b32.xlu0 %v150, 64
  %v153 = vpop.permute.xlu0 %152
  %v155 = vmul.f32 %v132, %v153
  %157 = vrot.lane.b32.xlu0 %v155, 32
  %v158 = vpop.permute.xlu0 %157
  %vm160 = vcmask 254976
  %161 = vst.msk [vmem:[#allocation2] sm:$0x3] %vm160, %v158
  %163 = vrot.lane.b32.xlu0 %v149, 96
  %v164 = vpop.permute.xlu0 %163
  %166 = vst.msk [vmem:[#allocation3] sm:$0x3] %vm160, %v164
  %v167 = vpack.c.bf16 %v155, %v155
  %v170 = vunpack.c.l.s4 1966171168
  %v171 = vunpack.c.0.s8 %v170
  %v172 = vlaneseq
  %v173 = vshrl.u32 %v172, 7
  %v174 = vsub.s32 %v171, %v173
  %v175 = vrot.slane %v167, %v174
  %v177 = vunpack.c.l.s4 1966171168
  %v178 = vunpack.c.0.s8 %v177
  %v179 = vlaneseq
  %v180 = vshrl.u32 %v179, 7
  %v181 = vsub.s32 %v178, %v180
  %v182 = vrot.slane %v175, %v181
  %183 = vrot.lane.b32.xlu0 %v182, 32
  %v184 = vpop.permute.xlu0 %183
  %vm186 = vcmask 253952
  %187 = vst.msk [vmem:[%s4] sm:$0x1] %vm186, %v184
  %s188 = scalar_lea.vmem %s43, 14
  %v189 = vld [vmem:[%s188] sm:$0x3]
  %v190 = vld [vmem:[#allocation4] sm:$0x3]
  %v191 = vpack.c.bf16 %v190, %v190
  %v192 = vld [vmem:[%s3] sm:$0xf]
  %v193 = vld [vmem:[%s3 + $0x4] sm:$0xf]
  %v194 = vld [vmem:[%s3 + $0x8] sm:$0xf]
  %v195 = vld [vmem:[%s3 + $0xc] sm:$0xf]
  %v200 = vunpack.c.l.b16 %v192
  %v201 = vunpack.c.l.b16 %v193
  %v202 = vunpack.c.l.b16 %v194
  %v203 = vunpack.c.l.b16 %v195
  %v204 = vpack.c.b16 %v201, %v200
  %v205 = vpack.c.b16 %v203, %v202
  %v209 = vsel %vm82, %v191, 0
  %211 = vmatprep.subr.bf16.mxu0 0
  %212 = vmatpush1.bf16.msra.mxu0 0
  %213 = vmatprep.subr.bf16.mxu0 0
  %214 = vmatpush1.bf16.msra.mxu0 0
  %215 = vmatprep.subr.bf16.mxu0 0
  %216 = vmatpush1.bf16.msra.mxu0 0
  %217 = vmatprep.subr.bf16.mxu0 0
  %218 = vmatpush1.bf16.msra.mxu0 0
  %219 = vmatprep.subr.bf16.mxu0 0
  %220 = vmatpush1.bf16.msra.mxu0 0
  %221 = vmatprep.subr.bf16.mxu0 0
  %222 = vmatpush1.bf16.msra.mxu0 0
  %223 = vmatprep.subr.bf16.mxu0 0
  %224 = vmatpush1.bf16.msra.mxu0 %v205
  %225 = vmatprep.subr.bf16.mxu0 0
  %226 = vmatpush1.bf16.msra.mxu0 %v204
  %227 = vmatprep.subr.bf16.mxu0 0
  %228 = vmatpush2.bf16.msra.mxu0 0
  %229 = vmatprep.subr.bf16.mxu0 0
  %230 = vmatpush2.bf16.msra.mxu0 0
  %231 = vmatprep.subr.bf16.mxu0 0
  %232 = vmatpush2.bf16.msra.mxu0 0
  %233 = vmatprep.subr.bf16.mxu0 0
  %234 = vmatpush2.bf16.msra.mxu0 0
  %235 = vmatprep.subr.bf16.mxu0 0
  %236 = vmatpush2.bf16.msra.mxu0 0
  %237 = vmatprep.subr.bf16.mxu0 0
  %238 = vmatpush2.bf16.msra.mxu0 0
  %239 = vmatprep.subr.bf16.mxu0 0
  %240 = vmatpush2.bf16.msra.mxu0 0
  %241 = vmatprep.subr.bf16.mxu0 0
  %242 = vmatpush2.bf16.msra.mxu0 0
  %243 = vmatprep.mubr.bf16.mxu0 0
  %244 = vmatmul.mubr.bf16.gmra.mxu0 %v209
  %v245 = vpop.f32.mrf.mxu0
  %v246 = vadd.f32 0.0, %v245
  %v247 = vpop.f32.mrf.mxu0
  %v248 = vpop.f32.mrf.mxu0
  %v249 = vpop.f32.mrf.mxu0
  %250 = vdwg.mxu0
  %v251 = vadd.f32 %v189, %v246
  %v252 = vxor.u32 %v251, 2147483648
  %v253 = vmul.f32 %v252, 1.442695
  %v254 = vpow.pop %v253
  %v255 = vadd.f32 %v254, 1.0
  %v256 = vrcp.pop %v255
  %v257 = vmul.f32 1.0, %v256
  %v258 = vtanh.pop %v251
  %v259 = vld [vmem:[#allocation5] sm:$0x3]
  %261 = vrot.lane.b32.xlu0 %v259, 32
  %v262 = vpop.permute.xlu0 %261
  %v264 = vmul.f32 %v257, %v262
  %266 = vrot.lane.b32.xlu0 %v258, 64
  %v267 = vpop.permute.xlu0 %266
  %v269 = vmul.f32 %v257, %v267
  %271 = vrot.lane.b32.xlu0 %v269, 32
  %v272 = vpop.permute.xlu0 %271
  %v274 = vadd.f32 %v264, %v272
  %v275 = vtanh.pop %v274
  %277 = vrot.lane.b32.xlu0 %v275, 64
  %v278 = vpop.permute.xlu0 %277
  %v280 = vmul.f32 %v257, %v278
  %282 = vrot.lane.b32.xlu0 %v280, 32
  %v283 = vpop.permute.xlu0 %282
  %285 = vst.msk [vmem:[#allocation4] sm:$0x3] %vm160, %v283
  %287 = vrot.lane.b32.xlu0 %v274, 96
  %v288 = vpop.permute.xlu0 %287
  %290 = vst.msk [vmem:[#allocation5] sm:$0x3] %vm160, %v288
  %v291 = vpack.c.bf16 %v280, %v280
  %v294 = vunpack.c.l.s4 1966171168
  %v295 = vunpack.c.0.s8 %v294
  %v296 = vlaneseq
  %v297 = vshrl.u32 %v296, 7
  %v298 = vsub.s32 %v295, %v297
  %v299 = vrot.slane %v291, %v298
  %v301 = vunpack.c.l.s4 1966171168
  %v302 = vunpack.c.0.s8 %v301
  %v303 = vlaneseq
  %v304 = vshrl.u32 %v303, 7
  %v305 = vsub.s32 %v302, %v304
  %v306 = vrot.slane %v299, %v305
  %307 = vrot.lane.b32.xlu0 %v306, 32
  %v308 = vpop.permute.xlu0 %307
  %s310 = scalar_lea.vmem %s50, 7
  %311 = vst.msk [vmem:[%s310] sm:$0x1] %vm186, %v308
  %s312 = scalar_lea.vmem %s0, 2
  %v313 = vld [vmem:[%s312] sm:$0x3]
  %v314 = vld [vmem:[#allocation2] sm:$0x3]
  %v315 = vpack.c.bf16 %v314, %v314
  %v316 = vld [vmem:[%s2] sm:$0xf]
  %v317 = vld [vmem:[%s2 + $0x4] sm:$0xf]
  %v318 = vld [vmem:[%s2 + $0x8] sm:$0xf]
  %v319 = vld [vmem:[%s2 + $0xc] sm:$0xf]
  %v324 = vunpack.c.l.b16 %v316
  %v325 = vunpack.c.l.b16 %v317
  %v326 = vunpack.c.l.b16 %v318
  %v327 = vunpack.c.l.b16 %v319
  %v328 = vpack.c.b16 %v325, %v324
  %v329 = vpack.c.b16 %v327, %v326
  %v333 = vsel %vm82, %v315, 0
  %335 = vmatprep.subr.bf16.mxu0 0
  %336 = vmatpush1.bf16.msra.mxu0 0
  %337 = vmatprep.subr.bf16.mxu0 0
  %338 = vmatpush1.bf16.msra.mxu0 0
  %339 = vmatprep.subr.bf16.mxu0 0
  %340 = vmatpush1.bf16.msra.mxu0 0
  %341 = vmatprep.subr.bf16.mxu0 0
  %342 = vmatpush1.bf16.msra.mxu0 0
  %343 = vmatprep.subr.bf16.mxu0 0
  %344 = vmatpush1.bf16.msra.mxu0 0
  %345 = vmatprep.subr.bf16.mxu0 0
  %346 = vmatpush1.bf16.msra.mxu0 0
  %347 = vmatprep.subr.bf16.mxu0 0
  %348 = vmatpush1.bf16.msra.mxu0 %v329
  %349 = vmatprep.subr.bf16.mxu0 0
  %350 = vmatpush1.bf16.msra.mxu0 %v328
  %351 = vmatprep.subr.bf16.mxu0 0
  %352 = vmatpush2.bf16.msra.mxu0 0
  %353 = vmatprep.subr.bf16.mxu0 0
  %354 = vmatpush2.bf16.msra.mxu0 0
  %355 = vmatprep.subr.bf16.mxu0 0
  %356 = vmatpush2.bf16.msra.mxu0 0
  %357 = vmatprep.subr.bf16.mxu0 0
  %358 = vmatpush2.bf16.msra.mxu0 0
  %359 = vmatprep.subr.bf16.mxu0 0
  %360 = vmatpush2.bf16.msra.mxu0 0
  %361 = vmatprep.subr.bf16.mxu0 0
  %362 = vmatpush2.bf16.msra.mxu0 0
  %363 = vmatprep.subr.bf16.mxu0 0
  %364 = vmatpush2.bf16.msra.mxu0 0
  %365 = vmatprep.subr.bf16.mxu0 0
  %366 = vmatpush2.bf16.msra.mxu0 0
  %367 = vmatprep.mubr.bf16.mxu0 0
  %368 = vmatmul.mubr.bf16.gmra.mxu0 %v333
  %v369 = vpop.f32.mrf.mxu0
  %v370 = vadd.f32 0.0, %v369
  %v371 = vpop.f32.mrf.mxu0
  %v372 = vpop.f32.mrf.mxu0
  %v373 = vpop.f32.mrf.mxu0
  %374 = vdwg.mxu0
  %v375 = vadd.f32 %v313, %v370
  %v376 = vxor.u32 %v375, 2147483648
  %v377 = vmul.f32 %v376, 1.442695
  %v378 = vpow.pop %v377
  %v379 = vadd.f32 %v378, 1.0
  %v380 = vrcp.pop %v379
  %v381 = vmul.f32 1.0, %v380
  %v382 = vtanh.pop %v375
  %v383 = vld [vmem:[#allocation3] sm:$0x3]
  %385 = vrot.lane.b32.xlu0 %v383, 32
  %v386 = vpop.permute.xlu0 %385
  %v388 = vmul.f32 %v381, %v386
  %390 = vrot.lane.b32.xlu0 %v382, 64
  %v391 = vpop.permute.xlu0 %390
  %v393 = vmul.f32 %v381, %v391
  %395 = vrot.lane.b32.xlu0 %v393, 32
  %v396 = vpop.permute.xlu0 %395
  %v398 = vadd.f32 %v388, %v396
  %v399 = vtanh.pop %v398
  %401 = vrot.lane.b32.xlu0 %v399, 64
  %v402 = vpop.permute.xlu0 %401
  %v404 = vmul.f32 %v381, %v402
  %406 = vrot.lane.b32.xlu0 %v404, 32
  %v407 = vpop.permute.xlu0 %406
  %409 = vst.msk [vmem:[#allocation2] sm:$0x3] %vm160, %v407
  %411 = vrot.lane.b32.xlu0 %v398, 96
  %v412 = vpop.permute.xlu0 %411
  %414 = vst.msk [vmem:[#allocation3] sm:$0x3] %vm160, %v412
  %v415 = vpack.c.bf16 %v404, %v404
  %v418 = vunpack.c.l.s4 1966171168
  %v419 = vunpack.c.0.s8 %v418
  %v420 = vlaneseq
  %v421 = vshrl.u32 %v420, 7
  %v422 = vsub.s32 %v419, %v421
  %v423 = vrot.slane %v415, %v422
  %v425 = vunpack.c.l.s4 1966171168
  %v426 = vunpack.c.0.s8 %v425
  %v427 = vlaneseq
  %v428 = vshrl.u32 %v427, 7
  %v429 = vsub.s32 %v426, %v428
  %v430 = vrot.slane %v423, %v429
  %431 = vrot.lane.b32.xlu0 %v430, 32
  %v432 = vpop.permute.xlu0 %431
  %s434 = scalar_lea.vmem %s4, 1
  %435 = vst.msk [vmem:[%s434] sm:$0x1] %vm186, %v432
  %s436 = scalar_lea.vmem %s43, 12
  %v437 = vld [vmem:[%s436] sm:$0x3]
  %v438 = vld [vmem:[#allocation4] sm:$0x3]
  %v439 = vpack.c.bf16 %v438, %v438
  %v440 = vld [vmem:[%s3] sm:$0xf]
  %v441 = vld [vmem:[%s3 + $0x4] sm:$0xf]
  %v442 = vld [vmem:[%s3 + $0x8] sm:$0xf]
  %v443 = vld [vmem:[%s3 + $0xc] sm:$0xf]
  %v448 = vunpack.c.l.b16 %v440
  %v449 = vunpack.c.l.b16 %v441
  %v450 = vunpack.c.l.b16 %v442
  %v451 = vunpack.c.l.b16 %v443
  %v452 = vpack.c.b16 %v449, %v448
  %v453 = vpack.c.b16 %v451, %v450
  %v457 = vsel %vm82, %v439, 0
  %459 = vmatprep.subr.bf16.mxu0 0
  %460 = vmatpush1.bf16.msra.mxu0 0
  %461 = vmatprep.subr.bf16.mxu0 0
  %462 = vmatpush1.bf16.msra.mxu0 0
  %463 = vmatprep.subr.bf16.mxu0 0
  %464 = vmatpush1.bf16.msra.mxu0 0
  %465 = vmatprep.subr.bf16.mxu0 0
  %466 = vmatpush1.bf16.msra.mxu0 0
  %467 = vmatprep.subr.bf16.mxu0 0
  %468 = vmatpush1.bf16.msra.mxu0 0
  %469 = vmatprep.subr.bf16.mxu0 0
  %470 = vmatpush1.bf16.msra.mxu0 0
  %471 = vmatprep.subr.bf16.mxu0 0
  %472 = vmatpush1.bf16.msra.mxu0 %v453
  %473 = vmatprep.subr.bf16.mxu0 0
  %474 = vmatpush1.bf16.msra.mxu0 %v452
  %475 = vmatprep.subr.bf16.mxu0 0
  %476 = vmatpush2.bf16.msra.mxu0 0
  %477 = vmatprep.subr.bf16.mxu0 0
  %478 = vmatpush2.bf16.msra.mxu0 0
  %479 = vmatprep.subr.bf16.mxu0 0
  %480 = vmatpush2.bf16.msra.mxu0 0
  %481 = vmatprep.subr.bf16.mxu0 0
  %482 = vmatpush2.bf16.msra.mxu0 0
  %483 = vmatprep.subr.bf16.mxu0 0
  %484 = vmatpush2.bf16.msra.mxu0 0
  %485 = vmatprep.subr.bf16.mxu0 0
  %486 = vmatpush2.bf16.msra.mxu0 0
  %487 = vmatprep.subr.bf16.mxu0 0
  %488 = vmatpush2.bf16.msra.mxu0 0
  %489 = vmatprep.subr.bf16.mxu0 0
  %490 = vmatpush2.bf16.msra.mxu0 0
  %491 = vmatprep.mubr.bf16.mxu0 0
  %492 = vmatmul.mubr.bf16.gmra.mxu0 %v457
  %v493 = vpop.f32.mrf.mxu0
  %v494 = vadd.f32 0.0, %v493
  %v495 = vpop.f32.mrf.mxu0
  %v496 = vpop.f32.mrf.mxu0
  %v497 = vpop.f32.mrf.mxu0
  %498 = vdwg.mxu0
  %v499 = vadd.f32 %v437, %v494
  %v500 = vxor.u32 %v499, 2147483648
  %v501 = vmul.f32 %v500, 1.442695
  %v502 = vpow.pop %v501
  %v503 = vadd.f32 %v502, 1.0
  %v504 = vrcp.pop %v503
  %v505 = vmul.f32 1.0, %v504
  %v506 = vtanh.pop %v499
  %v507 = vld [vmem:[#allocation5] sm:$0x3]
  %509 = vrot.lane.b32.xlu0 %v507, 32
  %v510 = vpop.permute.xlu0 %509
  %v512 = vmul.f32 %v505, %v510
  %514 = vrot.lane.b32.xlu0 %v506, 64
  %v515 = vpop.permute.xlu0 %514
  %v517 = vmul.f32 %v505, %v515
  %519 = vrot.lane.b32.xlu0 %v517, 32
  %v520 = vpop.permute.xlu0 %519
  %v522 = vadd.f32 %v512, %v520
  %v523 = vtanh.pop %v522
  %525 = vrot.lane.b32.xlu0 %v523, 64
  %v526 = vpop.permute.xlu0 %525
  %v528 = vmul.f32 %v505, %v526
  %530 = vrot.lane.b32.xlu0 %v528, 32
  %v531 = vpop.permute.xlu0 %530
  %533 = vst.msk [vmem:[#allocation4] sm:$0x3] %vm160, %v531
  %535 = vrot.lane.b32.xlu0 %v522, 96
  %v536 = vpop.permute.xlu0 %535
  %538 = vst.msk [vmem:[#allocation5] sm:$0x3] %vm160, %v536
  %v539 = vpack.c.bf16 %v528, %v528
  %v542 = vunpack.c.l.s4 1966171168
  %v543 = vunpack.c.0.s8 %v542
  %v544 = vlaneseq
  %v545 = vshrl.u32 %v544, 7
  %v546 = vsub.s32 %v543, %v545
  %v547 = vrot.slane %v539, %v546
  %v549 = vunpack.c.l.s4 1966171168
  %v550 = vunpack.c.0.s8 %v549
  %v551 = vlaneseq
  %v552 = vshrl.u32 %v551, 7
  %v553 = vsub.s32 %v550, %v552
  %v554 = vrot.slane %v547, %v553
  %555 = vrot.lane.b32.xlu0 %v554, 32
  %v556 = vpop.permute.xlu0 %555
  %s558 = scalar_lea.vmem %s50, 6
  %559 = vst.msk [vmem:[%s558] sm:$0x1] %vm186, %v556
  %s560 = scalar_lea.vmem %s0, 4
  %v561 = vld [vmem:[%s560] sm:$0x3]
  %v562 = vld [vmem:[#allocation2] sm:$0x3]
  %v563 = vpack.c.bf16 %v562, %v562
  %v564 = vld [vmem:[%s2] sm:$0xf]
  %v565 = vld [vmem:[%s2 + $0x4] sm:$0xf]
  %v566 = vld [vmem:[%s2 + $0x8] sm:$0xf]
  %v567 = vld [vmem:[%s2 + $0xc] sm:$0xf]
  %v572 = vunpack.c.l.b16 %v564
  %v573 = vunpack.c.l.b16 %v565
  %v574 = vunpack.c.l.b16 %v566
  %v575 = vunpack.c.l.b16 %v567
  %v576 = vpack.c.b16 %v573, %v572
  %v577 = vpack.c.b16 %v575, %v574
  %v581 = vsel %vm82, %v563, 0
  %583 = vmatprep.subr.bf16.mxu0 0
  %584 = vmatpush1.bf16.msra.mxu0 0
  %585 = vmatprep.subr.bf16.mxu0 0
  %586 = vmatpush1.bf16.msra.mxu0 0
  %587 = vmatprep.subr.bf16.mxu0 0
  %588 = vmatpush1.bf16.msra.mxu0 0
  %589 = vmatprep.subr.bf16.mxu0 0
  %590 = vmatpush1.bf16.msra.mxu0 0
  %591 = vmatprep.subr.bf16.mxu0 0
  %592 = vmatpush1.bf16.msra.mxu0 0
  %593 = vmatprep.subr.bf16.mxu0 0
  %594 = vmatpush1.bf16.msra.mxu0 0
  %595 = vmatprep.subr.bf16.mxu0 0
  %596 = vmatpush1.bf16.msra.mxu0 %v577
  %597 = vmatprep.subr.bf16.mxu0 0
  %598 = vmatpush1.bf16.msra.mxu0 %v576
  %599 = vmatprep.subr.bf16.mxu0 0
  %600 = vmatpush2.bf16.msra.mxu0 0
  %601 = vmatprep.subr.bf16.mxu0 0
  %602 = vmatpush2.bf16.msra.mxu0 0
  %603 = vmatprep.subr.bf16.mxu0 0
  %604 = vmatpush2.bf16.msra.mxu0 0
  %605 = vmatprep.subr.bf16.mxu0 0
  %606 = vmatpush2.bf16.msra.mxu0 0
  %607 = vmatprep.subr.bf16.mxu0 0
  %608 = vmatpush2.bf16.msra.mxu0 0
  %609 = vmatprep.subr.bf16.mxu0 0
  %610 = vmatpush2.bf16.msra.mxu0 0
  %611 = vmatprep.subr.bf16.mxu0 0
  %612 = vmatpush2.bf16.msra.mxu0 0
  %613 = vmatprep.subr.bf16.mxu0 0
  %614 = vmatpush2.bf16.msra.mxu0 0
  %615 = vmatprep.mubr.bf16.mxu0 0
  %616 = vmatmul.mubr.bf16.gmra.mxu0 %v581
  %v617 = vpop.f32.mrf.mxu0
  %v618 = vadd.f32 0.0, %v617
  %v619 = vpop.f32.mrf.mxu0
  %v620 = vpop.f32.mrf.mxu0
  %v621 = vpop.f32.mrf.mxu0
  %622 = vdwg.mxu0
  %v623 = vadd.f32 %v561, %v618
  %v624 = vxor.u32 %v623, 2147483648
  %v625 = vmul.f32 %v624, 1.442695
  %v626 = vpow.pop %v625
  %v627 = vadd.f32 %v626, 1.0
  %v628 = vrcp.pop %v627
  %v629 = vmul.f32 1.0, %v628
  %v630 = vtanh.pop %v623
  %v631 = vld [vmem:[#allocation3] sm:$0x3]
  %633 = vrot.lane.b32.xlu0 %v631, 32
  %v634 = vpop.permute.xlu0 %633
  %v636 = vmul.f32 %v629, %v634
  %638 = vrot.lane.b32.xlu0 %v630, 64
  %v639 = vpop.permute.xlu0 %638
  %v641 = vmul.f32 %v629, %v639
  %643 = vrot.lane.b32.xlu0 %v641, 32
  %v644 = vpop.permute.xlu0 %643
  %v646 = vadd.f32 %v636, %v644
  %v647 = vtanh.pop %v646
  %649 = vrot.lane.b32.xlu0 %v647, 64
  %v650 = vpop.permute.xlu0 %649
  %v652 = vmul.f32 %v629, %v650
  %654 = vrot.lane.b32.xlu0 %v652, 32
  %v655 = vpop.permute.xlu0 %654
  %657 = vst.msk [vmem:[#allocation2] sm:$0x3] %vm160, %v655
  %659 = vrot.lane.b32.xlu0 %v646, 96
  %v660 = vpop.permute.xlu0 %659
  %662 = vst.msk [vmem:[#allocation3] sm:$0x3] %vm160, %v660
  %v663 = vpack.c.bf16 %v652, %v652
  %v666 = vunpack.c.l.s4 1966171168
  %v667 = vunpack.c.0.s8 %v666
  %v668 = vlaneseq
  %v669 = vshrl.u32 %v668, 7
  %v670 = vsub.s32 %v667, %v669
  %v671 = vrot.slane %v663, %v670
  %v673 = vunpack.c.l.s4 1966171168
  %v674 = vunpack.c.0.s8 %v673
  %v675 = vlaneseq
  %v676 = vshrl.u32 %v675, 7
  %v677 = vsub.s32 %v674, %v676
  %v678 = vrot.slane %v671, %v677
  %679 = vrot.lane.b32.xlu0 %v678, 32
  %v680 = vpop.permute.xlu0 %679
  %s682 = scalar_lea.vmem %s4, 2
  %683 = vst.msk [vmem:[%s682] sm:$0x1] %vm186, %v680
  %s684 = scalar_lea.vmem %s43, 10
  %v685 = vld [vmem:[%s684] sm:$0x3]
  %v686 = vld [vmem:[#allocation4] sm:$0x3]
  %v687 = vpack.c.bf16 %v686, %v686
  %v688 = vld [vmem:[%s3] sm:$0xf]
  %v689 = vld [vmem:[%s3 + $0x4] sm:$0xf]
  %v690 = vld [vmem:[%s3 + $0x8] sm:$0xf]
  %v691 = vld [vmem:[%s3 + $0xc] sm:$0xf]
  %v696 = vunpack.c.l.b16 %v688
  %v697 = vunpack.c.l.b16 %v689
  %v698 = vunpack.c.l.b16 %v690
  %v699 = vunpack.c.l.b16 %v691
  %v700 = vpack.c.b16 %v697, %v696
  %v701 = vpack.c.b16 %v699, %v698
  %v705 = vsel %vm82, %v687, 0
  %707 = vmatprep.subr.bf16.mxu0 0
  %708 = vmatpush1.bf16.msra.mxu0 0
  %709 = vmatprep.subr.bf16.mxu0 0
  %710 = vmatpush1.bf16.msra.mxu0 0
  %711 = vmatprep.subr.bf16.mxu0 0
  %712 = vmatpush1.bf16.msra.mxu0 0
  %713 = vmatprep.subr.bf16.mxu0 0
  %714 = vmatpush1.bf16.msra.mxu0 0
  %715 = vmatprep.subr.bf16.mxu0 0
  %716 = vmatpush1.bf16.msra.mxu0 0
  %717 = vmatprep.subr.bf16.mxu0 0
  %718 = vmatpush1.bf16.msra.mxu0 0
  %719 = vmatprep.subr.bf16.mxu0 0
  %720 = vmatpush1.bf16.msra.mxu0 %v701
  %721 = vmatprep.subr.bf16.mxu0 0
  %722 = vmatpush1.bf16.msra.mxu0 %v700
  %723 = vmatprep.subr.bf16.mxu0 0
  %724 = vmatpush2.bf16.msra.mxu0 0
  %725 = vmatprep.subr.bf16.mxu0 0
  %726 = vmatpush2.bf16.msra.mxu0 0
  %727 = vmatprep.subr.bf16.mxu0 0
  %728 = vmatpush2.bf16.msra.mxu0 0
  %729 = vmatprep.subr.bf16.mxu0 0
  %730 = vmatpush2.bf16.msra.mxu0 0
  %731 = vmatprep.subr.bf16.mxu0 0
  %732 = vmatpush2.bf16.msra.mxu0 0
  %733 = vmatprep.subr.bf16.mxu0 0
  %734 = vmatpush2.bf16.msra.mxu0 0
  %735 = vmatprep.subr.bf16.mxu0 0
  %736 = vmatpush2.bf16.msra.mxu0 0
  %737 = vmatprep.subr.bf16.mxu0 0
  %738 = vmatpush2.bf16.msra.mxu0 0
  %739 = vmatprep.mubr.bf16.mxu0 0
  %740 = vmatmul.mubr.bf16.gmra.mxu0 %v705
  %v741 = vpop.f32.mrf.mxu0
  %v742 = vadd.f32 0.0, %v741
  %v743 = vpop.f32.mrf.mxu0
  %v744 = vpop.f32.mrf.mxu0
  %v745 = vpop.f32.mrf.mxu0
  %746 = vdwg.mxu0
  %v747 = vadd.f32 %v685, %v742
  %v748 = vxor.u32 %v747, 2147483648
  %v749 = vmul.f32 %v748, 1.442695
  %v750 = vpow.pop %v749
  %v751 = vadd.f32 %v750, 1.0
  %v752 = vrcp.pop %v751
  %v753 = vmul.f32 1.0, %v752
  %v754 = vtanh.pop %v747
  %v755 = vld [vmem:[#allocation5] sm:$0x3]
  %757 = vrot.lane.b32.xlu0 %v755, 32
  %v758 = vpop.permute.xlu0 %757
  %v760 = vmul.f32 %v753, %v758
  %762 = vrot.lane.b32.xlu0 %v754, 64
  %v763 = vpop.permute.xlu0 %762
  %v765 = vmul.f32 %v753, %v763
  %767 = vrot.lane.b32.xlu0 %v765, 32
  %v768 = vpop.permute.xlu0 %767
  %v770 = vadd.f32 %v760, %v768
  %v771 = vtanh.pop %v770
  %773 = vrot.lane.b32.xlu0 %v771, 64
  %v774 = vpop.permute.xlu0 %773
  %v776 = vmul.f32 %v753, %v774
  %778 = vrot.lane.b32.xlu0 %v776, 32
  %v779 = vpop.permute.xlu0 %778
  %781 = vst.msk [vmem:[#allocation4] sm:$0x3] %vm160, %v779
  %783 = vrot.lane.b32.xlu0 %v770, 96
  %v784 = vpop.permute.xlu0 %783
  %786 = vst.msk [vmem:[#allocation5] sm:$0x3] %vm160, %v784
  %v787 = vpack.c.bf16 %v776, %v776
  %v790 = vunpack.c.l.s4 1966171168
  %v791 = vunpack.c.0.s8 %v790
  %v792 = vlaneseq
  %v793 = vshrl.u32 %v792, 7
  %v794 = vsub.s32 %v791, %v793
  %v795 = vrot.slane %v787, %v794
  %v797 = vunpack.c.l.s4 1966171168
  %v798 = vunpack.c.0.s8 %v797
  %v799 = vlaneseq
  %v800 = vshrl.u32 %v799, 7
  %v801 = vsub.s32 %v798, %v800
  %v802 = vrot.slane %v795, %v801
  %803 = vrot.lane.b32.xlu0 %v802, 32
  %v804 = vpop.permute.xlu0 %803
  %s806 = scalar_lea.vmem %s50, 5
  %807 = vst.msk [vmem:[%s806] sm:$0x1] %vm186, %v804
  %s808 = scalar_lea.vmem %s0, 6
  %v809 = vld [vmem:[%s808] sm:$0x3]
  %v810 = vld [vmem:[#allocation2] sm:$0x3]
  %v811 = vpack.c.bf16 %v810, %v810
  %v812 = vld [vmem:[%s2] sm:$0xf]
  %v813 = vld [vmem:[%s2 + $0x4] sm:$0xf]
  %v814 = vld [vmem:[%s2 + $0x8] sm:$0xf]
  %v815 = vld [vmem:[%s2 + $0xc] sm:$0xf]
  %v820 = vunpack.c.l.b16 %v812
  %v821 = vunpack.c.l.b16 %v813
  %v822 = vunpack.c.l.b16 %v814
  %v823 = vunpack.c.l.b16 %v815
  %v824 = vpack.c.b16 %v821, %v820
  %v825 = vpack.c.b16 %v823, %v822
  %v829 = vsel %vm82, %v811, 0
  %831 = vmatprep.subr.bf16.mxu0 0
  %832 = vmatpush1.bf16.msra.mxu0 0
  %833 = vmatprep.subr.bf16.mxu0 0
  %834 = vmatpush1.bf16.msra.mxu0 0
  %835 = vmatprep.subr.bf16.mxu0 0
  %836 = vmatpush1.bf16.msra.mxu0 0
  %837 = vmatprep.subr.bf16.mxu0 0
  %838 = vmatpush1.bf16.msra.mxu0 0
  %839 = vmatprep.subr.bf16.mxu0 0
  %840 = vmatpush1.bf16.msra.mxu0 0
  %841 = vmatprep.subr.bf16.mxu0 0
  %842 = vmatpush1.bf16.msra.mxu0 0
  %843 = vmatprep.subr.bf16.mxu0 0
  %844 = vmatpush1.bf16.msra.mxu0 %v825
  %845 = vmatprep.subr.bf16.mxu0 0
  %846 = vmatpush1.bf16.msra.mxu0 %v824
  %847 = vmatprep.subr.bf16.mxu0 0
  %848 = vmatpush2.bf16.msra.mxu0 0
  %849 = vmatprep.subr.bf16.mxu0 0
  %850 = vmatpush2.bf16.msra.mxu0 0
  %851 = vmatprep.subr.bf16.mxu0 0
  %852 = vmatpush2.bf16.msra.mxu0 0
  %853 = vmatprep.subr.bf16.mxu0 0
  %854 = vmatpush2.bf16.msra.mxu0 0
  %855 = vmatprep.subr.bf16.mxu0 0
  %856 = vmatpush2.bf16.msra.mxu0 0
  %857 = vmatprep.subr.bf16.mxu0 0
  %858 = vmatpush2.bf16.msra.mxu0 0
  %859 = vmatprep.subr.bf16.mxu0 0
  %860 = vmatpush2.bf16.msra.mxu0 0
  %861 = vmatprep.subr.bf16.mxu0 0
  %862 = vmatpush2.bf16.msra.mxu0 0
  %863 = vmatprep.mubr.bf16.mxu0 0
  %864 = vmatmul.mubr.bf16.gmra.mxu0 %v829
  %v865 = vpop.f32.mrf.mxu0
  %v866 = vadd.f32 0.0, %v865
  %v867 = vpop.f32.mrf.mxu0
  %v868 = vpop.f32.mrf.mxu0
  %v869 = vpop.f32.mrf.mxu0
  %870 = vdwg.mxu0
  %v871 = vadd.f32 %v809, %v866
  %v872 = vxor.u32 %v871, 2147483648
  %v873 = vmul.f32 %v872, 1.442695
  %v874 = vpow.pop %v873
  %v875 = vadd.f32 %v874, 1.0
  %v876 = vrcp.pop %v875
  %v877 = vmul.f32 1.0, %v876
  %v878 = vtanh.pop %v871
  %v879 = vld [vmem:[#allocation3] sm:$0x3]
  %881 = vrot.lane.b32.xlu0 %v879, 32
  %v882 = vpop.permute.xlu0 %881
  %v884 = vmul.f32 %v877, %v882
  %886 = vrot.lane.b32.xlu0 %v878, 64
  %v887 = vpop.permute.xlu0 %886
  %v889 = vmul.f32 %v877, %v887
  %891 = vrot.lane.b32.xlu0 %v889, 32
  %v892 = vpop.permute.xlu0 %891
  %v894 = vadd.f32 %v884, %v892
  %v895 = vtanh.pop %v894
  %897 = vrot.lane.b32.xlu0 %v895, 64
  %v898 = vpop.permute.xlu0 %897
  %v900 = vmul.f32 %v877, %v898
  %902 = vrot.lane.b32.xlu0 %v900, 32
  %v903 = vpop.permute.xlu0 %902
  %905 = vst.msk [vmem:[#allocation2] sm:$0x3] %vm160, %v903
  %907 = vrot.lane.b32.xlu0 %v894, 96
  %v908 = vpop.permute.xlu0 %907
  %910 = vst.msk [vmem:[#allocation3] sm:$0x3] %vm160, %v908
  %v911 = vpack.c.bf16 %v900, %v900
  %v914 = vunpack.c.l.s4 1966171168
  %v915 = vunpack.c.0.s8 %v914
  %v916 = vlaneseq
  %v917 = vshrl.u32 %v916, 7
  %v918 = vsub.s32 %v915, %v917
  %v919 = vrot.slane %v911, %v918
  %v921 = vunpack.c.l.s4 1966171168
  %v922 = vunpack.c.0.s8 %v921
  %v923 = vlaneseq
  %v924 = vshrl.u32 %v923, 7
  %v925 = vsub.s32 %v922, %v924
  %v926 = vrot.slane %v919, %v925
  %927 = vrot.lane.b32.xlu0 %v926, 32
  %v928 = vpop.permute.xlu0 %927
  %s930 = scalar_lea.vmem %s4, 3
  %931 = vst.msk [vmem:[%s930] sm:$0x1] %vm186, %v928
  %s932 = scalar_lea.vmem %s43, 8
  %v933 = vld [vmem:[%s932] sm:$0x3]
  %v934 = vld [vmem:[#allocation4] sm:$0x3]
  %v935 = vpack.c.bf16 %v934, %v934
  %v936 = vld [vmem:[%s3] sm:$0xf]
  %v937 = vld [vmem:[%s3 + $0x4] sm:$0xf]
  %v938 = vld [vmem:[%s3 + $0x8] sm:$0xf]
  %v939 = vld [vmem:[%s3 + $0xc] sm:$0xf]
  %v944 = vunpack.c.l.b16 %v936
  %v945 = vunpack.c.l.b16 %v937
  %v946 = vunpack.c.l.b16 %v938
  %v947 = vunpack.c.l.b16 %v939
  %v948 = vpack.c.b16 %v945, %v944
  %v949 = vpack.c.b16 %v947, %v946
  %v953 = vsel %vm82, %v935, 0
  %955 = vmatprep.subr.bf16.mxu0 0
  %956 = vmatpush1.bf16.msra.mxu0 0
  %957 = vmatprep.subr.bf16.mxu0 0
  %958 = vmatpush1.bf16.msra.mxu0 0
  %959 = vmatprep.subr.bf16.mxu0 0
  %960 = vmatpush1.bf16.msra.mxu0 0
  %961 = vmatprep.subr.bf16.mxu0 0
  %962 = vmatpush1.bf16.msra.mxu0 0
  %963 = vmatprep.subr.bf16.mxu0 0
  %964 = vmatpush1.bf16.msra.mxu0 0
  %965 = vmatprep.subr.bf16.mxu0 0
  %966 = vmatpush1.bf16.msra.mxu0 0
  %967 = vmatprep.subr.bf16.mxu0 0
  %968 = vmatpush1.bf16.msra.mxu0 %v949
  %969 = vmatprep.subr.bf16.mxu0 0
  %970 = vmatpush1.bf16.msra.mxu0 %v948
  %971 = vmatprep.subr.bf16.mxu0 0
  %972 = vmatpush2.bf16.msra.mxu0 0
  %973 = vmatprep.subr.bf16.mxu0 0
  %974 = vmatpush2.bf16.msra.mxu0 0
  %975 = vmatprep.subr.bf16.mxu0 0
  %976 = vmatpush2.bf16.msra.mxu0 0
  %977 = vmatprep.subr.bf16.mxu0 0
  %978 = vmatpush2.bf16.msra.mxu0 0
  %979 = vmatprep.subr.bf16.mxu0 0
  %980 = vmatpush2.bf16.msra.mxu0 0
  %981 = vmatprep.subr.bf16.mxu0 0
  %982 = vmatpush2.bf16.msra.mxu0 0
  %983 = vmatprep.subr.bf16.mxu0 0
  %984 = vmatpush2.bf16.msra.mxu0 0
  %985 = vmatprep.subr.bf16.mxu0 0
  %986 = vmatpush2.bf16.msra.mxu0 0
  %987 = vmatprep.mubr.bf16.mxu0 0
  %988 = vmatmul.mubr.bf16.gmra.mxu0 %v953
  %v989 = vpop.f32.mrf.mxu0
  %v990 = vadd.f32 0.0, %v989
  %v991 = vpop.f32.mrf.mxu0
  %v992 = vpop.f32.mrf.mxu0
  %v993 = vpop.f32.mrf.mxu0
  %994 = vdwg.mxu0
  %v995 = vadd.f32 %v933, %v990
  %v996 = vxor.u32 %v995, 2147483648
  %v997 = vmul.f32 %v996, 1.442695
  %v998 = vpow.pop %v997
  %v999 = vadd.f32 %v998, 1.0
  %v1000 = vrcp.pop %v999
  %v1001 = vmul.f32 1.0, %v1000
  %v1002 = vtanh.pop %v995
  %v1003 = vld [vmem:[#allocation5] sm:$0x3]
  %1005 = vrot.lane.b32.xlu0 %v1003, 32
  %v1006 = vpop.permute.xlu0 %1005
  %v1008 = vmul.f32 %v1001, %v1006
  %1010 = vrot.lane.b32.xlu0 %v1002, 64
  %v1011 = vpop.permute.xlu0 %1010
  %v1013 = vmul.f32 %v1001, %v1011
  %1015 = vrot.lane.b32.xlu0 %v1013, 32
  %v1016 = vpop.permute.xlu0 %1015
  %v1018 = vadd.f32 %v1008, %v1016
  %v1019 = vtanh.pop %v1018
  %1021 = vrot.lane.b32.xlu0 %v1019, 64
  %v1022 = vpop.permute.xlu0 %1021
  %v1024 = vmul.f32 %v1001, %v1022
  %1026 = vrot.lane.b32.xlu0 %v1024, 32
  %v1027 = vpop.permute.xlu0 %1026
  %1029 = vst.msk [vmem:[#allocation4] sm:$0x3] %vm160, %v1027
  %1031 = vrot.lane.b32.xlu0 %v1018, 96
  %v1032 = vpop.permute.xlu0 %1031
  %1034 = vst.msk [vmem:[#allocation5] sm:$0x3] %vm160, %v1032
  %v1035 = vpack.c.bf16 %v1024, %v1024
  %v1038 = vunpack.c.l.s4 1966171168
  %v1039 = vunpack.c.0.s8 %v1038
  %v1040 = vlaneseq
  %v1041 = vshrl.u32 %v1040, 7
  %v1042 = vsub.s32 %v1039, %v1041
  %v1043 = vrot.slane %v1035, %v1042
  %v1045 = vunpack.c.l.s4 1966171168
  %v1046 = vunpack.c.0.s8 %v1045
  %v1047 = vlaneseq
  %v1048 = vshrl.u32 %v1047, 7
  %v1049 = vsub.s32 %v1046, %v1048
  %v1050 = vrot.slane %v1043, %v1049
  %1051 = vrot.lane.b32.xlu0 %v1050, 32
  %v1052 = vpop.permute.xlu0 %1051
  %s1054 = scalar_lea.vmem %s50, 4
  %1055 = vst.msk [vmem:[%s1054] sm:$0x1] %vm186, %v1052
  %s1056 = scalar_lea.vmem %s0, 8
  %v1057 = vld [vmem:[%s1056] sm:$0x3]
  %v1058 = vld [vmem:[#allocation2] sm:$0x3]
  %v1059 = vpack.c.bf16 %v1058, %v1058
  %v1060 = vld [vmem:[%s2] sm:$0xf]
  %v1061 = vld [vmem:[%s2 + $0x4] sm:$0xf]
  %v1062 = vld [vmem:[%s2 + $0x8] sm:$0xf]
  %v1063 = vld [vmem:[%s2 + $0xc] sm:$0xf]
  %v1068 = vunpack.c.l.b16 %v1060
  %v1069 = vunpack.c.l.b16 %v1061
  %v1070 = vunpack.c.l.b16 %v1062
  %v1071 = vunpack.c.l.b16 %v1063
  %v1072 = vpack.c.b16 %v1069, %v1068
  %v1073 = vpack.c.b16 %v1071, %v1070
  %v1077 = vsel %vm82, %v1059, 0
  %1079 = vmatprep.subr.bf16.mxu0 0
  %1080 = vmatpush1.bf16.msra.mxu0 0
  %1081 = vmatprep.subr.bf16.mxu0 0
  %1082 = vmatpush1.bf16.msra.mxu0 0
  %1083 = vmatprep.subr.bf16.mxu0 0
  %1084 = vmatpush1.bf16.msra.mxu0 0
  %1085 = vmatprep.subr.bf16.mxu0 0
  %1086 = vmatpush1.bf16.msra.mxu0 0
  %1087 = vmatprep.subr.bf16.mxu0 0
  %1088 = vmatpush1.bf16.msra.mxu0 0
  %1089 = vmatprep.subr.bf16.mxu0 0
  %1090 = vmatpush1.bf16.msra.mxu0 0
  %1091 = vmatprep.subr.bf16.mxu0 0
  %1092 = vmatpush1.bf16.msra.mxu0 %v1073
  %1093 = vmatprep.subr.bf16.mxu0 0
  %1094 = vmatpush1.bf16.msra.mxu0 %v1072
  %1095 = vmatprep.subr.bf16.mxu0 0
  %1096 = vmatpush2.bf16.msra.mxu0 0
  %1097 = vmatprep.subr.bf16.mxu0 0
  %1098 = vmatpush2.bf16.msra.mxu0 0
  %1099 = vmatprep.subr.bf16.mxu0 0
  %1100 = vmatpush2.bf16.msra.mxu0 0
  %1101 = vmatprep.subr.bf16.mxu0 0
  %1102 = vmatpush2.bf16.msra.mxu0 0
  %1103 = vmatprep.subr.bf16.mxu0 0
  %1104 = vmatpush2.bf16.msra.mxu0 0
  %1105 = vmatprep.subr.bf16.mxu0 0
  %1106 = vmatpush2.bf16.msra.mxu0 0
  %1107 = vmatprep.subr.bf16.mxu0 0
  %1108 = vmatpush2.bf16.msra.mxu0 0
  %1109 = vmatprep.subr.bf16.mxu0 0
  %1110 = vmatpush2.bf16.msra.mxu0 0
  %1111 = vmatprep.mubr.bf16.mxu0 0
  %1112 = vmatmul.mubr.bf16.gmra.mxu0 %v1077
  %v1113 = vpop.f32.mrf.mxu0
  %v1114 = vadd.f32 0.0, %v1113
  %v1115 = vpop.f32.mrf.mxu0
  %v1116 = vpop.f32.mrf.mxu0
  %v1117 = vpop.f32.mrf.mxu0
  %1118 = vdwg.mxu0
  %v1119 = vadd.f32 %v1057, %v1114
  %v1120 = vxor.u32 %v1119, 2147483648
  %v1121 = vmul.f32 %v1120, 1.442695
  %v1122 = vpow.pop %v1121
  %v1123 = vadd.f32 %v1122, 1.0
  %v1124 = vrcp.pop %v1123
  %v1125 = vmul.f32 1.0, %v1124
  %v1126 = vtanh.pop %v1119
  %v1127 = vld [vmem:[#allocation3] sm:$0x3]
  %1129 = vrot.lane.b32.xlu0 %v1127, 32
  %v1130 = vpop.permute.xlu0 %1129
  %v1132 = vmul.f32 %v1125, %v1130
  %1134 = vrot.lane.b32.xlu0 %v1126, 64
  %v1135 = vpop.permute.xlu0 %1134
  %v1137 = vmul.f32 %v1125, %v1135
  %1139 = vrot.lane.b32.xlu0 %v1137, 32
  %v1140 = vpop.permute.xlu0 %1139
  %v1142 = vadd.f32 %v1132, %v1140
  %v1143 = vtanh.pop %v1142
  %1145 = vrot.lane.b32.xlu0 %v1143, 64
  %v1146 = vpop.permute.xlu0 %1145
  %v1148 = vmul.f32 %v1125, %v1146
  %1150 = vrot.lane.b32.xlu0 %v1148, 32
  %v1151 = vpop.permute.xlu0 %1150
  %1153 = vst.msk [vmem:[#allocation2] sm:$0x3] %vm160, %v1151
  %1155 = vrot.lane.b32.xlu0 %v1142, 96
  %v1156 = vpop.permute.xlu0 %1155
  %1158 = vst.msk [vmem:[#allocation3] sm:$0x3] %vm160, %v1156
  %v1159 = vpack.c.bf16 %v1148, %v1148
  %v1162 = vunpack.c.l.s4 1966171168
  %v1163 = vunpack.c.0.s8 %v1162
  %v1164 = vlaneseq
  %v1165 = vshrl.u32 %v1164, 7
  %v1166 = vsub.s32 %v1163, %v1165
  %v1167 = vrot.slane %v1159, %v1166
  %v1169 = vunpack.c.l.s4 1966171168
  %v1170 = vunpack.c.0.s8 %v1169
  %v1171 = vlaneseq
  %v1172 = vshrl.u32 %v1171, 7
  %v1173 = vsub.s32 %v1170, %v1172
  %v1174 = vrot.slane %v1167, %v1173
  %1175 = vrot.lane.b32.xlu0 %v1174, 32
  %v1176 = vpop.permute.xlu0 %1175
  %s1178 = scalar_lea.vmem %s4, 4
  %1179 = vst.msk [vmem:[%s1178] sm:$0x1] %vm186, %v1176
  %s1180 = scalar_lea.vmem %s43, 6
  %v1181 = vld [vmem:[%s1180] sm:$0x3]
  %v1182 = vld [vmem:[#allocation4] sm:$0x3]
  %v1183 = vpack.c.bf16 %v1182, %v1182
  %v1184 = vld [vmem:[%s3] sm:$0xf]
  %v1185 = vld [vmem:[%s3 + $0x4] sm:$0xf]
  %v1186 = vld [vmem:[%s3 + $0x8] sm:$0xf]
  %v1187 = vld [vmem:[%s3 + $0xc] sm:$0xf]
  %v1192 = vunpack.c.l.b16 %v1184
  %v1193 = vunpack.c.l.b16 %v1185
  %v1194 = vunpack.c.l.b16 %v1186
  %v1195 = vunpack.c.l.b16 %v1187
  %v1196 = vpack.c.b16 %v1193, %v1192
  %v1197 = vpack.c.b16 %v1195, %v1194
  %v1201 = vsel %vm82, %v1183, 0
  %1203 = vmatprep.subr.bf16.mxu0 0
  %1204 = vmatpush1.bf16.msra.mxu0 0
  %1205 = vmatprep.subr.bf16.mxu0 0
  %1206 = vmatpush1.bf16.msra.mxu0 0
  %1207 = vmatprep.subr.bf16.mxu0 0
  %1208 = vmatpush1.bf16.msra.mxu0 0
  %1209 = vmatprep.subr.bf16.mxu0 0
  %1210 = vmatpush1.bf16.msra.mxu0 0
  %1211 = vmatprep.subr.bf16.mxu0 0
  %1212 = vmatpush1.bf16.msra.mxu0 0
  %1213 = vmatprep.subr.bf16.mxu0 0
  %1214 = vmatpush1.bf16.msra.mxu0 0
  %1215 = vmatprep.subr.bf16.mxu0 0
  %1216 = vmatpush1.bf16.msra.mxu0 %v1197
  %1217 = vmatprep.subr.bf16.mxu0 0
  %1218 = vmatpush1.bf16.msra.mxu0 %v1196
  %1219 = vmatprep.subr.bf16.mxu0 0
  %1220 = vmatpush2.bf16.msra.mxu0 0
  %1221 = vmatprep.subr.bf16.mxu0 0
  %1222 = vmatpush2.bf16.msra.mxu0 0
  %1223 = vmatprep.subr.bf16.mxu0 0
  %1224 = vmatpush2.bf16.msra.mxu0 0
  %1225 = vmatprep.subr.bf16.mxu0 0
  %1226 = vmatpush2.bf16.msra.mxu0 0
  %1227 = vmatprep.subr.bf16.mxu0 0
  %1228 = vmatpush2.bf16.msra.mxu0 0
  %1229 = vmatprep.subr.bf16.mxu0 0
  %1230 = vmatpush2.bf16.msra.mxu0 0
  %1231 = vmatprep.subr.bf16.mxu0 0
  %1232 = vmatpush2.bf16.msra.mxu0 0
  %1233 = vmatprep.subr.bf16.mxu0 0
  %1234 = vmatpush2.bf16.msra.mxu0 0
  %1235 = vmatprep.mubr.bf16.mxu0 0
  %1236 = vmatmul.mubr.bf16.gmra.mxu0 %v1201
  %v1237 = vpop.f32.mrf.mxu0
  %v1238 = vadd.f32 0.0, %v1237
  %v1239 = vpop.f32.mrf.mxu0
  %v1240 = vpop.f32.mrf.mxu0
  %v1241 = vpop.f32.mrf.mxu0
  %1242 = vdwg.mxu0
  %v1243 = vadd.f32 %v1181, %v1238
  %v1244 = vxor.u32 %v1243, 2147483648
  %v1245 = vmul.f32 %v1244, 1.442695
  %v1246 = vpow.pop %v1245
  %v1247 = vadd.f32 %v1246, 1.0
  %v1248 = vrcp.pop %v1247
  %v1249 = vmul.f32 1.0, %v1248
  %v1250 = vtanh.pop %v1243
  %v1251 = vld [vmem:[#allocation5] sm:$0x3]
  %1253 = vrot.lane.b32.xlu0 %v1251, 32
  %v1254 = vpop.permute.xlu0 %1253
  %v1256 = vmul.f32 %v1249, %v1254
  %1258 = vrot.lane.b32.xlu0 %v1250, 64
  %v1259 = vpop.permute.xlu0 %1258
  %v1261 = vmul.f32 %v1249, %v1259
  %1263 = vrot.lane.b32.xlu0 %v1261, 32
  %v1264 = vpop.permute.xlu0 %1263
  %v1266 = vadd.f32 %v1256, %v1264
  %v1267 = vtanh.pop %v1266
  %1269 = vrot.lane.b32.xlu0 %v1267, 64
  %v1270 = vpop.permute.xlu0 %1269
  %v1272 = vmul.f32 %v1249, %v1270
  %1274 = vrot.lane.b32.xlu0 %v1272, 32
  %v1275 = vpop.permute.xlu0 %1274
  %1277 = vst.msk [vmem:[#allocation4] sm:$0x3] %vm160, %v1275
  %1279 = vrot.lane.b32.xlu0 %v1266, 96
  %v1280 = vpop.permute.xlu0 %1279
  %1282 = vst.msk [vmem:[#allocation5] sm:$0x3] %vm160, %v1280
  %v1283 = vpack.c.bf16 %v1272, %v1272
  %v1286 = vunpack.c.l.s4 1966171168
  %v1287 = vunpack.c.0.s8 %v1286
  %v1288 = vlaneseq
  %v1289 = vshrl.u32 %v1288, 7
  %v1290 = vsub.s32 %v1287, %v1289
  %v1291 = vrot.slane %v1283, %v1290
  %v1293 = vunpack.c.l.s4 1966171168
  %v1294 = vunpack.c.0.s8 %v1293
  %v1295 = vlaneseq
  %v1296 = vshrl.u32 %v1295, 7
  %v1297 = vsub.s32 %v1294, %v1296
  %v1298 = vrot.slane %v1291, %v1297
  %1299 = vrot.lane.b32.xlu0 %v1298, 32
  %v1300 = vpop.permute.xlu0 %1299
  %s1302 = scalar_lea.vmem %s50, 3
  %1303 = vst.msk [vmem:[%s1302] sm:$0x1] %vm186, %v1300
  %s1304 = scalar_lea.vmem %s0, 10
  %v1305 = vld [vmem:[%s1304] sm:$0x3]
  %v1306 = vld [vmem:[#allocation2] sm:$0x3]
  %v1307 = vpack.c.bf16 %v1306, %v1306
  %v1308 = vld [vmem:[%s2] sm:$0xf]
  %v1309 = vld [vmem:[%s2 + $0x4] sm:$0xf]
  %v1310 = vld [vmem:[%s2 + $0x8] sm:$0xf]
  %v1311 = vld [vmem:[%s2 + $0xc] sm:$0xf]
  %v1316 = vunpack.c.l.b16 %v1308
  %v1317 = vunpack.c.l.b16 %v1309
  %v1318 = vunpack.c.l.b16 %v1310
  %v1319 = vunpack.c.l.b16 %v1311
  %v1320 = vpack.c.b16 %v1317, %v1316
  %v1321 = vpack.c.b16 %v1319, %v1318
  %v1325 = vsel %vm82, %v1307, 0
  %1327 = vmatprep.subr.bf16.mxu0 0
  %1328 = vmatpush1.bf16.msra.mxu0 0
  %1329 = vmatprep.subr.bf16.mxu0 0
  %1330 = vmatpush1.bf16.msra.mxu0 0
  %1331 = vmatprep.subr.bf16.mxu0 0
  %1332 = vmatpush1.bf16.msra.mxu0 0
  %1333 = vmatprep.subr.bf16.mxu0 0
  %1334 = vmatpush1.bf16.msra.mxu0 0
  %1335 = vmatprep.subr.bf16.mxu0 0
  %1336 = vmatpush1.bf16.msra.mxu0 0
  %1337 = vmatprep.subr.bf16.mxu0 0
  %1338 = vmatpush1.bf16.msra.mxu0 0
  %1339 = vmatprep.subr.bf16.mxu0 0
  %1340 = vmatpush1.bf16.msra.mxu0 %v1321
  %1341 = vmatprep.subr.bf16.mxu0 0
  %1342 = vmatpush1.bf16.msra.mxu0 %v1320
  %1343 = vmatprep.subr.bf16.mxu0 0
  %1344 = vmatpush2.bf16.msra.mxu0 0
  %1345 = vmatprep.subr.bf16.mxu0 0
  %1346 = vmatpush2.bf16.msra.mxu0 0
  %1347 = vmatprep.subr.bf16.mxu0 0
  %1348 = vmatpush2.bf16.msra.mxu0 0
  %1349 = vmatprep.subr.bf16.mxu0 0
  %1350 = vmatpush2.bf16.msra.mxu0 0
  %1351 = vmatprep.subr.bf16.mxu0 0
  %1352 = vmatpush2.bf16.msra.mxu0 0
  %1353 = vmatprep.subr.bf16.mxu0 0
  %1354 = vmatpush2.bf16.msra.mxu0 0
  %1355 = vmatprep.subr.bf16.mxu0 0
  %1356 = vmatpush2.bf16.msra.mxu0 0
  %1357 = vmatprep.subr.bf16.mxu0 0
  %1358 = vmatpush2.bf16.msra.mxu0 0
  %1359 = vmatprep.mubr.bf16.mxu0 0
  %1360 = vmatmul.mubr.bf16.gmra.mxu0 %v1325
  %v1361 = vpop.f32.mrf.mxu0
  %v1362 = vadd.f32 0.0, %v1361
  %v1363 = vpop.f32.mrf.mxu0
  %v1364 = vpop.f32.mrf.mxu0
  %v1365 = vpop.f32.mrf.mxu0
  %1366 = vdwg.mxu0
  %v1367 = vadd.f32 %v1305, %v1362
  %v1368 = vxor.u32 %v1367, 2147483648
  %v1369 = vmul.f32 %v1368, 1.442695
  %v1370 = vpow.pop %v1369
  %v1371 = vadd.f32 %v1370, 1.0
  %v1372 = vrcp.pop %v1371
  %v1373 = vmul.f32 1.0, %v1372
  %v1374 = vtanh.pop %v1367
  %v1375 = vld [vmem:[#allocation3] sm:$0x3]
  %1377 = vrot.lane.b32.xlu0 %v1375, 32
  %v1378 = vpop.permute.xlu0 %1377
  %v1380 = vmul.f32 %v1373, %v1378
  %1382 = vrot.lane.b32.xlu0 %v1374, 64
  %v1383 = vpop.permute.xlu0 %1382
  %v1385 = vmul.f32 %v1373, %v1383
  %1387 = vrot.lane.b32.xlu0 %v1385, 32
  %v1388 = vpop.permute.xlu0 %1387
  %v1390 = vadd.f32 %v1380, %v1388
  %v1391 = vtanh.pop %v1390
  %1393 = vrot.lane.b32.xlu0 %v1391, 64
  %v1394 = vpop.permute.xlu0 %1393
  %v1396 = vmul.f32 %v1373, %v1394
  %1398 = vrot.lane.b32.xlu0 %v1396, 32
  %v1399 = vpop.permute.xlu0 %1398
  %1401 = vst.msk [vmem:[#allocation2] sm:$0x3] %vm160, %v1399
  %1403 = vrot.lane.b32.xlu0 %v1390, 96
  %v1404 = vpop.permute.xlu0 %1403
  %1406 = vst.msk [vmem:[#allocation3] sm:$0x3] %vm160, %v1404
  %v1407 = vpack.c.bf16 %v1396, %v1396
  %v1410 = vunpack.c.l.s4 1966171168
  %v1411 = vunpack.c.0.s8 %v1410
  %v1412 = vlaneseq
  %v1413 = vshrl.u32 %v1412, 7
  %v1414 = vsub.s32 %v1411, %v1413
  %v1415 = vrot.slane %v1407, %v1414
  %v1417 = vunpack.c.l.s4 1966171168
  %v1418 = vunpack.c.0.s8 %v1417
  %v1419 = vlaneseq
  %v1420 = vshrl.u32 %v1419, 7
  %v1421 = vsub.s32 %v1418, %v1420
  %v1422 = vrot.slane %v1415, %v1421
  %1423 = vrot.lane.b32.xlu0 %v1422, 32
  %v1424 = vpop.permute.xlu0 %1423
  %s1426 = scalar_lea.vmem %s4, 5
  %1427 = vst.msk [vmem:[%s1426] sm:$0x1] %vm186, %v1424
  %s1428 = scalar_lea.vmem %s43, 4
  %v1429 = vld [vmem:[%s1428] sm:$0x3]
  %v1430 = vld [vmem:[#allocation4] sm:$0x3]
  %v1431 = vpack.c.bf16 %v1430, %v1430
  %v1432 = vld [vmem:[%s3] sm:$0xf]
  %v1433 = vld [vmem:[%s3 + $0x4] sm:$0xf]
  %v1434 = vld [vmem:[%s3 + $0x8] sm:$0xf]
  %v1435 = vld [vmem:[%s3 + $0xc] sm:$0xf]
  %v1440 = vunpack.c.l.b16 %v1432
  %v1441 = vunpack.c.l.b16 %v1433
  %v1442 = vunpack.c.l.b16 %v1434
  %v1443 = vunpack.c.l.b16 %v1435
  %v1444 = vpack.c.b16 %v1441, %v1440
  %v1445 = vpack.c.b16 %v1443, %v1442
  %v1449 = vsel %vm82, %v1431, 0
  %1451 = vmatprep.subr.bf16.mxu0 0
  %1452 = vmatpush1.bf16.msra.mxu0 0
  %1453 = vmatprep.subr.bf16.mxu0 0
  %1454 = vmatpush1.bf16.msra.mxu0 0
  %1455 = vmatprep.subr.bf16.mxu0 0
  %1456 = vmatpush1.bf16.msra.mxu0 0
  %1457 = vmatprep.subr.bf16.mxu0 0
  %1458 = vmatpush1.bf16.msra.mxu0 0
  %1459 = vmatprep.subr.bf16.mxu0 0
  %1460 = vmatpush1.bf16.msra.mxu0 0
  %1461 = vmatprep.subr.bf16.mxu0 0
  %1462 = vmatpush1.bf16.msra.mxu0 0
  %1463 = vmatprep.subr.bf16.mxu0 0
  %1464 = vmatpush1.bf16.msra.mxu0 %v1445
  %1465 = vmatprep.subr.bf16.mxu0 0
  %1466 = vmatpush1.bf16.msra.mxu0 %v1444
  %1467 = vmatprep.subr.bf16.mxu0 0
  %1468 = vmatpush2.bf16.msra.mxu0 0
  %1469 = vmatprep.subr.bf16.mxu0 0
  %1470 = vmatpush2.bf16.msra.mxu0 0
  %1471 = vmatprep.subr.bf16.mxu0 0
  %1472 = vmatpush2.bf16.msra.mxu0 0
  %1473 = vmatprep.subr.bf16.mxu0 0
  %1474 = vmatpush2.bf16.msra.mxu0 0
  %1475 = vmatprep.subr.bf16.mxu0 0
  %1476 = vmatpush2.bf16.msra.mxu0 0
  %1477 = vmatprep.subr.bf16.mxu0 0
  %1478 = vmatpush2.bf16.msra.mxu0 0
  %1479 = vmatprep.subr.bf16.mxu0 0
  %1480 = vmatpush2.bf16.msra.mxu0 0
  %1481 = vmatprep.subr.bf16.mxu0 0
  %1482 = vmatpush2.bf16.msra.mxu0 0
  %1483 = vmatprep.mubr.bf16.mxu0 0
  %1484 = vmatmul.mubr.bf16.gmra.mxu0 %v1449
  %v1485 = vpop.f32.mrf.mxu0
  %v1486 = vadd.f32 0.0, %v1485
  %v1487 = vpop.f32.mrf.mxu0
  %v1488 = vpop.f32.mrf.mxu0
  %v1489 = vpop.f32.mrf.mxu0
  %1490 = vdwg.mxu0
  %v1491 = vadd.f32 %v1429, %v1486
  %v1492 = vxor.u32 %v1491, 2147483648
  %v1493 = vmul.f32 %v1492, 1.442695
  %v1494 = vpow.pop %v1493
  %v1495 = vadd.f32 %v1494, 1.0
  %v1496 = vrcp.pop %v1495
  %v1497 = vmul.f32 1.0, %v1496
  %v1498 = vtanh.pop %v1491
  %v1499 = vld [vmem:[#allocation5] sm:$0x3]
  %1501 = vrot.lane.b32.xlu0 %v1499, 32
  %v1502 = vpop.permute.xlu0 %1501
  %v1504 = vmul.f32 %v1497, %v1502
  %1506 = vrot.lane.b32.xlu0 %v1498, 64
  %v1507 = vpop.permute.xlu0 %1506
  %v1509 = vmul.f32 %v1497, %v1507
  %1511 = vrot.lane.b32.xlu0 %v1509, 32
  %v1512 = vpop.permute.xlu0 %1511
  %v1514 = vadd.f32 %v1504, %v1512
  %v1515 = vtanh.pop %v1514
  %1517 = vrot.lane.b32.xlu0 %v1515, 64
  %v1518 = vpop.permute.xlu0 %1517
  %v1520 = vmul.f32 %v1497, %v1518
  %1522 = vrot.lane.b32.xlu0 %v1520, 32
  %v1523 = vpop.permute.xlu0 %1522
  %1525 = vst.msk [vmem:[#allocation4] sm:$0x3] %vm160, %v1523
  %1527 = vrot.lane.b32.xlu0 %v1514, 96
  %v1528 = vpop.permute.xlu0 %1527
  %1530 = vst.msk [vmem:[#allocation5] sm:$0x3] %vm160, %v1528
  %v1531 = vpack.c.bf16 %v1520, %v1520
  %v1534 = vunpack.c.l.s4 1966171168
  %v1535 = vunpack.c.0.s8 %v1534
  %v1536 = vlaneseq
  %v1537 = vshrl.u32 %v1536, 7
  %v1538 = vsub.s32 %v1535, %v1537
  %v1539 = vrot.slane %v1531, %v1538
  %v1541 = vunpack.c.l.s4 1966171168
  %v1542 = vunpack.c.0.s8 %v1541
  %v1543 = vlaneseq
  %v1544 = vshrl.u32 %v1543, 7
  %v1545 = vsub.s32 %v1542, %v1544
  %v1546 = vrot.slane %v1539, %v1545
  %1547 = vrot.lane.b32.xlu0 %v1546, 32
  %v1548 = vpop.permute.xlu0 %1547
  %s1550 = scalar_lea.vmem %s50, 2
  %1551 = vst.msk [vmem:[%s1550] sm:$0x1] %vm186, %v1548
  %s1552 = scalar_lea.vmem %s0, 12
  %v1553 = vld [vmem:[%s1552] sm:$0x3]
  %v1554 = vld [vmem:[#allocation2] sm:$0x3]
  %v1555 = vpack.c.bf16 %v1554, %v1554
  %v1556 = vld [vmem:[%s2] sm:$0xf]
  %v1557 = vld [vmem:[%s2 + $0x4] sm:$0xf]
  %v1558 = vld [vmem:[%s2 + $0x8] sm:$0xf]
  %v1559 = vld [vmem:[%s2 + $0xc] sm:$0xf]
  %v1564 = vunpack.c.l.b16 %v1556
  %v1565 = vunpack.c.l.b16 %v1557
  %v1566 = vunpack.c.l.b16 %v1558
  %v1567 = vunpack.c.l.b16 %v1559
  %v1568 = vpack.c.b16 %v1565, %v1564
  %v1569 = vpack.c.b16 %v1567, %v1566
  %v1573 = vsel %vm82, %v1555, 0
  %1575 = vmatprep.subr.bf16.mxu0 0
  %1576 = vmatpush1.bf16.msra.mxu0 0
  %1577 = vmatprep.subr.bf16.mxu0 0
  %1578 = vmatpush1.bf16.msra.mxu0 0
  %1579 = vmatprep.subr.bf16.mxu0 0
  %1580 = vmatpush1.bf16.msra.mxu0 0
  %1581 = vmatprep.subr.bf16.mxu0 0
  %1582 = vmatpush1.bf16.msra.mxu0 0
  %1583 = vmatprep.subr.bf16.mxu0 0
  %1584 = vmatpush1.bf16.msra.mxu0 0
  %1585 = vmatprep.subr.bf16.mxu0 0
  %1586 = vmatpush1.bf16.msra.mxu0 0
  %1587 = vmatprep.subr.bf16.mxu0 0
  %1588 = vmatpush1.bf16.msra.mxu0 %v1569
  %1589 = vmatprep.subr.bf16.mxu0 0
  %1590 = vmatpush1.bf16.msra.mxu0 %v1568
  %1591 = vmatprep.subr.bf16.mxu0 0
  %1592 = vmatpush2.bf16.msra.mxu0 0
  %1593 = vmatprep.subr.bf16.mxu0 0
  %1594 = vmatpush2.bf16.msra.mxu0 0
  %1595 = vmatprep.subr.bf16.mxu0 0
  %1596 = vmatpush2.bf16.msra.mxu0 0
  %1597 = vmatprep.subr.bf16.mxu0 0
  %1598 = vmatpush2.bf16.msra.mxu0 0
  %1599 = vmatprep.subr.bf16.mxu0 0
  %1600 = vmatpush2.bf16.msra.mxu0 0
  %1601 = vmatprep.subr.bf16.mxu0 0
  %1602 = vmatpush2.bf16.msra.mxu0 0
  %1603 = vmatprep.subr.bf16.mxu0 0
  %1604 = vmatpush2.bf16.msra.mxu0 0
  %1605 = vmatprep.subr.bf16.mxu0 0
  %1606 = vmatpush2.bf16.msra.mxu0 0
  %1607 = vmatprep.mubr.bf16.mxu0 0
  %1608 = vmatmul.mubr.bf16.gmra.mxu0 %v1573
  %v1609 = vpop.f32.mrf.mxu0
  %v1610 = vadd.f32 0.0, %v1609
  %v1611 = vpop.f32.mrf.mxu0
  %v1612 = vpop.f32.mrf.mxu0
  %v1613 = vpop.f32.mrf.mxu0
  %1614 = vdwg.mxu0
  %v1615 = vadd.f32 %v1553, %v1610
  %v1616 = vxor.u32 %v1615, 2147483648
  %v1617 = vmul.f32 %v1616, 1.442695
  %v1618 = vpow.pop %v1617
  %v1619 = vadd.f32 %v1618, 1.0
  %v1620 = vrcp.pop %v1619
  %v1621 = vmul.f32 1.0, %v1620
  %v1622 = vtanh.pop %v1615
  %v1623 = vld [vmem:[#allocation3] sm:$0x3]
  %1625 = vrot.lane.b32.xlu0 %v1623, 32
  %v1626 = vpop.permute.xlu0 %1625
  %v1628 = vmul.f32 %v1621, %v1626
  %1630 = vrot.lane.b32.xlu0 %v1622, 64
  %v1631 = vpop.permute.xlu0 %1630
  %v1633 = vmul.f32 %v1621, %v1631
  %1635 = vrot.lane.b32.xlu0 %v1633, 32
  %v1636 = vpop.permute.xlu0 %1635
  %v1638 = vadd.f32 %v1628, %v1636
  %v1639 = vtanh.pop %v1638
  %1641 = vrot.lane.b32.xlu0 %v1639, 64
  %v1642 = vpop.permute.xlu0 %1641
  %v1644 = vmul.f32 %v1621, %v1642
  %1646 = vrot.lane.b32.xlu0 %v1644, 32
  %v1647 = vpop.permute.xlu0 %1646
  %1649 = vst.msk [vmem:[#allocation2] sm:$0x3] %vm160, %v1647
  %1651 = vrot.lane.b32.xlu0 %v1638, 96
  %v1652 = vpop.permute.xlu0 %1651
  %1654 = vst.msk [vmem:[#allocation3] sm:$0x3] %vm160, %v1652
  %v1655 = vpack.c.bf16 %v1644, %v1644
  %v1658 = vunpack.c.l.s4 1966171168
  %v1659 = vunpack.c.0.s8 %v1658
  %v1660 = vlaneseq
  %v1661 = vshrl.u32 %v1660, 7
  %v1662 = vsub.s32 %v1659, %v1661
  %v1663 = vrot.slane %v1655, %v1662
  %v1665 = vunpack.c.l.s4 1966171168
  %v1666 = vunpack.c.0.s8 %v1665
  %v1667 = vlaneseq
  %v1668 = vshrl.u32 %v1667, 7
  %v1669 = vsub.s32 %v1666, %v1668
  %v1670 = vrot.slane %v1663, %v1669
  %1671 = vrot.lane.b32.xlu0 %v1670, 32
  %v1672 = vpop.permute.xlu0 %1671
  %s1674 = scalar_lea.vmem %s4, 6
  %1675 = vst.msk [vmem:[%s1674] sm:$0x1] %vm186, %v1672
  %s1676 = scalar_lea.vmem %s43, 2
  %v1677 = vld [vmem:[%s1676] sm:$0x3]
  %v1678 = vld [vmem:[#allocation4] sm:$0x3]
  %v1679 = vpack.c.bf16 %v1678, %v1678
  %v1680 = vld [vmem:[%s3] sm:$0xf]
  %v1681 = vld [vmem:[%s3 + $0x4] sm:$0xf]
  %v1682 = vld [vmem:[%s3 + $0x8] sm:$0xf]
  %v1683 = vld [vmem:[%s3 + $0xc] sm:$0xf]
  %v1688 = vunpack.c.l.b16 %v1680
  %v1689 = vunpack.c.l.b16 %v1681
  %v1690 = vunpack.c.l.b16 %v1682
  %v1691 = vunpack.c.l.b16 %v1683
  %v1692 = vpack.c.b16 %v1689, %v1688
  %v1693 = vpack.c.b16 %v1691, %v1690
  %v1697 = vsel %vm82, %v1679, 0
  %1699 = vmatprep.subr.bf16.mxu0 0
  %1700 = vmatpush1.bf16.msra.mxu0 0
  %1701 = vmatprep.subr.bf16.mxu0 0
  %1702 = vmatpush1.bf16.msra.mxu0 0
  %1703 = vmatprep.subr.bf16.mxu0 0
  %1704 = vmatpush1.bf16.msra.mxu0 0
  %1705 = vmatprep.subr.bf16.mxu0 0
  %1706 = vmatpush1.bf16.msra.mxu0 0
  %1707 = vmatprep.subr.bf16.mxu0 0
  %1708 = vmatpush1.bf16.msra.mxu0 0
  %1709 = vmatprep.subr.bf16.mxu0 0
  %1710 = vmatpush1.bf16.msra.mxu0 0
  %1711 = vmatprep.subr.bf16.mxu0 0
  %1712 = vmatpush1.bf16.msra.mxu0 %v1693
  %1713 = vmatprep.subr.bf16.mxu0 0
  %1714 = vmatpush1.bf16.msra.mxu0 %v1692
  %1715 = vmatprep.subr.bf16.mxu0 0
  %1716 = vmatpush2.bf16.msra.mxu0 0
  %1717 = vmatprep.subr.bf16.mxu0 0
  %1718 = vmatpush2.bf16.msra.mxu0 0
  %1719 = vmatprep.subr.bf16.mxu0 0
  %1720 = vmatpush2.bf16.msra.mxu0 0
  %1721 = vmatprep.subr.bf16.mxu0 0
  %1722 = vmatpush2.bf16.msra.mxu0 0
  %1723 = vmatprep.subr.bf16.mxu0 0
  %1724 = vmatpush2.bf16.msra.mxu0 0
  %1725 = vmatprep.subr.bf16.mxu0 0
  %1726 = vmatpush2.bf16.msra.mxu0 0
  %1727 = vmatprep.subr.bf16.mxu0 0
  %1728 = vmatpush2.bf16.msra.mxu0 0
  %1729 = vmatprep.subr.bf16.mxu0 0
  %1730 = vmatpush2.bf16.msra.mxu0 0
  %1731 = vmatprep.mubr.bf16.mxu0 0
  %1732 = vmatmul.mubr.bf16.gmra.mxu0 %v1697
  %v1733 = vpop.f32.mrf.mxu0
  %v1734 = vadd.f32 0.0, %v1733
  %v1735 = vpop.f32.mrf.mxu0
  %v1736 = vpop.f32.mrf.mxu0
  %v1737 = vpop.f32.mrf.mxu0
  %1738 = vdwg.mxu0
  %v1739 = vadd.f32 %v1677, %v1734
  %v1740 = vxor.u32 %v1739, 2147483648
  %v1741 = vmul.f32 %v1740, 1.442695
  %v1742 = vpow.pop %v1741
  %v1743 = vadd.f32 %v1742, 1.0
  %v1744 = vrcp.pop %v1743
  %v1745 = vmul.f32 1.0, %v1744
  %v1746 = vtanh.pop %v1739
  %v1747 = vld [vmem:[#allocation5] sm:$0x3]
  %1749 = vrot.lane.b32.xlu0 %v1747, 32
  %v1750 = vpop.permute.xlu0 %1749
  %v1752 = vmul.f32 %v1745, %v1750
  %1754 = vrot.lane.b32.xlu0 %v1746, 64
  %v1755 = vpop.permute.xlu0 %1754
  %v1757 = vmul.f32 %v1745, %v1755
  %1759 = vrot.lane.b32.xlu0 %v1757, 32
  %v1760 = vpop.permute.xlu0 %1759
  %v1762 = vadd.f32 %v1752, %v1760
  %v1763 = vtanh.pop %v1762
  %1765 = vrot.lane.b32.xlu0 %v1763, 64
  %v1766 = vpop.permute.xlu0 %1765
  %v1768 = vmul.f32 %v1745, %v1766
  %1770 = vrot.lane.b32.xlu0 %v1768, 32
  %v1771 = vpop.permute.xlu0 %1770
  %1773 = vst.msk [vmem:[#allocation4] sm:$0x3] %vm160, %v1771
  %1775 = vrot.lane.b32.xlu0 %v1762, 96
  %v1776 = vpop.permute.xlu0 %1775
  %1778 = vst.msk [vmem:[#allocation5] sm:$0x3] %vm160, %v1776
  %v1779 = vpack.c.bf16 %v1768, %v1768
  %v1782 = vunpack.c.l.s4 1966171168
  %v1783 = vunpack.c.0.s8 %v1782
  %v1784 = vlaneseq
  %v1785 = vshrl.u32 %v1784, 7
  %v1786 = vsub.s32 %v1783, %v1785
  %v1787 = vrot.slane %v1779, %v1786
  %v1789 = vunpack.c.l.s4 1966171168
  %v1790 = vunpack.c.0.s8 %v1789
  %v1791 = vlaneseq
  %v1792 = vshrl.u32 %v1791, 7
  %v1793 = vsub.s32 %v1790, %v1792
  %v1794 = vrot.slane %v1787, %v1793
  %1795 = vrot.lane.b32.xlu0 %v1794, 32
  %v1796 = vpop.permute.xlu0 %1795
  %s1798 = scalar_lea.vmem %s50, 1
  %1799 = vst.msk [vmem:[%s1798] sm:$0x1] %vm186, %v1796
  %s1800 = scalar_lea.vmem %s0, 14
  %v1801 = vld [vmem:[%s1800] sm:$0x3]
  %v1802 = vld [vmem:[#allocation2] sm:$0x3]
  %v1803 = vpack.c.bf16 %v1802, %v1802
  %v1804 = vld [vmem:[%s2] sm:$0xf]
  %v1805 = vld [vmem:[%s2 + $0x4] sm:$0xf]
  %v1806 = vld [vmem:[%s2 + $0x8] sm:$0xf]
  %v1807 = vld [vmem:[%s2 + $0xc] sm:$0xf]
  %v1812 = vunpack.c.l.b16 %v1804
  %v1813 = vunpack.c.l.b16 %v1805
  %v1814 = vunpack.c.l.b16 %v1806
  %v1815 = vunpack.c.l.b16 %v1807
  %v1816 = vpack.c.b16 %v1813, %v1812
  %v1817 = vpack.c.b16 %v1815, %v1814
  %v1821 = vsel %vm82, %v1803, 0
  %1823 = vmatprep.subr.bf16.mxu0 0
  %1824 = vmatpush1.bf16.msra.mxu0 0
  %1825 = vmatprep.subr.bf16.mxu0 0
  %1826 = vmatpush1.bf16.msra.mxu0 0
  %1827 = vmatprep.subr.bf16.mxu0 0
  %1828 = vmatpush1.bf16.msra.mxu0 0
  %1829 = vmatprep.subr.bf16.mxu0 0
  %1830 = vmatpush1.bf16.msra.mxu0 0
  %1831 = vmatprep.subr.bf16.mxu0 0
  %1832 = vmatpush1.bf16.msra.mxu0 0
  %1833 = vmatprep.subr.bf16.mxu0 0
  %1834 = vmatpush1.bf16.msra.mxu0 0
  %1835 = vmatprep.subr.bf16.mxu0 0
  %1836 = vmatpush1.bf16.msra.mxu0 %v1817
  %1837 = vmatprep.subr.bf16.mxu0 0
  %1838 = vmatpush1.bf16.msra.mxu0 %v1816
  %1839 = vmatprep.subr.bf16.mxu0 0
  %1840 = vmatpush2.bf16.msra.mxu0 0
  %1841 = vmatprep.subr.bf16.mxu0 0
  %1842 = vmatpush2.bf16.msra.mxu0 0
  %1843 = vmatprep.subr.bf16.mxu0 0
  %1844 = vmatpush2.bf16.msra.mxu0 0
  %1845 = vmatprep.subr.bf16.mxu0 0
  %1846 = vmatpush2.bf16.msra.mxu0 0
  %1847 = vmatprep.subr.bf16.mxu0 0
  %1848 = vmatpush2.bf16.msra.mxu0 0
  %1849 = vmatprep.subr.bf16.mxu0 0
  %1850 = vmatpush2.bf16.msra.mxu0 0
  %1851 = vmatprep.subr.bf16.mxu0 0
  %1852 = vmatpush2.bf16.msra.mxu0 0
  %1853 = vmatprep.subr.bf16.mxu0 0
  %1854 = vmatpush2.bf16.msra.mxu0 0
  %1855 = vmatprep.mubr.bf16.mxu0 0
  %1856 = vmatmul.mubr.bf16.gmra.mxu0 %v1821
  %v1857 = vpop.f32.mrf.mxu0
  %v1858 = vadd.f32 0.0, %v1857
  %v1859 = vpop.f32.mrf.mxu0
  %v1860 = vpop.f32.mrf.mxu0
  %v1861 = vpop.f32.mrf.mxu0
  %1862 = vdwg.mxu0
  %v1863 = vadd.f32 %v1801, %v1858
  %v1864 = vxor.u32 %v1863, 2147483648
  %v1865 = vmul.f32 %v1864, 1.442695
  %v1866 = vpow.pop %v1865
  %v1867 = vadd.f32 %v1866, 1.0
  %v1868 = vrcp.pop %v1867
  %v1869 = vmul.f32 1.0, %v1868
  %v1870 = vtanh.pop %v1863
  %v1871 = vld [vmem:[#allocation3] sm:$0x3]
  %1873 = vrot.lane.b32.xlu0 %v1871, 32
  %v1874 = vpop.permute.xlu0 %1873
  %v1876 = vmul.f32 %v1869, %v1874
  %1878 = vrot.lane.b32.xlu0 %v1870, 64
  %v1879 = vpop.permute.xlu0 %1878
  %v1881 = vmul.f32 %v1869, %v1879
  %1883 = vrot.lane.b32.xlu0 %v1881, 32
  %v1884 = vpop.permute.xlu0 %1883
  %v1886 = vadd.f32 %v1876, %v1884
  %v1887 = vtanh.pop %v1886
  %1889 = vrot.lane.b32.xlu0 %v1887, 64
  %v1890 = vpop.permute.xlu0 %1889
  %v1892 = vmul.f32 %v1869, %v1890
  %1894 = vrot.lane.b32.xlu0 %v1892, 32
  %v1895 = vpop.permute.xlu0 %1894
  %1897 = vst.msk [vmem:[#allocation2] sm:$0x3] %vm160, %v1895
  %1899 = vrot.lane.b32.xlu0 %v1886, 96
  %v1900 = vpop.permute.xlu0 %1899
  %1902 = vst.msk [vmem:[#allocation3] sm:$0x3] %vm160, %v1900
  %v1903 = vpack.c.bf16 %v1892, %v1892
  %v1906 = vunpack.c.l.s4 1966171168
  %v1907 = vunpack.c.0.s8 %v1906
  %v1908 = vlaneseq
  %v1909 = vshrl.u32 %v1908, 7
  %v1910 = vsub.s32 %v1907, %v1909
  %v1911 = vrot.slane %v1903, %v1910
  %v1913 = vunpack.c.l.s4 1966171168
  %v1914 = vunpack.c.0.s8 %v1913
  %v1915 = vlaneseq
  %v1916 = vshrl.u32 %v1915, 7
  %v1917 = vsub.s32 %v1914, %v1916
  %v1918 = vrot.slane %v1911, %v1917
  %1919 = vrot.lane.b32.xlu0 %v1918, 32
  %v1920 = vpop.permute.xlu0 %1919
  %s1922 = scalar_lea.vmem %s4, 7
  %1923 = vst.msk [vmem:[%s1922] sm:$0x1] %vm186, %v1920
  %v1924 = vld [vmem:[%s43] sm:$0x3]
  %v1925 = vld [vmem:[#allocation4] sm:$0x3]
  %v1926 = vpack.c.bf16 %v1925, %v1925
  %v1927 = vld [vmem:[%s3] sm:$0xf]
  %v1928 = vld [vmem:[%s3 + $0x4] sm:$0xf]
  %v1929 = vld [vmem:[%s3 + $0x8] sm:$0xf]
  %v1930 = vld [vmem:[%s3 + $0xc] sm:$0xf]
  %v1935 = vunpack.c.l.b16 %v1927
  %v1936 = vunpack.c.l.b16 %v1928
  %v1937 = vunpack.c.l.b16 %v1929
  %v1938 = vunpack.c.l.b16 %v1930
  %v1939 = vpack.c.b16 %v1936, %v1935
  %v1940 = vpack.c.b16 %v1938, %v1937
  %v1944 = vsel %vm82, %v1926, 0
  %1946 = vmatprep.subr.bf16.mxu0 0
  %1947 = vmatpush1.bf16.msra.mxu0 0
  %1948 = vmatprep.subr.bf16.mxu0 0
  %1949 = vmatpush1.bf16.msra.mxu0 0
  %1950 = vmatprep.subr.bf16.mxu0 0
  %1951 = vmatpush1.bf16.msra.mxu0 0
  %1952 = vmatprep.subr.bf16.mxu0 0
  %1953 = vmatpush1.bf16.msra.mxu0 0
  %1954 = vmatprep.subr.bf16.mxu0 0
  %1955 = vmatpush1.bf16.msra.mxu0 0
  %1956 = vmatprep.subr.bf16.mxu0 0
  %1957 = vmatpush1.bf16.msra.mxu0 0
  %1958 = vmatprep.subr.bf16.mxu0 0
  %1959 = vmatpush1.bf16.msra.mxu0 %v1940
  %1960 = vmatprep.subr.bf16.mxu0 0
  %1961 = vmatpush1.bf16.msra.mxu0 %v1939
  %1962 = vmatprep.subr.bf16.mxu0 0
  %1963 = vmatpush2.bf16.msra.mxu0 0
  %1964 = vmatprep.subr.bf16.mxu0 0
  %1965 = vmatpush2.bf16.msra.mxu0 0
  %1966 = vmatprep.subr.bf16.mxu0 0
  %1967 = vmatpush2.bf16.msra.mxu0 0
  %1968 = vmatprep.subr.bf16.mxu0 0
  %1969 = vmatpush2.bf16.msra.mxu0 0
  %1970 = vmatprep.subr.bf16.mxu0 0
  %1971 = vmatpush2.bf16.msra.mxu0 0
  %1972 = vmatprep.subr.bf16.mxu0 0
  %1973 = vmatpush2.bf16.msra.mxu0 0
  %1974 = vmatprep.subr.bf16.mxu0 0
  %1975 = vmatpush2.bf16.msra.mxu0 0
  %1976 = vmatprep.subr.bf16.mxu0 0
  %1977 = vmatpush2.bf16.msra.mxu0 0
  %1978 = vmatprep.mubr.bf16.mxu0 0
  %1979 = vmatmul.mubr.bf16.gmra.mxu0 %v1944
  %v1980 = vpop.f32.mrf.mxu0
  %v1981 = vadd.f32 0.0, %v1980
  %v1982 = vpop.f32.mrf.mxu0
  %v1983 = vpop.f32.mrf.mxu0
  %v1984 = vpop.f32.mrf.mxu0
  %1985 = vdwg.mxu0
  %v1986 = vadd.f32 %v1924, %v1981
  %v1987 = vxor.u32 %v1986, 2147483648
  %v1988 = vmul.f32 %v1987, 1.442695
  %v1989 = vpow.pop %v1988
  %v1990 = vadd.f32 %v1989, 1.0
  %v1991 = vrcp.pop %v1990
  %v1992 = vmul.f32 1.0, %v1991
  %v1993 = vtanh.pop %v1986
  %v1994 = vld [vmem:[#allocation5] sm:$0x3]
  %1996 = vrot.lane.b32.xlu0 %v1994, 32
  %v1997 = vpop.permute.xlu0 %1996
  %v1999 = vmul.f32 %v1992, %v1997
  %2001 = vrot.lane.b32.xlu0 %v1993, 64
  %v2002 = vpop.permute.xlu0 %2001
  %v2004 = vmul.f32 %v1992, %v2002
  %2006 = vrot.lane.b32.xlu0 %v2004, 32
  %v2007 = vpop.permute.xlu0 %2006
  %v2009 = vadd.f32 %v1999, %v2007
  %v2010 = vtanh.pop %v2009
  %2012 = vrot.lane.b32.xlu0 %v2010, 64
  %v2013 = vpop.permute.xlu0 %2012
  %v2015 = vmul.f32 %v1992, %v2013
  %2017 = vrot.lane.b32.xlu0 %v2015, 32
  %v2018 = vpop.permute.xlu0 %2017
  %2020 = vst.msk [vmem:[#allocation4] sm:$0x3] %vm160, %v2018
  %2022 = vrot.lane.b32.xlu0 %v2009, 96
  %v2023 = vpop.permute.xlu0 %2022
  %2025 = vst.msk [vmem:[#allocation5] sm:$0x3] %vm160, %v2023
  %v2026 = vpack.c.bf16 %v2015, %v2015
  %v2029 = vunpack.c.l.s4 1966171168
  %v2030 = vunpack.c.0.s8 %v2029
  %v2031 = vlaneseq
  %v2032 = vshrl.u32 %v2031, 7
  %v2033 = vsub.s32 %v2030, %v2032
  %v2034 = vrot.slane %v2026, %v2033
  %v2036 = vunpack.c.l.s4 1966171168
  %v2037 = vunpack.c.0.s8 %v2036
  %v2038 = vlaneseq
  %v2039 = vshrl.u32 %v2038, 7
  %v2040 = vsub.s32 %v2037, %v2039
  %v2041 = vrot.slane %v2034, %v2040
  %2042 = vrot.lane.b32.xlu0 %v2041, 32
  %v2043 = vpop.permute.xlu0 %2042
  %2045 = vst.msk [vmem:[%s50] sm:$0x1] %vm186, %v2043
  %s2046 = ssub.s32 0, 0
  %s2047 = smul.u32 8, %s2046
  %p2048 = scmp.lt.s32.totalorder %s2047, 7
  %s2049 = scalar_select %p2048, %s2047, 7
  %s2050 = scalar_lea.vmem %s5, %s2049
  // Predicated region
  $region22: #{encoder_forward.6} parent=0 // pred_check
    _
  $region23: #{encoder_forward.6} parent=0 // pred_check_branch
    %2052 = sbr.rel (0) target = $region25
  $region24: #{encoder_forward.6} parent=0 // pred_region
    _
  $region25: #{encoder_forward.6} parent=0 // pred_fallthru
    _
  // Predicated region
  $region26: #{encoder_forward.6} parent=0 // pred_check
    _
  $region27: #{encoder_forward.6} parent=0 // pred_check_branch
    %2054 = sbr.rel (0) target = $region29
  $region28: #{encoder_forward.6} parent=0 // pred_region
    %s2055 = ssub.s32 0, 0
    %s2056 = smul.u32 8, %s2055
  $region29: #{encoder_forward.6} parent=0 // pred_fallthru
    _
  // Predicated region
  $region30: #{encoder_forward.6} parent=0 // pred_check
    _
  $region31: #{encoder_forward.6} parent=0 // pred_check_branch
    %2058 = sbr.rel (0) target = $region33
  $region32: #{encoder_forward.6} parent=0 // pred_region
    _
  $region33: #{encoder_forward.6} parent=0 // pred_fallthru
    _
  // Predicated region
  $region34: #{encoder_forward.6} parent=0 // pred_check
    _
  $region35: #{encoder_forward.6} parent=0 // pred_check_branch
    %2060 = sbr.rel (0) target = $region37
  $region36: #{encoder_forward.6} parent=0 // pred_region
    %s2061 = ssub.s32 0, 0
    %s2062 = smul.u32 8, %s2061
    %p2063 = scmp.lt.s32.totalorder %s2062, 7
    %s2064 = scalar_select %p2063, %s2062, 7
    %s2065 = scalar_lea.vmem %s5, %s2064
  $region37: #{encoder_forward.6} parent=0 // pred_fallthru
    _

</llo_original>
